<compile_context>
chip_gen: v7x
topology: tpu7x:2x2x1
jax: 0.10.0
libtpu: 0.0.40
codegen_flags: <defaults>
</compile_context>

<pallas_src>
import jax
import jax.numpy as jnp
from jax.experimental import pallas as pl
from jax.experimental.pallas import tpu as pltpu

CONV_KS = 10      # Conv1d kernel_size from the module
CONV_STRIDE = 2   # Conv1d stride from the module


# ---------------------------------------------------------------------------
# Fused forward kernel.
#   xcol : (T*B, C*KS)  im2col'd CNN input
#   h0   : (2, B, H)    initial hidden state (zeros when h=None)
#   wc   : (C*KS, I)    conv weight with BN folded in
#   bc   : (1, I)       conv bias with BN folded in
#   wiL  : (in, G)      fused+padded input-to-hidden weights (cols: r|z|n|pad), G=128*k
#   whL  : (H, G)       fused+padded hidden-to-hidden weights
#   biL  : (1, G)       fused bias  [b_ir+b_hr | b_iz+b_hz | b_in | 0]
#   bhnL : (1, H)       b_hn (kept separate because of r * (h W_hn + b_hn))
#   wfc  : (H, O), bfc : (1, O)
# Output: (B, O)
# Scratch: gi_scr (T*B, G) hoisted gate pre-activations, seq_scr (T*B, H) layer-0 outputs.
# ---------------------------------------------------------------------------
def cnn_gru_kernel(xcol_ref, h0_ref, wc_ref, bc_ref,
                   wi0_ref, wh0_ref, bi0_ref, bhn0_ref,
                   wi1_ref, wh1_ref, bi1_ref, bhn1_ref,
                   wfc_ref, bfc_ref,
                   o_ref,
                   gi_scr, seq_scr):
    TB, H = seq_scr.shape
    B = o_ref.shape[0]
    T = TB // B

    # ---- CNN: im2col GEMM (BatchNorm folded into weights/bias) + ReLU, all rows at once.
    feat = jnp.maximum(
        jnp.dot(xcol_ref[...], wc_ref[...], preferred_element_type=jnp.float32)
        + bc_ref[...], 0.0)                                           # (T*B, I)

    def gru_layer(inp, wi_ref, wh_ref, bi_ref, bhn_ref, h_init, store_seq):
        # Hoisted input projection: one lane-dense (T*B, G) matmul outside the recurrence.
        gi_scr[...] = (jnp.dot(inp, wi_ref[...], preferred_element_type=jnp.float32)
                       + bi_ref[...])
        wh = wh_ref[...]          # resident in VMEM; loaded once
        bhn = bhn_ref[...]
        h = h_init
        # T is small & static: fully unrolled so the scheduler can overlap MXU/EUP/VPU
        # across timesteps; only the single fused h @ W_hh matmul sits on the serial path.
        for t in range(T):
            gi = gi_scr[pl.ds(t * B, B), :]                           # (B, G)
            gh = jnp.dot(h, wh, preferred_element_type=jnp.float32)   # fused r|z|n gates
            r = jax.nn.sigmoid(gi[:, 0:H] + gh[:, 0:H])
            z = jax.nn.sigmoid(gi[:, H:2 * H] + gh[:, H:2 * H])
            n = jnp.tanh(gi[:, 2 * H:3 * H] + r * (gh[:, 2 * H:3 * H] + bhn))
            h = n + z * (h - n)                                       # == (1-z)*n + z*h
            if store_seq:
                seq_scr[pl.ds(t * B, B), :] = h
        return h

    # ---- GRU layer 0 (output sequence kept in VMEM, never touches HBM)
    gru_layer(feat, wi0_ref, wh0_ref, bi0_ref, bhn0_ref, h0_ref[0], True)
    # ---- GRU layer 1 (inter-layer dropout is a no-op at inference)
    h_last = gru_layer(seq_scr[...], wi1_ref, wh1_ref, bi1_ref, bhn1_ref,
                       h0_ref[1], False)

    # ---- FC head on out[-1, :, :]
    o_ref[...] = (jnp.dot(h_last, wfc_ref[...], preferred_element_type=jnp.float32)
                  + bfc_ref[...]).astype(o_ref.dtype)


# ---------------------------------------------------------------------------
# Wrapper: layout prep (im2col, default hidden) + the single pallas_call.
# ---------------------------------------------------------------------------
def cnn_gru_net(x, prep, h=None):
    """x: (batch, cnn_input_size, L) -> (batch, output_dim)."""
    B, C, L = x.shape
    T = (L - CONV_KS) // CONV_STRIDE + 1
    CK = C * CONV_KS
    I = prep["wc"].shape[1]
    H = prep["wh0"].shape[0]
    G = prep["wh0"].shape[1]
    O = prep["wfc"].shape[1]

    # im2col: pure layout plumbing; the conv GEMM itself runs on the MXU inside the kernel.
    windows = jnp.stack(
        [x[:, :, CONV_STRIDE * t: CONV_STRIDE * t + CONV_KS] for t in range(T)],
        axis=0)                                                    # (T, B, C, KS)
    xcol = windows.reshape(T * B, CK).astype(jnp.float32)

    if h is None:
        h = jnp.zeros((2, B, H), jnp.float32)                      # PyTorch default init
    h = h.astype(jnp.float32)

    def full(shape):
        return pl.BlockSpec(shape, lambda: (0,) * len(shape))

    return pl.pallas_call(
        cnn_gru_kernel,
        out_shape=jax.ShapeDtypeStruct((B, O), jnp.float32),
        in_specs=[
            full((T * B, CK)),      # xcol
            full((2, B, H)),        # h0
            full((CK, I)),          # wc (BN folded)
            full((1, I)),           # bc
            full((I, G)),           # wi0
            full((H, G)),           # wh0
            full((1, G)),           # bi0 (fused)
            full((1, H)),           # bhn0
            full((H, G)),           # wi1
            full((H, G)),           # wh1
            full((1, G)),           # bi1 (fused)
            full((1, H)),           # bhn1
            full((H, O)),           # wfc
            full((1, O)),           # bfc
        ],
        out_specs=full((B, O)),
        scratch_shapes=[
            pltpu.VMEM((T * B, G), jnp.float32),   # hoisted gate pre-activations
            pltpu.VMEM((T * B, H), jnp.float32),   # layer-0 output sequence
        ],
    )(xcol, h, prep["wc"], prep["bc"],
      prep["wi0"], prep["wh0"], prep["bi0"], prep["bhn0"],
      prep["wi1"], prep["wh1"], prep["bi1"], prep["bhn1"],
      prep["wfc"], prep["bfc"])


# ---------------------------------------------------------------------------
# Parameters in native PyTorch shapes + folding/fusing into the kernel layout.
# ---------------------------------------------------------------------------
def init_raw_params(key, C, I, H, O):
    ks = jax.random.split(key, 16)
    p = {}
    kc = 1.0 / float(C * CONV_KS) ** 0.5
    p["conv_w"] = jax.random.uniform(ks[0], (I, C, CONV_KS), jnp.float32, -kc, kc)
    p["conv_b"] = jax.random.uniform(ks[1], (I,), jnp.float32, -kc, kc)
    # BatchNorm1d (eval-mode running stats; randomized so the folding is actually exercised)
    p["bn_gamma"] = 1.0 + 0.2 * jax.random.normal(ks[2], (I,), jnp.float32)
    p["bn_beta"] = 0.1 * jax.random.normal(ks[3], (I,), jnp.float32)
    p["bn_mean"] = 0.1 * jax.random.normal(ks[4], (I,), jnp.float32)
    p["bn_var"] = 1.0 + 0.2 * jax.random.uniform(ks[5], (I,), jnp.float32)
    kh = 1.0 / float(H) ** 0.5
    for l, in_dim, base in ((0, I, 6), (1, H, 10)):
        p[f"w_ih_l{l}"] = jax.random.uniform(ks[base + 0], (3 * H, in_dim), jnp.float32, -kh, kh)
        p[f"w_hh_l{l}"] = jax.random.uniform(ks[base + 1], (3 * H, H), jnp.float32, -kh, kh)
        p[f"b_ih_l{l}"] = jax.random.uniform(ks[base + 2], (3 * H,), jnp.float32, -kh, kh)
        p[f"b_hh_l{l}"] = jax.random.uniform(ks[base + 3], (3 * H,), jnp.float32, -kh, kh)
    p["fc_w"] = jax.random.uniform(ks[14], (O, H), jnp.float32, -kh, kh)
    p["fc_b"] = jax.random.uniform(ks[15], (O,), jnp.float32, -kh, kh)
    return p


def prepare_params(raw, eps=1e-5):
    I, C, KS = raw["conv_w"].shape
    H = raw["w_hh_l0"].shape[1]
    G = ((3 * H + 127) // 128) * 128             # pad fused gate dim to a lane multiple
    # Fold eval-mode BatchNorm1d into the conv weight/bias.
    scale = raw["bn_gamma"] / jnp.sqrt(raw["bn_var"] + eps)                 # (I,)
    wc = (raw["conv_w"] * scale[:, None, None]).reshape(I, C * KS).T        # (C*KS, I)
    bc = ((raw["conv_b"] - raw["bn_mean"]) * scale + raw["bn_beta"])[None, :]
    prep = {"wc": wc, "bc": bc}
    for l in (0, 1):
        wi = raw[f"w_ih_l{l}"].T                 # (in, 3H), cols ordered r|z|n (PyTorch order)
        wh = raw[f"w_hh_l{l}"].T                 # (H, 3H)
        bi = raw[f"b_ih_l{l}"]
        bh = raw[f"b_hh_l{l}"]
        bi_fused = jnp.concatenate(
            [bi[:H] + bh[:H], bi[H:2 * H] + bh[H:2 * H], bi[2 * H:]])
        prep[f"wi{l}"] = jnp.pad(wi, ((0, 0), (0, G - 3 * H)))
        prep[f"wh{l}"] = jnp.pad(wh, ((0, 0), (0, G - 3 * H)))
        prep[f"bi{l}"] = jnp.pad(bi_fused, (0, G - 3 * H))[None, :]
        prep[f"bhn{l}"] = bh[2 * H:][None, :]    # stays separate: n uses r * (h W_hn + b_hn)
    prep["wfc"] = raw["fc_w"].T
    prep["bfc"] = raw["fc_b"][None, :]
    return prep


# ---------------------------------------------------------------------------
# Pure-JAX reference (same folded params, same math) for a correctness check.
# ---------------------------------------------------------------------------
def reference_forward(x, prep, h=None):
    hp = jax.lax.Precision.HIGHEST
    B, C, L = x.shape
    T = (L - CONV_KS) // CONV_STRIDE + 1
    windows = jnp.stack(
        [x[:, :, CONV_STRIDE * t: CONV_STRIDE * t + CONV_KS] for t in range(T)], axis=0)
    xcol = windows.reshape(T * B, C * CONV_KS).astype(jnp.float32)
    feat = jnp.maximum(jnp.dot(xcol, prep["wc"], precision=hp) + prep["bc"], 0.0)
    H = prep["wh0"].shape[0]
    if h is None:
        h = jnp.zeros((2, B, H), jnp.float32)

    def run_layer(inp, wi, wh, bi, bhn, h0):
        gi = jnp.dot(inp, wi, precision=hp) + bi
        hs, outs = h0, []
        for t in range(T):
            git = gi[t * B:(t + 1) * B]
            gh = jnp.dot(hs, wh, precision=hp)
            r = jax.nn.sigmoid(git[:, :H] + gh[:, :H])
            z = jax.nn.sigmoid(git[:, H:2 * H] + gh[:, H:2 * H])
            n = jnp.tanh(git[:, 2 * H:3 * H] + r * (gh[:, 2 * H:3 * H] + bhn))
            hs = n + z * (hs - n)
            outs.append(hs)
        return jnp.concatenate(outs, axis=0), hs

    seq0, _ = run_layer(feat, prep["wi0"], prep["wh0"], prep["bi0"], prep["bhn0"], h[0])
    _, h1 = run_layer(seq0, prep["wi1"], prep["wh1"], prep["bi1"], prep["bhn1"], h[1])
    return jnp.dot(h1, prep["wfc"], precision=hp) + prep["bfc"]


if __name__ == "__main__":
    # Small shapes consistent with the module:
    # batch=8, cnn_input_size=8, L=24 -> T=(24-10)//2+1=8, rnn_input_size=16,
    # hidden_size=32, output_dim=8, dropout inactive at inference.
    B, C, L = 8, 8, 24
    I, H, O = 16, 32, 8

    key = jax.random.PRNGKey(0)
    kx, kp = jax.random.split(key)
    x = jax.random.normal(kx, (B, C, L), jnp.float32)
    raw = init_raw_params(kp, C, I, H, O)
    prep = prepare_params(raw)

    fwd = jax.jit(cnn_gru_net)
    out = jax.block_until_ready(fwd(x, prep))

    assert out.shape == (B, O)
    assert bool(jnp.all(jnp.isfinite(out)))

    ref = reference_forward(x, prep)
    max_err = float(jnp.max(jnp.abs(out - ref)))
    assert max_err < 1e-2, f"mismatch vs pure-JAX reference: {max_err}"
    print("KERNEL_OK")
</pallas_src>

<mosaic_0001>
module attributes {stable_mosaic.version = 11 : i64} {
  func.func @cnn_gru_kernel(%arg0: memref<64x80xf32, #tpu.memory_space<vmem>>, %arg1: memref<2x8x32xf32, #tpu.memory_space<vmem>>, %arg2: memref<80x16xf32, #tpu.memory_space<vmem>>, %arg3: memref<1x16xf32, #tpu.memory_space<vmem>>, %arg4: memref<16x128xf32, #tpu.memory_space<vmem>>, %arg5: memref<32x128xf32, #tpu.memory_space<vmem>>, %arg6: memref<1x128xf32, #tpu.memory_space<vmem>>, %arg7: memref<1x32xf32, #tpu.memory_space<vmem>>, %arg8: memref<32x128xf32, #tpu.memory_space<vmem>>, %arg9: memref<32x128xf32, #tpu.memory_space<vmem>>, %arg10: memref<1x128xf32, #tpu.memory_space<vmem>>, %arg11: memref<1x32xf32, #tpu.memory_space<vmem>>, %arg12: memref<32x8xf32, #tpu.memory_space<vmem>>, %arg13: memref<1x8xf32, #tpu.memory_space<vmem>>, %arg14: memref<8x8xf32, #tpu.memory_space<vmem>>, %arg15: memref<64x128xf32, #tpu.memory_space<vmem>>, %arg16: memref<64x32xf32, #tpu.memory_space<vmem>>) attributes {dimension_semantics = [], scalar_prefetch = 0 : i64, scratch_operands = 2 : i64, tpu.core_type = #tpu.core_type<tc>} {
    %c0 = arith.constant 0 : index
    %c0_0 = arith.constant 0 : index
    %0 = vector.load %arg0[%c0, %c0_0] : memref<64x80xf32, #tpu.memory_space<vmem>>, vector<64x80xf32>
    %c0_1 = arith.constant 0 : index
    %c0_2 = arith.constant 0 : index
    %1 = vector.load %arg2[%c0_1, %c0_2] : memref<80x16xf32, #tpu.memory_space<vmem>>, vector<80x16xf32>
    %cst = arith.constant dense<0.000000e+00> : vector<64x16xf32>
    %2 = tpu.matmul %0, %1, %cst {dimension_numbers = #tpu.dot_dimension_numbers<[1], [0], [0], [1], [0, 0, 1, 1], [], []>} : vector<64x80xf32>, vector<80x16xf32>, vector<64x16xf32> -> vector<64x16xf32>
    %c0_3 = arith.constant 0 : index
    %c0_4 = arith.constant 0 : index
    %3 = vector.load %arg3[%c0_3, %c0_4] : memref<1x16xf32, #tpu.memory_space<vmem>>, vector<1x16xf32>
    %4 = vector.broadcast %3 : vector<1x16xf32> to vector<64x16xf32>
    %5 = arith.addf %2, %4 : vector<64x16xf32>
    %cst_5 = arith.constant 0.000000e+00 : f32
    %6 = vector.broadcast %cst_5 : f32 to vector<64x16xf32>
    %7 = arith.maximumf %5, %6 : vector<64x16xf32>
    %c0_6 = arith.constant 0 : index
    %c0_7 = arith.constant 0 : index
    %c0_8 = arith.constant 0 : index
    %8 = vector.load %arg1[%c0_6, %c0_7, %c0_8] : memref<2x8x32xf32, #tpu.memory_space<vmem>>, vector<1x8x32xf32>
    %9 = vector.shape_cast %8 : vector<1x8x32xf32> to vector<8x32xf32>
    %c0_9 = arith.constant 0 : index
    %c0_10 = arith.constant 0 : index
    %10 = vector.load %arg4[%c0_9, %c0_10] : memref<16x128xf32, #tpu.memory_space<vmem>>, vector<16x128xf32>
    %cst_11 = arith.constant dense<0.000000e+00> : vector<64x128xf32>
    %11 = tpu.matmul %7, %10, %cst_11 {dimension_numbers = #tpu.dot_dimension_numbers<[1], [0], [0], [1], [0, 0, 1, 1], [], []>} : vector<64x16xf32>, vector<16x128xf32>, vector<64x128xf32> -> vector<64x128xf32>
    %c0_12 = arith.constant 0 : index
    %c0_13 = arith.constant 0 : index
    %12 = vector.load %arg6[%c0_12, %c0_13] : memref<1x128xf32, #tpu.memory_space<vmem>>, vector<1x128xf32>
    %13 = vector.broadcast %12 : vector<1x128xf32> to vector<64x128xf32>
    %14 = arith.addf %11, %13 : vector<64x128xf32>
    %c0_14 = arith.constant 0 : index
    %c0_15 = arith.constant 0 : index
    %15 = vector.load %arg15[%c0_14, %c0_15] : memref<64x128xf32, #tpu.memory_space<vmem>>, vector<64x128xf32>
    tpu.vector_store %arg15[%c0_14, %c0_15], %14 {strides = array<i32>} : memref<64x128xf32, #tpu.memory_space<vmem>>, vector<64x128xf32>,
    %c0_16 = arith.constant 0 : index
    %c0_17 = arith.constant 0 : index
    %16 = vector.load %arg5[%c0_16, %c0_17] : memref<32x128xf32, #tpu.memory_space<vmem>>, vector<32x128xf32>
    %c0_18 = arith.constant 0 : index
    %c0_19 = arith.constant 0 : index
    %17 = vector.load %arg7[%c0_18, %c0_19] : memref<1x32xf32, #tpu.memory_space<vmem>>, vector<1x32xf32>
    %c0_20 = arith.constant 0 : index
    %c0_21 = arith.constant 0 : index
    %18 = vector.load %arg15[%c0_20, %c0_21] : memref<64x128xf32, #tpu.memory_space<vmem>>, vector<8x128xf32>
    %cst_22 = arith.constant dense<0.000000e+00> : vector<8x128xf32>
    %19 = tpu.matmul %9, %16, %cst_22 {dimension_numbers = #tpu.dot_dimension_numbers<[1], [0], [0], [1], [0, 0, 1, 1], [], []>} : vector<8x32xf32>, vector<32x128xf32>, vector<8x128xf32> -> vector<8x128xf32>
    %20 = vector.extract_strided_slice %18 {offsets = [0, 0], sizes = [8, 32], strides = [1, 1]} : vector<8x128xf32> to vector<8x32xf32>
    %21 = vector.extract_strided_slice %19 {offsets = [0, 0], sizes = [8, 32], strides = [1, 1]} : vector<8x128xf32> to vector<8x32xf32>
    %22 = arith.addf %20, %21 : vector<8x32xf32>
    %23 = arith.negf %22 : vector<8x32xf32>
    %24 = math.exp %23 : vector<8x32xf32>
    %cst_23 = arith.constant 1.000000e+00 : f32
    %25 = vector.broadcast %cst_23 : f32 to vector<8x32xf32>
    %26 = arith.addf %25, %24 : vector<8x32xf32>
    %27 = arith.divf %25, %26 : vector<8x32xf32>
    %28 = vector.extract_strided_slice %18 {offsets = [0, 32], sizes = [8, 32], strides = [1, 1]} : vector<8x128xf32> to vector<8x32xf32>
    %29 = vector.extract_strided_slice %19 {offsets = [0, 32], sizes = [8, 32], strides = [1, 1]} : vector<8x128xf32> to vector<8x32xf32>
    %30 = arith.addf %28, %29 : vector<8x32xf32>
    %31 = arith.negf %30 : vector<8x32xf32>
    %32 = math.exp %31 : vector<8x32xf32>
    %cst_24 = arith.constant 1.000000e+00 : f32
    %33 = vector.broadcast %cst_24 : f32 to vector<8x32xf32>
    %34 = arith.addf %33, %32 : vector<8x32xf32>
    %35 = arith.divf %33, %34 : vector<8x32xf32>
    %36 = vector.extract_strided_slice %18 {offsets = [0, 64], sizes = [8, 32], strides = [1, 1]} : vector<8x128xf32> to vector<8x32xf32>
    %37 = vector.extract_strided_slice %19 {offsets = [0, 64], sizes = [8, 32], strides = [1, 1]} : vector<8x128xf32> to vector<8x32xf32>
    %38 = vector.broadcast %17 : vector<1x32xf32> to vector<8x32xf32>
    %39 = arith.addf %37, %38 : vector<8x32xf32>
    %40 = arith.mulf %27, %39 : vector<8x32xf32>
    %41 = arith.addf %36, %40 : vector<8x32xf32>
    %42 = math.tanh %41 : vector<8x32xf32>
    %43 = arith.subf %9, %42 : vector<8x32xf32>
    %44 = arith.mulf %35, %43 : vector<8x32xf32>
    %45 = arith.addf %42, %44 : vector<8x32xf32>
    %c0_25 = arith.constant 0 : index
    %c0_26 = arith.constant 0 : index
    %46 = vector.load %arg16[%c0_25, %c0_26] : memref<64x32xf32, #tpu.memory_space<vmem>>, vector<8x32xf32>
    tpu.vector_store %arg16[%c0_25, %c0_26], %45 {strides = array<i32>} : memref<64x32xf32, #tpu.memory_space<vmem>>, vector<8x32xf32>,
    %c8 = arith.constant 8 : index
    %c0_27 = arith.constant 0 : index
    %47 = vector.load %arg15[%c8, %c0_27] : memref<64x128xf32, #tpu.memory_space<vmem>>, vector<8x128xf32>
    %cst_28 = arith.constant dense<0.000000e+00> : vector<8x128xf32>
    %48 = tpu.matmul %45, %16, %cst_28 {dimension_numbers = #tpu.dot_dimension_numbers<[1], [0], [0], [1], [0, 0, 1, 1], [], []>} : vector<8x32xf32>, vector<32x128xf32>, vector<8x128xf32> -> vector<8x128xf32>
    %49 = vector.extract_strided_slice %47 {offsets = [0, 0], sizes = [8, 32], strides = [1, 1]} : vector<8x128xf32> to vector<8x32xf32>
    %50 = vector.extract_strided_slice %48 {offsets = [0, 0], sizes = [8, 32], strides = [1, 1]} : vector<8x128xf32> to vector<8x32xf32>
    %51 = arith.addf %49, %50 : vector<8x32xf32>
    %52 = arith.negf %51 : vector<8x32xf32>
    %53 = math.exp %52 : vector<8x32xf32>
    %cst_29 = arith.constant 1.000000e+00 : f32
    %54 = vector.broadcast %cst_29 : f32 to vector<8x32xf32>
    %55 = arith.addf %54, %53 : vector<8x32xf32>
    %56 = arith.divf %54, %55 : vector<8x32xf32>
    %57 = vector.extract_strided_slice %47 {offsets = [0, 32], sizes = [8, 32], strides = [1, 1]} : vector<8x128xf32> to vector<8x32xf32>
    %58 = vector.extract_strided_slice %48 {offsets = [0, 32], sizes = [8, 32], strides = [1, 1]} : vector<8x128xf32> to vector<8x32xf32>
    %59 = arith.addf %57, %58 : vector<8x32xf32>
    %60 = arith.negf %59 : vector<8x32xf32>
    %61 = math.exp %60 : vector<8x32xf32>
    %cst_30 = arith.constant 1.000000e+00 : f32
    %62 = vector.broadcast %cst_30 : f32 to vector<8x32xf32>
    %63 = arith.addf %62, %61 : vector<8x32xf32>
    %64 = arith.divf %62, %63 : vector<8x32xf32>
    %65 = vector.extract_strided_slice %47 {offsets = [0, 64], sizes = [8, 32], strides = [1, 1]} : vector<8x128xf32> to vector<8x32xf32>
    %66 = vector.extract_strided_slice %48 {offsets = [0, 64], sizes = [8, 32], strides = [1, 1]} : vector<8x128xf32> to vector<8x32xf32>
    %67 = vector.broadcast %17 : vector<1x32xf32> to vector<8x32xf32>
    %68 = arith.addf %66, %67 : vector<8x32xf32>
    %69 = arith.mulf %56, %68 : vector<8x32xf32>
    %70 = arith.addf %65, %69 : vector<8x32xf32>
    %71 = math.tanh %70 : vector<8x32xf32>
    %72 = arith.subf %45, %71 : vector<8x32xf32>
    %73 = arith.mulf %64, %72 : vector<8x32xf32>
    %74 = arith.addf %71, %73 : vector<8x32xf32>
    %c8_31 = arith.constant 8 : index
    %c0_32 = arith.constant 0 : index
    %75 = vector.load %arg16[%c8_31, %c0_32] : memref<64x32xf32, #tpu.memory_space<vmem>>, vector<8x32xf32>
    tpu.vector_store %arg16[%c8_31, %c0_32], %74 {strides = array<i32>} : memref<64x32xf32, #tpu.memory_space<vmem>>, vector<8x32xf32>,
    %c16 = arith.constant 16 : index
    %c0_33 = arith.constant 0 : index
    %76 = vector.load %arg15[%c16, %c0_33] : memref<64x128xf32, #tpu.memory_space<vmem>>, vector<8x128xf32>
    %cst_34 = arith.constant dense<0.000000e+00> : vector<8x128xf32>
    %77 = tpu.matmul %74, %16, %cst_34 {dimension_numbers = #tpu.dot_dimension_numbers<[1], [0], [0], [1], [0, 0, 1, 1], [], []>} : vector<8x32xf32>, vector<32x128xf32>, vector<8x128xf32> -> vector<8x128xf32>
    %78 = vector.extract_strided_slice %76 {offsets = [0, 0], sizes = [8, 32], strides = [1, 1]} : vector<8x128xf32> to vector<8x32xf32>
    %79 = vector.extract_strided_slice %77 {offsets = [0, 0], sizes = [8, 32], strides = [1, 1]} : vector<8x128xf32> to vector<8x32xf32>
    %80 = arith.addf %78, %79 : vector<8x32xf32>
    %81 = arith.negf %80 : vector<8x32xf32>
    %82 = math.exp %81 : vector<8x32xf32>
    %cst_35 = arith.constant 1.000000e+00 : f32
    %83 = vector.broadcast %cst_35 : f32 to vector<8x32xf32>
    %84 = arith.addf %83, %82 : vector<8x32xf32>
    %85 = arith.divf %83, %84 : vector<8x32xf32>
    %86 = vector.extract_strided_slice %76 {offsets = [0, 32], sizes = [8, 32], strides = [1, 1]} : vector<8x128xf32> to vector<8x32xf32>
    %87 = vector.extract_strided_slice %77 {offsets = [0, 32], sizes = [8, 32], strides = [1, 1]} : vector<8x128xf32> to vector<8x32xf32>
    %88 = arith.addf %86, %87 : vector<8x32xf32>
    %89 = arith.negf %88 : vector<8x32xf32>
    %90 = math.exp %89 : vector<8x32xf32>
    %cst_36 = arith.constant 1.000000e+00 : f32
    %91 = vector.broadcast %cst_36 : f32 to vector<8x32xf32>
    %92 = arith.addf %91, %90 : vector<8x32xf32>
    %93 = arith.divf %91, %92 : vector<8x32xf32>
    %94 = vector.extract_strided_slice %76 {offsets = [0, 64], sizes = [8, 32], strides = [1, 1]} : vector<8x128xf32> to vector<8x32xf32>
    %95 = vector.extract_strided_slice %77 {offsets = [0, 64], sizes = [8, 32], strides = [1, 1]} : vector<8x128xf32> to vector<8x32xf32>
    %96 = vector.broadcast %17 : vector<1x32xf32> to vector<8x32xf32>
    %97 = arith.addf %95, %96 : vector<8x32xf32>
    %98 = arith.mulf %85, %97 : vector<8x32xf32>
    %99 = arith.addf %94, %98 : vector<8x32xf32>
    %100 = math.tanh %99 : vector<8x32xf32>
    %101 = arith.subf %74, %100 : vector<8x32xf32>
    %102 = arith.mulf %93, %101 : vector<8x32xf32>
    %103 = arith.addf %100, %102 : vector<8x32xf32>
    %c16_37 = arith.constant 16 : index
    %c0_38 = arith.constant 0 : index
    %104 = vector.load %arg16[%c16_37, %c0_38] : memref<64x32xf32, #tpu.memory_space<vmem>>, vector<8x32xf32>
    tpu.vector_store %arg16[%c16_37, %c0_38], %103 {strides = array<i32>} : memref<64x32xf32, #tpu.memory_space<vmem>>, vector<8x32xf32>,
    %c24 = arith.constant 24 : index
    %c0_39 = arith.constant 0 : index
    %105 = vector.load %arg15[%c24, %c0_39] : memref<64x128xf32, #tpu.memory_space<vmem>>, vector<8x128xf32>
    %cst_40 = arith.constant dense<0.000000e+00> : vector<8x128xf32>
    %106 = tpu.matmul %103, %16, %cst_40 {dimension_numbers = #tpu.dot_dimension_numbers<[1], [0], [0], [1], [0, 0, 1, 1], [], []>} : vector<8x32xf32>, vector<32x128xf32>, vector<8x128xf32> -> vector<8x128xf32>
    %107 = vector.extract_strided_slice %105 {offsets = [0, 0], sizes = [8, 32], strides = [1, 1]} : vector<8x128xf32> to vector<8x32xf32>
    %108 = vector.extract_strided_slice %106 {offsets = [0, 0], sizes = [8, 32], strides = [1, 1]} : vector<8x128xf32> to vector<8x32xf32>
    %109 = arith.addf %107, %108 : vector<8x32xf32>
    %110 = arith.negf %109 : vector<8x32xf32>
    %111 = math.exp %110 : vector<8x32xf32>
    %cst_41 = arith.constant 1.000000e+00 : f32
    %112 = vector.broadcast %cst_41 : f32 to vector<8x32xf32>
    %113 = arith.addf %112, %111 : vector<8x32xf32>
    %114 = arith.divf %112, %113 : vector<8x32xf32>
    %115 = vector.extract_strided_slice %105 {offsets = [0, 32], sizes = [8, 32], strides = [1, 1]} : vector<8x128xf32> to vector<8x32xf32>
    %116 = vector.extract_strided_slice %106 {offsets = [0, 32], sizes = [8, 32], strides = [1, 1]} : vector<8x128xf32> to vector<8x32xf32>
    %117 = arith.addf %115, %116 : vector<8x32xf32>
    %118 = arith.negf %117 : vector<8x32xf32>
    %119 = math.exp %118 : vector<8x32xf32>
    %cst_42 = arith.constant 1.000000e+00 : f32
    %120 = vector.broadcast %cst_42 : f32 to vector<8x32xf32>
    %121 = arith.addf %120, %119 : vector<8x32xf32>
    %122 = arith.divf %120, %121 : vector<8x32xf32>
    %123 = vector.extract_strided_slice %105 {offsets = [0, 64], sizes = [8, 32], strides = [1, 1]} : vector<8x128xf32> to vector<8x32xf32>
    %124 = vector.extract_strided_slice %106 {offsets = [0, 64], sizes = [8, 32], strides = [1, 1]} : vector<8x128xf32> to vector<8x32xf32>
    %125 = vector.broadcast %17 : vector<1x32xf32> to vector<8x32xf32>
    %126 = arith.addf %124, %125 : vector<8x32xf32>
    %127 = arith.mulf %114, %126 : vector<8x32xf32>
    %128 = arith.addf %123, %127 : vector<8x32xf32>
    %129 = math.tanh %128 : vector<8x32xf32>
    %130 = arith.subf %103, %129 : vector<8x32xf32>
    %131 = arith.mulf %122, %130 : vector<8x32xf32>
    %132 = arith.addf %129, %131 : vector<8x32xf32>
    %c24_43 = arith.constant 24 : index
    %c0_44 = arith.constant 0 : index
    %133 = vector.load %arg16[%c24_43, %c0_44] : memref<64x32xf32, #tpu.memory_space<vmem>>, vector<8x32xf32>
    tpu.vector_store %arg16[%c24_43, %c0_44], %132 {strides = array<i32>} : memref<64x32xf32, #tpu.memory_space<vmem>>, vector<8x32xf32>,
    %c32 = arith.constant 32 : index
    %c0_45 = arith.constant 0 : index
    %134 = vector.load %arg15[%c32, %c0_45] : memref<64x128xf32, #tpu.memory_space<vmem>>, vector<8x128xf32>
    %cst_46 = arith.constant dense<0.000000e+00> : vector<8x128xf32>
    %135 = tpu.matmul %132, %16, %cst_46 {dimension_numbers = #tpu.dot_dimension_numbers<[1], [0], [0], [1], [0, 0, 1, 1], [], []>} : vector<8x32xf32>, vector<32x128xf32>, vector<8x128xf32> -> vector<8x128xf32>
    %136 = vector.extract_strided_slice %134 {offsets = [0, 0], sizes = [8, 32], strides = [1, 1]} : vector<8x128xf32> to vector<8x32xf32>
    %137 = vector.extract_strided_slice %135 {offsets = [0, 0], sizes = [8, 32], strides = [1, 1]} : vector<8x128xf32> to vector<8x32xf32>
    %138 = arith.addf %136, %137 : vector<8x32xf32>
    %139 = arith.negf %138 : vector<8x32xf32>
    %140 = math.exp %139 : vector<8x32xf32>
    %cst_47 = arith.constant 1.000000e+00 : f32
    %141 = vector.broadcast %cst_47 : f32 to vector<8x32xf32>
    %142 = arith.addf %141, %140 : vector<8x32xf32>
    %143 = arith.divf %141, %142 : vector<8x32xf32>
    %144 = vector.extract_strided_slice %134 {offsets = [0, 32], sizes = [8, 32], strides = [1, 1]} : vector<8x128xf32> to vector<8x32xf32>
    %145 = vector.extract_strided_slice %135 {offsets = [0, 32], sizes = [8, 32], strides = [1, 1]} : vector<8x128xf32> to vector<8x32xf32>
    %146 = arith.addf %144, %145 : vector<8x32xf32>
    %147 = arith.negf %146 : vector<8x32xf32>
    %148 = math.exp %147 : vector<8x32xf32>
    %cst_48 = arith.constant 1.000000e+00 : f32
    %149 = vector.broadcast %cst_48 : f32 to vector<8x32xf32>
    %150 = arith.addf %149, %148 : vector<8x32xf32>
    %151 = arith.divf %149, %150 : vector<8x32xf32>
    %152 = vector.extract_strided_slice %134 {offsets = [0, 64], sizes = [8, 32], strides = [1, 1]} : vector<8x128xf32> to vector<8x32xf32>
    %153 = vector.extract_strided_slice %135 {offsets = [0, 64], sizes = [8, 32], strides = [1, 1]} : vector<8x128xf32> to vector<8x32xf32>
    %154 = vector.broadcast %17 : vector<1x32xf32> to vector<8x32xf32>
    %155 = arith.addf %153, %154 : vector<8x32xf32>
    %156 = arith.mulf %143, %155 : vector<8x32xf32>
    %157 = arith.addf %152, %156 : vector<8x32xf32>
    %158 = math.tanh %157 : vector<8x32xf32>
    %159 = arith.subf %132, %158 : vector<8x32xf32>
    %160 = arith.mulf %151, %159 : vector<8x32xf32>
    %161 = arith.addf %158, %160 : vector<8x32xf32>
    %c32_49 = arith.constant 32 : index
    %c0_50 = arith.constant 0 : index
    %162 = vector.load %arg16[%c32_49, %c0_50] : memref<64x32xf32, #tpu.memory_space<vmem>>, vector<8x32xf32>
    tpu.vector_store %arg16[%c32_49, %c0_50], %161 {strides = array<i32>} : memref<64x32xf32, #tpu.memory_space<vmem>>, vector<8x32xf32>,
    %c40 = arith.constant 40 : index
    %c0_51 = arith.constant 0 : index
    %163 = vector.load %arg15[%c40, %c0_51] : memref<64x128xf32, #tpu.memory_space<vmem>>, vector<8x128xf32>
    %cst_52 = arith.constant dense<0.000000e+00> : vector<8x128xf32>
    %164 = tpu.matmul %161, %16, %cst_52 {dimension_numbers = #tpu.dot_dimension_numbers<[1], [0], [0], [1], [0, 0, 1, 1], [], []>} : vector<8x32xf32>, vector<32x128xf32>, vector<8x128xf32> -> vector<8x128xf32>
    %165 = vector.extract_strided_slice %163 {offsets = [0, 0], sizes = [8, 32], strides = [1, 1]} : vector<8x128xf32> to vector<8x32xf32>
    %166 = vector.extract_strided_slice %164 {offsets = [0, 0], sizes = [8, 32], strides = [1, 1]} : vector<8x128xf32> to vector<8x32xf32>
    %167 = arith.addf %165, %166 : vector<8x32xf32>
    %168 = arith.negf %167 : vector<8x32xf32>
    %169 = math.exp %168 : vector<8x32xf32>
    %cst_53 = arith.constant 1.000000e+00 : f32
    %170 = vector.broadcast %cst_53 : f32 to vector<8x32xf32>
    %171 = arith.addf %170, %169 : vector<8x32xf32>
    %172 = arith.divf %170, %171 : vector<8x32xf32>
    %173 = vector.extract_strided_slice %163 {offsets = [0, 32], sizes = [8, 32], strides = [1, 1]} : vector<8x128xf32> to vector<8x32xf32>
    %174 = vector.extract_strided_slice %164 {offsets = [0, 32], sizes = [8, 32], strides = [1, 1]} : vector<8x128xf32> to vector<8x32xf32>
    %175 = arith.addf %173, %174 : vector<8x32xf32>
    %176 = arith.negf %175 : vector<8x32xf32>
    %177 = math.exp %176 : vector<8x32xf32>
    %cst_54 = arith.constant 1.000000e+00 : f32
    %178 = vector.broadcast %cst_54 : f32 to vector<8x32xf32>
    %179 = arith.addf %178, %177 : vector<8x32xf32>
    %180 = arith.divf %178, %179 : vector<8x32xf32>
    %181 = vector.extract_strided_slice %163 {offsets = [0, 64], sizes = [8, 32], strides = [1, 1]} : vector<8x128xf32> to vector<8x32xf32>
    %182 = vector.extract_strided_slice %164 {offsets = [0, 64], sizes = [8, 32], strides = [1, 1]} : vector<8x128xf32> to vector<8x32xf32>
    %183 = vector.broadcast %17 : vector<1x32xf32> to vector<8x32xf32>
    %184 = arith.addf %182, %183 : vector<8x32xf32>
    %185 = arith.mulf %172, %184 : vector<8x32xf32>
    %186 = arith.addf %181, %185 : vector<8x32xf32>
    %187 = math.tanh %186 : vector<8x32xf32>
    %188 = arith.subf %161, %187 : vector<8x32xf32>
    %189 = arith.mulf %180, %188 : vector<8x32xf32>
    %190 = arith.addf %187, %189 : vector<8x32xf32>
    %c40_55 = arith.constant 40 : index
    %c0_56 = arith.constant 0 : index
    %191 = vector.load %arg16[%c40_55, %c0_56] : memref<64x32xf32, #tpu.memory_space<vmem>>, vector<8x32xf32>
    tpu.vector_store %arg16[%c40_55, %c0_56], %190 {strides = array<i32>} : memref<64x32xf32, #tpu.memory_space<vmem>>, vector<8x32xf32>,
    %c48 = arith.constant 48 : index
    %c0_57 = arith.constant 0 : index
    %192 = vector.load %arg15[%c48, %c0_57] : memref<64x128xf32, #tpu.memory_space<vmem>>, vector<8x128xf32>
    %cst_58 = arith.constant dense<0.000000e+00> : vector<8x128xf32>
    %193 = tpu.matmul %190, %16, %cst_58 {dimension_numbers = #tpu.dot_dimension_numbers<[1], [0], [0], [1], [0, 0, 1, 1], [], []>} : vector<8x32xf32>, vector<32x128xf32>, vector<8x128xf32> -> vector<8x128xf32>
    %194 = vector.extract_strided_slice %192 {offsets = [0, 0], sizes = [8, 32], strides = [1, 1]} : vector<8x128xf32> to vector<8x32xf32>
    %195 = vector.extract_strided_slice %193 {offsets = [0, 0], sizes = [8, 32], strides = [1, 1]} : vector<8x128xf32> to vector<8x32xf32>
    %196 = arith.addf %194, %195 : vector<8x32xf32>
    %197 = arith.negf %196 : vector<8x32xf32>
    %198 = math.exp %197 : vector<8x32xf32>
    %cst_59 = arith.constant 1.000000e+00 : f32
    %199 = vector.broadcast %cst_59 : f32 to vector<8x32xf32>
    %200 = arith.addf %199, %198 : vector<8x32xf32>
    %201 = arith.divf %199, %200 : vector<8x32xf32>
    %202 = vector.extract_strided_slice %192 {offsets = [0, 32], sizes = [8, 32], strides = [1, 1]} : vector<8x128xf32> to vector<8x32xf32>
    %203 = vector.extract_strided_slice %193 {offsets = [0, 32], sizes = [8, 32], strides = [1, 1]} : vector<8x128xf32> to vector<8x32xf32>
    %204 = arith.addf %202, %203 : vector<8x32xf32>
    %205 = arith.negf %204 : vector<8x32xf32>
    %206 = math.exp %205 : vector<8x32xf32>
    %cst_60 = arith.constant 1.000000e+00 : f32
    %207 = vector.broadcast %cst_60 : f32 to vector<8x32xf32>
    %208 = arith.addf %207, %206 : vector<8x32xf32>
    %209 = arith.divf %207, %208 : vector<8x32xf32>
    %210 = vector.extract_strided_slice %192 {offsets = [0, 64], sizes = [8, 32], strides = [1, 1]} : vector<8x128xf32> to vector<8x32xf32>
    %211 = vector.extract_strided_slice %193 {offsets = [0, 64], sizes = [8, 32], strides = [1, 1]} : vector<8x128xf32> to vector<8x32xf32>
    %212 = vector.broadcast %17 : vector<1x32xf32> to vector<8x32xf32>
    %213 = arith.addf %211, %212 : vector<8x32xf32>
    %214 = arith.mulf %201, %213 : vector<8x32xf32>
    %215 = arith.addf %210, %214 : vector<8x32xf32>
    %216 = math.tanh %215 : vector<8x32xf32>
    %217 = arith.subf %190, %216 : vector<8x32xf32>
    %218 = arith.mulf %209, %217 : vector<8x32xf32>
    %219 = arith.addf %216, %218 : vector<8x32xf32>
    %c48_61 = arith.constant 48 : index
    %c0_62 = arith.constant 0 : index
    %220 = vector.load %arg16[%c48_61, %c0_62] : memref<64x32xf32, #tpu.memory_space<vmem>>, vector<8x32xf32>
    tpu.vector_store %arg16[%c48_61, %c0_62], %219 {strides = array<i32>} : memref<64x32xf32, #tpu.memory_space<vmem>>, vector<8x32xf32>,
    %c56 = arith.constant 56 : index
    %c0_63 = arith.constant 0 : index
    %221 = vector.load %arg15[%c56, %c0_63] : memref<64x128xf32, #tpu.memory_space<vmem>>, vector<8x128xf32>
    %cst_64 = arith.constant dense<0.000000e+00> : vector<8x128xf32>
    %222 = tpu.matmul %219, %16, %cst_64 {dimension_numbers = #tpu.dot_dimension_numbers<[1], [0], [0], [1], [0, 0, 1, 1], [], []>} : vector<8x32xf32>, vector<32x128xf32>, vector<8x128xf32> -> vector<8x128xf32>
    %223 = vector.extract_strided_slice %221 {offsets = [0, 0], sizes = [8, 32], strides = [1, 1]} : vector<8x128xf32> to vector<8x32xf32>
    %224 = vector.extract_strided_slice %222 {offsets = [0, 0], sizes = [8, 32], strides = [1, 1]} : vector<8x128xf32> to vector<8x32xf32>
    %225 = arith.addf %223, %224 : vector<8x32xf32>
    %226 = arith.negf %225 : vector<8x32xf32>
    %227 = math.exp %226 : vector<8x32xf32>
    %cst_65 = arith.constant 1.000000e+00 : f32
    %228 = vector.broadcast %cst_65 : f32 to vector<8x32xf32>
    %229 = arith.addf %228, %227 : vector<8x32xf32>
    %230 = arith.divf %228, %229 : vector<8x32xf32>
    %231 = vector.extract_strided_slice %221 {offsets = [0, 32], sizes = [8, 32], strides = [1, 1]} : vector<8x128xf32> to vector<8x32xf32>
    %232 = vector.extract_strided_slice %222 {offsets = [0, 32], sizes = [8, 32], strides = [1, 1]} : vector<8x128xf32> to vector<8x32xf32>
    %233 = arith.addf %231, %232 : vector<8x32xf32>
    %234 = arith.negf %233 : vector<8x32xf32>
    %235 = math.exp %234 : vector<8x32xf32>
    %cst_66 = arith.constant 1.000000e+00 : f32
    %236 = vector.broadcast %cst_66 : f32 to vector<8x32xf32>
    %237 = arith.addf %236, %235 : vector<8x32xf32>
    %238 = arith.divf %236, %237 : vector<8x32xf32>
    %239 = vector.extract_strided_slice %221 {offsets = [0, 64], sizes = [8, 32], strides = [1, 1]} : vector<8x128xf32> to vector<8x32xf32>
    %240 = vector.extract_strided_slice %222 {offsets = [0, 64], sizes = [8, 32], strides = [1, 1]} : vector<8x128xf32> to vector<8x32xf32>
    %241 = vector.broadcast %17 : vector<1x32xf32> to vector<8x32xf32>
    %242 = arith.addf %240, %241 : vector<8x32xf32>
    %243 = arith.mulf %230, %242 : vector<8x32xf32>
    %244 = arith.addf %239, %243 : vector<8x32xf32>
    %245 = math.tanh %244 : vector<8x32xf32>
    %246 = arith.subf %219, %245 : vector<8x32xf32>
    %247 = arith.mulf %238, %246 : vector<8x32xf32>
    %248 = arith.addf %245, %247 : vector<8x32xf32>
    %c56_67 = arith.constant 56 : index
    %c0_68 = arith.constant 0 : index
    %249 = vector.load %arg16[%c56_67, %c0_68] : memref<64x32xf32, #tpu.memory_space<vmem>>, vector<8x32xf32>
    tpu.vector_store %arg16[%c56_67, %c0_68], %248 {strides = array<i32>} : memref<64x32xf32, #tpu.memory_space<vmem>>, vector<8x32xf32>,
    %c0_69 = arith.constant 0 : index
    %c0_70 = arith.constant 0 : index
    %250 = vector.load %arg16[%c0_69, %c0_70] : memref<64x32xf32, #tpu.memory_space<vmem>>, vector<64x32xf32>
    %c1 = arith.constant 1 : index
    %c0_71 = arith.constant 0 : index
    %c0_72 = arith.constant 0 : index
    %251 = vector.load %arg1[%c1, %c0_71, %c0_72] : memref<2x8x32xf32, #tpu.memory_space<vmem>>, vector<1x8x32xf32>
    %252 = vector.shape_cast %251 : vector<1x8x32xf32> to vector<8x32xf32>
    %c0_73 = arith.constant 0 : index
    %c0_74 = arith.constant 0 : index
    %253 = vector.load %arg8[%c0_73, %c0_74] : memref<32x128xf32, #tpu.memory_space<vmem>>, vector<32x128xf32>
    %cst_75 = arith.constant dense<0.000000e+00> : vector<64x128xf32>
    %254 = tpu.matmul %250, %253, %cst_75 {dimension_numbers = #tpu.dot_dimension_numbers<[1], [0], [0], [1], [0, 0, 1, 1], [], []>} : vector<64x32xf32>, vector<32x128xf32>, vector<64x128xf32> -> vector<64x128xf32>
    %c0_76 = arith.constant 0 : index
    %c0_77 = arith.constant 0 : index
    %255 = vector.load %arg10[%c0_76, %c0_77] : memref<1x128xf32, #tpu.memory_space<vmem>>, vector<1x128xf32>
    %256 = vector.broadcast %255 : vector<1x128xf32> to vector<64x128xf32>
    %257 = arith.addf %254, %256 : vector<64x128xf32>
    %c0_78 = arith.constant 0 : index
    %c0_79 = arith.constant 0 : index
    %258 = vector.load %arg15[%c0_78, %c0_79] : memref<64x128xf32, #tpu.memory_space<vmem>>, vector<64x128xf32>
    tpu.vector_store %arg15[%c0_78, %c0_79], %257 {strides = array<i32>} : memref<64x128xf32, #tpu.memory_space<vmem>>, vector<64x128xf32>,
    %c0_80 = arith.constant 0 : index
    %c0_81 = arith.constant 0 : index
    %259 = vector.load %arg9[%c0_80, %c0_81] : memref<32x128xf32, #tpu.memory_space<vmem>>, vector<32x128xf32>
    %c0_82 = arith.constant 0 : index
    %c0_83 = arith.constant 0 : index
    %260 = vector.load %arg11[%c0_82, %c0_83] : memref<1x32xf32, #tpu.memory_space<vmem>>, vector<1x32xf32>
    %c0_84 = arith.constant 0 : index
    %c0_85 = arith.constant 0 : index
    %261 = vector.load %arg15[%c0_84, %c0_85] : memref<64x128xf32, #tpu.memory_space<vmem>>, vector<8x128xf32>
    %cst_86 = arith.constant dense<0.000000e+00> : vector<8x128xf32>
    %262 = tpu.matmul %252, %259, %cst_86 {dimension_numbers = #tpu.dot_dimension_numbers<[1], [0], [0], [1], [0, 0, 1, 1], [], []>} : vector<8x32xf32>, vector<32x128xf32>, vector<8x128xf32> -> vector<8x128xf32>
    %263 = vector.extract_strided_slice %261 {offsets = [0, 0], sizes = [8, 32], strides = [1, 1]} : vector<8x128xf32> to vector<8x32xf32>
    %264 = vector.extract_strided_slice %262 {offsets = [0, 0], sizes = [8, 32], strides = [1, 1]} : vector<8x128xf32> to vector<8x32xf32>
    %265 = arith.addf %263, %264 : vector<8x32xf32>
    %266 = arith.negf %265 : vector<8x32xf32>
    %267 = math.exp %266 : vector<8x32xf32>
    %cst_87 = arith.constant 1.000000e+00 : f32
    %268 = vector.broadcast %cst_87 : f32 to vector<8x32xf32>
    %269 = arith.addf %268, %267 : vector<8x32xf32>
    %270 = arith.divf %268, %269 : vector<8x32xf32>
    %271 = vector.extract_strided_slice %261 {offsets = [0, 32], sizes = [8, 32], strides = [1, 1]} : vector<8x128xf32> to vector<8x32xf32>
    %272 = vector.extract_strided_slice %262 {offsets = [0, 32], sizes = [8, 32], strides = [1, 1]} : vector<8x128xf32> to vector<8x32xf32>
    %273 = arith.addf %271, %272 : vector<8x32xf32>
    %274 = arith.negf %273 : vector<8x32xf32>
    %275 = math.exp %274 : vector<8x32xf32>
    %cst_88 = arith.constant 1.000000e+00 : f32
    %276 = vector.broadcast %cst_88 : f32 to vector<8x32xf32>
    %277 = arith.addf %276, %275 : vector<8x32xf32>
    %278 = arith.divf %276, %277 : vector<8x32xf32>
    %279 = vector.extract_strided_slice %261 {offsets = [0, 64], sizes = [8, 32], strides = [1, 1]} : vector<8x128xf32> to vector<8x32xf32>
    %280 = vector.extract_strided_slice %262 {offsets = [0, 64], sizes = [8, 32], strides = [1, 1]} : vector<8x128xf32> to vector<8x32xf32>
    %281 = vector.broadcast %260 : vector<1x32xf32> to vector<8x32xf32>
    %282 = arith.addf %280, %281 : vector<8x32xf32>
    %283 = arith.mulf %270, %282 : vector<8x32xf32>
    %284 = arith.addf %279, %283 : vector<8x32xf32>
    %285 = math.tanh %284 : vector<8x32xf32>
    %286 = arith.subf %252, %285 : vector<8x32xf32>
    %287 = arith.mulf %278, %286 : vector<8x32xf32>
    %288 = arith.addf %285, %287 : vector<8x32xf32>
    %c8_89 = arith.constant 8 : index
    %c0_90 = arith.constant 0 : index
    %289 = vector.load %arg15[%c8_89, %c0_90] : memref<64x128xf32, #tpu.memory_space<vmem>>, vector<8x128xf32>
    %cst_91 = arith.constant dense<0.000000e+00> : vector<8x128xf32>
    %290 = tpu.matmul %288, %259, %cst_91 {dimension_numbers = #tpu.dot_dimension_numbers<[1], [0], [0], [1], [0, 0, 1, 1], [], []>} : vector<8x32xf32>, vector<32x128xf32>, vector<8x128xf32> -> vector<8x128xf32>
    %291 = vector.extract_strided_slice %289 {offsets = [0, 0], sizes = [8, 32], strides = [1, 1]} : vector<8x128xf32> to vector<8x32xf32>
    %292 = vector.extract_strided_slice %290 {offsets = [0, 0], sizes = [8, 32], strides = [1, 1]} : vector<8x128xf32> to vector<8x32xf32>
    %293 = arith.addf %291, %292 : vector<8x32xf32>
    %294 = arith.negf %293 : vector<8x32xf32>
    %295 = math.exp %294 : vector<8x32xf32>
    %cst_92 = arith.constant 1.000000e+00 : f32
    %296 = vector.broadcast %cst_92 : f32 to vector<8x32xf32>
    %297 = arith.addf %296, %295 : vector<8x32xf32>
    %298 = arith.divf %296, %297 : vector<8x32xf32>
    %299 = vector.extract_strided_slice %289 {offsets = [0, 32], sizes = [8, 32], strides = [1, 1]} : vector<8x128xf32> to vector<8x32xf32>
    %300 = vector.extract_strided_slice %290 {offsets = [0, 32], sizes = [8, 32], strides = [1, 1]} : vector<8x128xf32> to vector<8x32xf32>
    %301 = arith.addf %299, %300 : vector<8x32xf32>
    %302 = arith.negf %301 : vector<8x32xf32>
    %303 = math.exp %302 : vector<8x32xf32>
    %cst_93 = arith.constant 1.000000e+00 : f32
    %304 = vector.broadcast %cst_93 : f32 to vector<8x32xf32>
    %305 = arith.addf %304, %303 : vector<8x32xf32>
    %306 = arith.divf %304, %305 : vector<8x32xf32>
    %307 = vector.extract_strided_slice %289 {offsets = [0, 64], sizes = [8, 32], strides = [1, 1]} : vector<8x128xf32> to vector<8x32xf32>
    %308 = vector.extract_strided_slice %290 {offsets = [0, 64], sizes = [8, 32], strides = [1, 1]} : vector<8x128xf32> to vector<8x32xf32>
    %309 = vector.broadcast %260 : vector<1x32xf32> to vector<8x32xf32>
    %310 = arith.addf %308, %309 : vector<8x32xf32>
    %311 = arith.mulf %298, %310 : vector<8x32xf32>
    %312 = arith.addf %307, %311 : vector<8x32xf32>
    %313 = math.tanh %312 : vector<8x32xf32>
    %314 = arith.subf %288, %313 : vector<8x32xf32>
    %315 = arith.mulf %306, %314 : vector<8x32xf32>
    %316 = arith.addf %313, %315 : vector<8x32xf32>
    %c16_94 = arith.constant 16 : index
    %c0_95 = arith.constant 0 : index
    %317 = vector.load %arg15[%c16_94, %c0_95] : memref<64x128xf32, #tpu.memory_space<vmem>>, vector<8x128xf32>
    %cst_96 = arith.constant dense<0.000000e+00> : vector<8x128xf32>
    %318 = tpu.matmul %316, %259, %cst_96 {dimension_numbers = #tpu.dot_dimension_numbers<[1], [0], [0], [1], [0, 0, 1, 1], [], []>} : vector<8x32xf32>, vector<32x128xf32>, vector<8x128xf32> -> vector<8x128xf32>
    %319 = vector.extract_strided_slice %317 {offsets = [0, 0], sizes = [8, 32], strides = [1, 1]} : vector<8x128xf32> to vector<8x32xf32>
    %320 = vector.extract_strided_slice %318 {offsets = [0, 0], sizes = [8, 32], strides = [1, 1]} : vector<8x128xf32> to vector<8x32xf32>
    %321 = arith.addf %319, %320 : vector<8x32xf32>
    %322 = arith.negf %321 : vector<8x32xf32>
    %323 = math.exp %322 : vector<8x32xf32>
    %cst_97 = arith.constant 1.000000e+00 : f32
    %324 = vector.broadcast %cst_97 : f32 to vector<8x32xf32>
    %325 = arith.addf %324, %323 : vector<8x32xf32>
    %326 = arith.divf %324, %325 : vector<8x32xf32>
    %327 = vector.extract_strided_slice %317 {offsets = [0, 32], sizes = [8, 32], strides = [1, 1]} : vector<8x128xf32> to vector<8x32xf32>
    %328 = vector.extract_strided_slice %318 {offsets = [0, 32], sizes = [8, 32], strides = [1, 1]} : vector<8x128xf32> to vector<8x32xf32>
    %329 = arith.addf %327, %328 : vector<8x32xf32>
    %330 = arith.negf %329 : vector<8x32xf32>
    %331 = math.exp %330 : vector<8x32xf32>
    %cst_98 = arith.constant 1.000000e+00 : f32
    %332 = vector.broadcast %cst_98 : f32 to vector<8x32xf32>
    %333 = arith.addf %332, %331 : vector<8x32xf32>
    %334 = arith.divf %332, %333 : vector<8x32xf32>
    %335 = vector.extract_strided_slice %317 {offsets = [0, 64], sizes = [8, 32], strides = [1, 1]} : vector<8x128xf32> to vector<8x32xf32>
    %336 = vector.extract_strided_slice %318 {offsets = [0, 64], sizes = [8, 32], strides = [1, 1]} : vector<8x128xf32> to vector<8x32xf32>
    %337 = vector.broadcast %260 : vector<1x32xf32> to vector<8x32xf32>
    %338 = arith.addf %336, %337 : vector<8x32xf32>
    %339 = arith.mulf %326, %338 : vector<8x32xf32>
    %340 = arith.addf %335, %339 : vector<8x32xf32>
    %341 = math.tanh %340 : vector<8x32xf32>
    %342 = arith.subf %316, %341 : vector<8x32xf32>
    %343 = arith.mulf %334, %342 : vector<8x32xf32>
    %344 = arith.addf %341, %343 : vector<8x32xf32>
    %c24_99 = arith.constant 24 : index
    %c0_100 = arith.constant 0 : index
    %345 = vector.load %arg15[%c24_99, %c0_100] : memref<64x128xf32, #tpu.memory_space<vmem>>, vector<8x128xf32>
    %cst_101 = arith.constant dense<0.000000e+00> : vector<8x128xf32>
    %346 = tpu.matmul %344, %259, %cst_101 {dimension_numbers = #tpu.dot_dimension_numbers<[1], [0], [0], [1], [0, 0, 1, 1], [], []>} : vector<8x32xf32>, vector<32x128xf32>, vector<8x128xf32> -> vector<8x128xf32>
    %347 = vector.extract_strided_slice %345 {offsets = [0, 0], sizes = [8, 32], strides = [1, 1]} : vector<8x128xf32> to vector<8x32xf32>
    %348 = vector.extract_strided_slice %346 {offsets = [0, 0], sizes = [8, 32], strides = [1, 1]} : vector<8x128xf32> to vector<8x32xf32>
    %349 = arith.addf %347, %348 : vector<8x32xf32>
    %350 = arith.negf %349 : vector<8x32xf32>
    %351 = math.exp %350 : vector<8x32xf32>
    %cst_102 = arith.constant 1.000000e+00 : f32
    %352 = vector.broadcast %cst_102 : f32 to vector<8x32xf32>
    %353 = arith.addf %352, %351 : vector<8x32xf32>
    %354 = arith.divf %352, %353 : vector<8x32xf32>
    %355 = vector.extract_strided_slice %345 {offsets = [0, 32], sizes = [8, 32], strides = [1, 1]} : vector<8x128xf32> to vector<8x32xf32>
    %356 = vector.extract_strided_slice %346 {offsets = [0, 32], sizes = [8, 32], strides = [1, 1]} : vector<8x128xf32> to vector<8x32xf32>
    %357 = arith.addf %355, %356 : vector<8x32xf32>
    %358 = arith.negf %357 : vector<8x32xf32>
    %359 = math.exp %358 : vector<8x32xf32>
    %cst_103 = arith.constant 1.000000e+00 : f32
    %360 = vector.broadcast %cst_103 : f32 to vector<8x32xf32>
    %361 = arith.addf %360, %359 : vector<8x32xf32>
    %362 = arith.divf %360, %361 : vector<8x32xf32>
    %363 = vector.extract_strided_slice %345 {offsets = [0, 64], sizes = [8, 32], strides = [1, 1]} : vector<8x128xf32> to vector<8x32xf32>
    %364 = vector.extract_strided_slice %346 {offsets = [0, 64], sizes = [8, 32], strides = [1, 1]} : vector<8x128xf32> to vector<8x32xf32>
    %365 = vector.broadcast %260 : vector<1x32xf32> to vector<8x32xf32>
    %366 = arith.addf %364, %365 : vector<8x32xf32>
    %367 = arith.mulf %354, %366 : vector<8x32xf32>
    %368 = arith.addf %363, %367 : vector<8x32xf32>
    %369 = math.tanh %368 : vector<8x32xf32>
    %370 = arith.subf %344, %369 : vector<8x32xf32>
    %371 = arith.mulf %362, %370 : vector<8x32xf32>
    %372 = arith.addf %369, %371 : vector<8x32xf32>
    %c32_104 = arith.constant 32 : index
    %c0_105 = arith.constant 0 : index
    %373 = vector.load %arg15[%c32_104, %c0_105] : memref<64x128xf32, #tpu.memory_space<vmem>>, vector<8x128xf32>
    %cst_106 = arith.constant dense<0.000000e+00> : vector<8x128xf32>
    %374 = tpu.matmul %372, %259, %cst_106 {dimension_numbers = #tpu.dot_dimension_numbers<[1], [0], [0], [1], [0, 0, 1, 1], [], []>} : vector<8x32xf32>, vector<32x128xf32>, vector<8x128xf32> -> vector<8x128xf32>
    %375 = vector.extract_strided_slice %373 {offsets = [0, 0], sizes = [8, 32], strides = [1, 1]} : vector<8x128xf32> to vector<8x32xf32>
    %376 = vector.extract_strided_slice %374 {offsets = [0, 0], sizes = [8, 32], strides = [1, 1]} : vector<8x128xf32> to vector<8x32xf32>
    %377 = arith.addf %375, %376 : vector<8x32xf32>
    %378 = arith.negf %377 : vector<8x32xf32>
    %379 = math.exp %378 : vector<8x32xf32>
    %cst_107 = arith.constant 1.000000e+00 : f32
    %380 = vector.broadcast %cst_107 : f32 to vector<8x32xf32>
    %381 = arith.addf %380, %379 : vector<8x32xf32>
    %382 = arith.divf %380, %381 : vector<8x32xf32>
    %383 = vector.extract_strided_slice %373 {offsets = [0, 32], sizes = [8, 32], strides = [1, 1]} : vector<8x128xf32> to vector<8x32xf32>
    %384 = vector.extract_strided_slice %374 {offsets = [0, 32], sizes = [8, 32], strides = [1, 1]} : vector<8x128xf32> to vector<8x32xf32>
    %385 = arith.addf %383, %384 : vector<8x32xf32>
    %386 = arith.negf %385 : vector<8x32xf32>
    %387 = math.exp %386 : vector<8x32xf32>
    %cst_108 = arith.constant 1.000000e+00 : f32
    %388 = vector.broadcast %cst_108 : f32 to vector<8x32xf32>
    %389 = arith.addf %388, %387 : vector<8x32xf32>
    %390 = arith.divf %388, %389 : vector<8x32xf32>
    %391 = vector.extract_strided_slice %373 {offsets = [0, 64], sizes = [8, 32], strides = [1, 1]} : vector<8x128xf32> to vector<8x32xf32>
    %392 = vector.extract_strided_slice %374 {offsets = [0, 64], sizes = [8, 32], strides = [1, 1]} : vector<8x128xf32> to vector<8x32xf32>
    %393 = vector.broadcast %260 : vector<1x32xf32> to vector<8x32xf32>
    %394 = arith.addf %392, %393 : vector<8x32xf32>
    %395 = arith.mulf %382, %394 : vector<8x32xf32>
    %396 = arith.addf %391, %395 : vector<8x32xf32>
    %397 = math.tanh %396 : vector<8x32xf32>
    %398 = arith.subf %372, %397 : vector<8x32xf32>
    %399 = arith.mulf %390, %398 : vector<8x32xf32>
    %400 = arith.addf %397, %399 : vector<8x32xf32>
    %c40_109 = arith.constant 40 : index
    %c0_110 = arith.constant 0 : index
    %401 = vector.load %arg15[%c40_109, %c0_110] : memref<64x128xf32, #tpu.memory_space<vmem>>, vector<8x128xf32>
    %cst_111 = arith.constant dense<0.000000e+00> : vector<8x128xf32>
    %402 = tpu.matmul %400, %259, %cst_111 {dimension_numbers = #tpu.dot_dimension_numbers<[1], [0], [0], [1], [0, 0, 1, 1], [], []>} : vector<8x32xf32>, vector<32x128xf32>, vector<8x128xf32> -> vector<8x128xf32>
    %403 = vector.extract_strided_slice %401 {offsets = [0, 0], sizes = [8, 32], strides = [1, 1]} : vector<8x128xf32> to vector<8x32xf32>
    %404 = vector.extract_strided_slice %402 {offsets = [0, 0], sizes = [8, 32], strides = [1, 1]} : vector<8x128xf32> to vector<8x32xf32>
    %405 = arith.addf %403, %404 : vector<8x32xf32>
    %406 = arith.negf %405 : vector<8x32xf32>
    %407 = math.exp %406 : vector<8x32xf32>
    %cst_112 = arith.constant 1.000000e+00 : f32
    %408 = vector.broadcast %cst_112 : f32 to vector<8x32xf32>
    %409 = arith.addf %408, %407 : vector<8x32xf32>
    %410 = arith.divf %408, %409 : vector<8x32xf32>
    %411 = vector.extract_strided_slice %401 {offsets = [0, 32], sizes = [8, 32], strides = [1, 1]} : vector<8x128xf32> to vector<8x32xf32>
    %412 = vector.extract_strided_slice %402 {offsets = [0, 32], sizes = [8, 32], strides = [1, 1]} : vector<8x128xf32> to vector<8x32xf32>
    %413 = arith.addf %411, %412 : vector<8x32xf32>
    %414 = arith.negf %413 : vector<8x32xf32>
    %415 = math.exp %414 : vector<8x32xf32>
    %cst_113 = arith.constant 1.000000e+00 : f32
    %416 = vector.broadcast %cst_113 : f32 to vector<8x32xf32>
    %417 = arith.addf %416, %415 : vector<8x32xf32>
    %418 = arith.divf %416, %417 : vector<8x32xf32>
    %419 = vector.extract_strided_slice %401 {offsets = [0, 64], sizes = [8, 32], strides = [1, 1]} : vector<8x128xf32> to vector<8x32xf32>
    %420 = vector.extract_strided_slice %402 {offsets = [0, 64], sizes = [8, 32], strides = [1, 1]} : vector<8x128xf32> to vector<8x32xf32>
    %421 = vector.broadcast %260 : vector<1x32xf32> to vector<8x32xf32>
    %422 = arith.addf %420, %421 : vector<8x32xf32>
    %423 = arith.mulf %410, %422 : vector<8x32xf32>
    %424 = arith.addf %419, %423 : vector<8x32xf32>
    %425 = math.tanh %424 : vector<8x32xf32>
    %426 = arith.subf %400, %425 : vector<8x32xf32>
    %427 = arith.mulf %418, %426 : vector<8x32xf32>
    %428 = arith.addf %425, %427 : vector<8x32xf32>
    %c48_114 = arith.constant 48 : index
    %c0_115 = arith.constant 0 : index
    %429 = vector.load %arg15[%c48_114, %c0_115] : memref<64x128xf32, #tpu.memory_space<vmem>>, vector<8x128xf32>
    %cst_116 = arith.constant dense<0.000000e+00> : vector<8x128xf32>
    %430 = tpu.matmul %428, %259, %cst_116 {dimension_numbers = #tpu.dot_dimension_numbers<[1], [0], [0], [1], [0, 0, 1, 1], [], []>} : vector<8x32xf32>, vector<32x128xf32>, vector<8x128xf32> -> vector<8x128xf32>
    %431 = vector.extract_strided_slice %429 {offsets = [0, 0], sizes = [8, 32], strides = [1, 1]} : vector<8x128xf32> to vector<8x32xf32>
    %432 = vector.extract_strided_slice %430 {offsets = [0, 0], sizes = [8, 32], strides = [1, 1]} : vector<8x128xf32> to vector<8x32xf32>
    %433 = arith.addf %431, %432 : vector<8x32xf32>
    %434 = arith.negf %433 : vector<8x32xf32>
    %435 = math.exp %434 : vector<8x32xf32>
    %cst_117 = arith.constant 1.000000e+00 : f32
    %436 = vector.broadcast %cst_117 : f32 to vector<8x32xf32>
    %437 = arith.addf %436, %435 : vector<8x32xf32>
    %438 = arith.divf %436, %437 : vector<8x32xf32>
    %439 = vector.extract_strided_slice %429 {offsets = [0, 32], sizes = [8, 32], strides = [1, 1]} : vector<8x128xf32> to vector<8x32xf32>
    %440 = vector.extract_strided_slice %430 {offsets = [0, 32], sizes = [8, 32], strides = [1, 1]} : vector<8x128xf32> to vector<8x32xf32>
    %441 = arith.addf %439, %440 : vector<8x32xf32>
    %442 = arith.negf %441 : vector<8x32xf32>
    %443 = math.exp %442 : vector<8x32xf32>
    %cst_118 = arith.constant 1.000000e+00 : f32
    %444 = vector.broadcast %cst_118 : f32 to vector<8x32xf32>
    %445 = arith.addf %444, %443 : vector<8x32xf32>
    %446 = arith.divf %444, %445 : vector<8x32xf32>
    %447 = vector.extract_strided_slice %429 {offsets = [0, 64], sizes = [8, 32], strides = [1, 1]} : vector<8x128xf32> to vector<8x32xf32>
    %448 = vector.extract_strided_slice %430 {offsets = [0, 64], sizes = [8, 32], strides = [1, 1]} : vector<8x128xf32> to vector<8x32xf32>
    %449 = vector.broadcast %260 : vector<1x32xf32> to vector<8x32xf32>
    %450 = arith.addf %448, %449 : vector<8x32xf32>
    %451 = arith.mulf %438, %450 : vector<8x32xf32>
    %452 = arith.addf %447, %451 : vector<8x32xf32>
    %453 = math.tanh %452 : vector<8x32xf32>
    %454 = arith.subf %428, %453 : vector<8x32xf32>
    %455 = arith.mulf %446, %454 : vector<8x32xf32>
    %456 = arith.addf %453, %455 : vector<8x32xf32>
    %c56_119 = arith.constant 56 : index
    %c0_120 = arith.constant 0 : index
    %457 = vector.load %arg15[%c56_119, %c0_120] : memref<64x128xf32, #tpu.memory_space<vmem>>, vector<8x128xf32>
    %cst_121 = arith.constant dense<0.000000e+00> : vector<8x128xf32>
    %458 = tpu.matmul %456, %259, %cst_121 {dimension_numbers = #tpu.dot_dimension_numbers<[1], [0], [0], [1], [0, 0, 1, 1], [], []>} : vector<8x32xf32>, vector<32x128xf32>, vector<8x128xf32> -> vector<8x128xf32>
    %459 = vector.extract_strided_slice %457 {offsets = [0, 0], sizes = [8, 32], strides = [1, 1]} : vector<8x128xf32> to vector<8x32xf32>
    %460 = vector.extract_strided_slice %458 {offsets = [0, 0], sizes = [8, 32], strides = [1, 1]} : vector<8x128xf32> to vector<8x32xf32>
    %461 = arith.addf %459, %460 : vector<8x32xf32>
    %462 = arith.negf %461 : vector<8x32xf32>
    %463 = math.exp %462 : vector<8x32xf32>
    %cst_122 = arith.constant 1.000000e+00 : f32
    %464 = vector.broadcast %cst_122 : f32 to vector<8x32xf32>
    %465 = arith.addf %464, %463 : vector<8x32xf32>
    %466 = arith.divf %464, %465 : vector<8x32xf32>
    %467 = vector.extract_strided_slice %457 {offsets = [0, 32], sizes = [8, 32], strides = [1, 1]} : vector<8x128xf32> to vector<8x32xf32>
    %468 = vector.extract_strided_slice %458 {offsets = [0, 32], sizes = [8, 32], strides = [1, 1]} : vector<8x128xf32> to vector<8x32xf32>
    %469 = arith.addf %467, %468 : vector<8x32xf32>
    %470 = arith.negf %469 : vector<8x32xf32>
    %471 = math.exp %470 : vector<8x32xf32>
    %cst_123 = arith.constant 1.000000e+00 : f32
    %472 = vector.broadcast %cst_123 : f32 to vector<8x32xf32>
    %473 = arith.addf %472, %471 : vector<8x32xf32>
    %474 = arith.divf %472, %473 : vector<8x32xf32>
    %475 = vector.extract_strided_slice %457 {offsets = [0, 64], sizes = [8, 32], strides = [1, 1]} : vector<8x128xf32> to vector<8x32xf32>
    %476 = vector.extract_strided_slice %458 {offsets = [0, 64], sizes = [8, 32], strides = [1, 1]} : vector<8x128xf32> to vector<8x32xf32>
    %477 = vector.broadcast %260 : vector<1x32xf32> to vector<8x32xf32>
    %478 = arith.addf %476, %477 : vector<8x32xf32>
    %479 = arith.mulf %466, %478 : vector<8x32xf32>
    %480 = arith.addf %475, %479 : vector<8x32xf32>
    %481 = math.tanh %480 : vector<8x32xf32>
    %482 = arith.subf %456, %481 : vector<8x32xf32>
    %483 = arith.mulf %474, %482 : vector<8x32xf32>
    %484 = arith.addf %481, %483 : vector<8x32xf32>
    %c0_124 = arith.constant 0 : index
    %c0_125 = arith.constant 0 : index
    %485 = vector.load %arg12[%c0_124, %c0_125] : memref<32x8xf32, #tpu.memory_space<vmem>>, vector<32x8xf32>
    %cst_126 = arith.constant dense<0.000000e+00> : vector<8x8xf32>
    %486 = tpu.matmul %484, %485, %cst_126 {dimension_numbers = #tpu.dot_dimension_numbers<[1], [0], [0], [1], [0, 0, 1, 1], [], []>} : vector<8x32xf32>, vector<32x8xf32>, vector<8x8xf32> -> vector<8x8xf32>
    %c0_127 = arith.constant 0 : index
    %c0_128 = arith.constant 0 : index
    %487 = vector.load %arg13[%c0_127, %c0_128] : memref<1x8xf32, #tpu.memory_space<vmem>>, vector<1x8xf32>
    %488 = vector.broadcast %487 : vector<1x8xf32> to vector<8x8xf32>
    %489 = arith.addf %486, %488 : vector<8x8xf32>
    %c0_129 = arith.constant 0 : index
    %c0_130 = arith.constant 0 : index
    %490 = vector.load %arg14[%c0_129, %c0_130] : memref<8x8xf32, #tpu.memory_space<vmem>>, vector<8x8xf32>
    tpu.vector_store %arg14[%c0_129, %c0_130], %489 {strides = array<i32>} : memref<8x8xf32, #tpu.memory_space<vmem>>, vector<8x8xf32>,
    return
  }
}

</mosaic_0001>

<llo_original>
// kernel: cnn_gru_net.1
$region0: #{cnn_gru_net.1}
  #allocation0 [shape = 'u32[]', space=smem, size = 0x4, offset = 0x4, fixed_abs, tag = 'smem constant byte address 0x4 - core index']
  #allocation1 [shape = 'u32[144,128]{1,0:T(1,128)}', space=vmem, size = 0x12000, scoped, tag = 'internal scratch']
  #allocation2 [shape = 'f32[64,128]{1,0:T(8,128)}', space=vmem, size = 0x8000, scoped, tag = 'scratch operand']
  #allocation3 [shape = 'f32[64,32]{1,0:T(8,128)}', space=vmem, size = 0x8000, scoped, tag = 'scratch operand']
  %s0 = inlined_call_operand.vmem [shape: f32[64,80], index: 0, kind: input, shape index: {}]
  %s1 = inlined_call_operand.vmem [shape: f32[2,8,32], index: 1, kind: input, shape index: {}]
  %s2 = inlined_call_operand.vmem [shape: f32[80,16], index: 2, kind: input, shape index: {}]
  %s3 = inlined_call_operand.vmem [shape: f32[1,16], index: 3, kind: input, shape index: {}]
  %s4 = inlined_call_operand.vmem [shape: f32[16,128], index: 4, kind: input, shape index: {}]
  %s5 = inlined_call_operand.vmem [shape: f32[32,128], index: 5, kind: input, shape index: {}]
  %s6 = inlined_call_operand.vmem [shape: f32[1,128], index: 6, kind: input, shape index: {}]
  %s7 = inlined_call_operand.vmem [shape: f32[1,32], index: 7, kind: input, shape index: {}]
  %s8 = inlined_call_operand.vmem [shape: f32[32,128], index: 8, kind: input, shape index: {}]
  %s9 = inlined_call_operand.vmem [shape: f32[32,128], index: 9, kind: input, shape index: {}]
  %s10 = inlined_call_operand.vmem [shape: f32[1,128], index: 10, kind: input, shape index: {}]
  %s11 = inlined_call_operand.vmem [shape: f32[1,32], index: 11, kind: input, shape index: {}]
  %s12 = inlined_call_operand.vmem [shape: f32[32,8], index: 12, kind: input, shape index: {}]
  %s13 = inlined_call_operand.vmem [shape: f32[1,8], index: 13, kind: input, shape index: {}]
  %s14 = inlined_call_operand.hbm [shape: f32[8,8], index: 14, kind: output, shape index: {}]
  %s15 = sld [smem:[#allocation0]]
  $region66: #{cnn_gru_net.1} parent=0
    _
  %s17 = ssub.s32 1, %s15
  %s18 = scalar_select 0, %s17, %s15
  $region1: #{cnn_gru_net.1} parent=0
    #allocation4 [shape = 'u8[4096]{0}', space=vmem, size = 0x1000, scoped, tag = 'output window, operand 0, single buffered']
    #allocation5 [shape = 's32[1]{0}', space=sflag, size = 0x4, scoped, tag = 'scoped memory for cnn_gru_net.1']
    %19 = vsyncpa [#allocation5], 0
    // Predicated region
    $region2: #{cnn_gru_net.1} parent=1 // pred_check
      _
    $region3: #{cnn_gru_net.1} parent=1 // pred_check_branch
      %21 = sbr.rel (0) target = $region5
    $region4: #{cnn_gru_net.1} parent=1 // pred_region
      _
    $region5: #{cnn_gru_net.1} parent=1 // pred_fallthru
      _
    // Predicated region
    $region6: #{cnn_gru_net.1} parent=1 // pred_check
      _
    $region7: #{cnn_gru_net.1} parent=1 // pred_check_branch
      %23 = sbr.rel (0) target = $region9
    $region8: #{cnn_gru_net.1} parent=1 // pred_region
      _
    $region9: #{cnn_gru_net.1} parent=1 // pred_fallthru
      _
    // Predicated region
    $region10: #{cnn_gru_net.1} parent=1 // pred_check
      _
    $region11: #{cnn_gru_net.1} parent=1 // pred_check_branch
      %25 = sbr.rel (0) target = $region13
    $region12: #{cnn_gru_net.1} parent=1 // pred_region
      _
    $region13: #{cnn_gru_net.1} parent=1 // pred_fallthru
      _
    // Predicated region
    $region14: #{cnn_gru_net.1} parent=1 // pred_check
      _
    $region15: #{cnn_gru_net.1} parent=1 // pred_check_branch
      %27 = sbr.rel (0) target = $region17
    $region16: #{cnn_gru_net.1} parent=1 // pred_region
      _
    $region17: #{cnn_gru_net.1} parent=1 // pred_fallthru
      _
    // Predicated region
    $region18: #{cnn_gru_net.1} parent=1 // pred_check
      _
    $region19: #{cnn_gru_net.1} parent=1 // pred_check_branch
      %29 = sbr.rel (0) target = $region21
    $region20: #{cnn_gru_net.1} parent=1 // pred_region
      _
    $region21: #{cnn_gru_net.1} parent=1 // pred_fallthru
      _
    // Predicated region
    $region22: #{cnn_gru_net.1} parent=1 // pred_check
      _
    $region23: #{cnn_gru_net.1} parent=1 // pred_check_branch
      %31 = sbr.rel (0) target = $region25
    $region24: #{cnn_gru_net.1} parent=1 // pred_region
      _
    $region25: #{cnn_gru_net.1} parent=1 // pred_fallthru
      _
    // Predicated region
    $region26: #{cnn_gru_net.1} parent=1 // pred_check
      _
    $region27: #{cnn_gru_net.1} parent=1 // pred_check_branch
      %33 = sbr.rel (0) target = $region29
    $region28: #{cnn_gru_net.1} parent=1 // pred_region
      _
    $region29: #{cnn_gru_net.1} parent=1 // pred_fallthru
      _
    // Predicated region
    $region30: #{cnn_gru_net.1} parent=1 // pred_check
      _
    $region31: #{cnn_gru_net.1} parent=1 // pred_check_branch
      %35 = sbr.rel (0) target = $region33
    $region32: #{cnn_gru_net.1} parent=1 // pred_region
      _
    $region33: #{cnn_gru_net.1} parent=1 // pred_fallthru
      _
    // Predicated region
    $region34: #{cnn_gru_net.1} parent=1 // pred_check
      _
    $region35: #{cnn_gru_net.1} parent=1 // pred_check_branch
      %37 = sbr.rel (0) target = $region37
    $region36: #{cnn_gru_net.1} parent=1 // pred_region
      _
    $region37: #{cnn_gru_net.1} parent=1 // pred_fallthru
      _
    // Predicated region
    $region38: #{cnn_gru_net.1} parent=1 // pred_check
      _
    $region39: #{cnn_gru_net.1} parent=1 // pred_check_branch
      %39 = sbr.rel (0) target = $region41
    $region40: #{cnn_gru_net.1} parent=1 // pred_region
      _
    $region41: #{cnn_gru_net.1} parent=1 // pred_fallthru
      _
    // Predicated region
    $region42: #{cnn_gru_net.1} parent=1 // pred_check
      _
    $region43: #{cnn_gru_net.1} parent=1 // pred_check_branch
      %41 = sbr.rel (0) target = $region45
    $region44: #{cnn_gru_net.1} parent=1 // pred_region
      _
    $region45: #{cnn_gru_net.1} parent=1 // pred_fallthru
      _
    // Predicated region
    $region46: #{cnn_gru_net.1} parent=1 // pred_check
      _
    $region47: #{cnn_gru_net.1} parent=1 // pred_check_branch
      %43 = sbr.rel (0) target = $region49
    $region48: #{cnn_gru_net.1} parent=1 // pred_region
      _
    $region49: #{cnn_gru_net.1} parent=1 // pred_fallthru
      _
    // Predicated region
    $region50: #{cnn_gru_net.1} parent=1 // pred_check
      _
    $region51: #{cnn_gru_net.1} parent=1 // pred_check_branch
      %45 = sbr.rel (0) target = $region53
    $region52: #{cnn_gru_net.1} parent=1 // pred_region
      _
    $region53: #{cnn_gru_net.1} parent=1 // pred_fallthru
      _
    // Predicated region
    $region54: #{cnn_gru_net.1} parent=1 // pred_check
      _
    $region55: #{cnn_gru_net.1} parent=1 // pred_check_branch
      %47 = sbr.rel (0) target = $region57
    $region56: #{cnn_gru_net.1} parent=1 // pred_region
      _
    $region57: #{cnn_gru_net.1} parent=1 // pred_fallthru
      _
    %v48 = vld [vmem:[%s0] sm:$0xff]
    %v49 = vld [vmem:[%s0 + $0x8] sm:$0xff]
    %v50 = vld [vmem:[%s0 + $0x10] sm:$0xff]
    %v51 = vld [vmem:[%s0 + $0x18] sm:$0xff]
    %v52 = vld [vmem:[%s0 + $0x20] sm:$0xff]
    %v53 = vld [vmem:[%s0 + $0x28] sm:$0xff]
    %v54 = vld [vmem:[%s0 + $0x30] sm:$0xff]
    %v55 = vld [vmem:[%s0 + $0x38] sm:$0xff]
    %v56 = vld [vmem:[%s2] sm:$0xff]
    %v57 = vld [vmem:[%s2 + $0x8] sm:$0xff]
    %v58 = vld [vmem:[%s2 + $0x10] sm:$0xff]
    %v59 = vld [vmem:[%s2 + $0x18] sm:$0xff]
    %v60 = vld [vmem:[%s2 + $0x20] sm:$0xff]
    %v61 = vld [vmem:[%s2 + $0x28] sm:$0xff]
    %v62 = vld [vmem:[%s2 + $0x30] sm:$0xff]
    %v63 = vld [vmem:[%s2 + $0x38] sm:$0xff]
    %v64 = vld [vmem:[%s2 + $0x40] sm:$0xff]
    %v65 = vld [vmem:[%s2 + $0x48] sm:$0xff]
    %v66 = vld [vmem:[%s3] sm:$0x1]
    %v68 = vlaneseq
    %v69 = vshrl.u32 %v68, 7
    %v70 = vsub.s32 0, %v69
    %v71 = vrot.slane %v66, %v70
    %vm73 = vcmask 654336
    %v75 = vsel %vm73, %v48, 0
    %v78 = vsel %vm73, %v49, 0
    %v81 = vsel %vm73, %v50, 0
    %v84 = vsel %vm73, %v51, 0
    %v87 = vsel %vm73, %v52, 0
    %v90 = vsel %vm73, %v53, 0
    %v93 = vsel %vm73, %v54, 0
    %v96 = vsel %vm73, %v55, 0
    %98 = vmatprep.subr.mxu0 0.0
    %99 = vmatpush1.msra.mxu0 %v56
    %100 = vmatprep.subr.mxu0 0.0
    %101 = vmatpush1.msra.mxu0 %v57
    %102 = vmatprep.subr.mxu0 0.0
    %103 = vmatpush1.msra.mxu0 %v58
    %104 = vmatprep.subr.mxu0 0.0
    %105 = vmatpush1.msra.mxu0 %v59
    %106 = vmatprep.subr.mxu0 0.0
    %107 = vmatpush1.msra.mxu0 %v60
    %108 = vmatprep.subr.mxu0 0.0
    %109 = vmatpush1.msra.mxu0 %v61
    %110 = vmatprep.subr.mxu0 0.0
    %111 = vmatpush1.msra.mxu0 %v62
    %112 = vmatprep.subr.mxu0 0.0
    %113 = vmatpush1.msra.mxu0 %v63
    %114 = vmatprep.subr.mxu0 0.0
    %115 = vmatpush1.msra.mxu0 %v64
    %116 = vmatprep.subr.mxu0 0.0
    %117 = vmatpush1.msra.mxu0 %v65
    %118 = vmatprep.subr.mxu0 0.0
    %119 = vmatpush1.msra.mxu0 0.0
    %120 = vmatprep.subr.mxu0 0.0
    %121 = vmatpush1.msra.mxu0 0.0
    %122 = vmatprep.subr.mxu0 0.0
    %123 = vmatpush1.msra.mxu0 0.0
    %124 = vmatprep.subr.mxu0 0.0
    %125 = vmatpush1.msra.mxu0 0.0
    %126 = vmatprep.subr.mxu0 0.0
    %127 = vmatpush1.msra.mxu0 0.0
    %128 = vmatprep.subr.mxu0 0.0
    %129 = vmatpush1.msra.mxu0 0.0
    %130 = vmatprep.subr.mxu0 0.0
    %131 = vmatpush1.msra.mxu0 0.0
    %132 = vmatprep.subr.mxu0 0.0
    %133 = vmatpush1.msra.mxu0 0.0
    %134 = vmatprep.subr.mxu0 0.0
    %135 = vmatpush1.msra.mxu0 0.0
    %136 = vmatprep.subr.mxu0 0.0
    %137 = vmatpush1.msra.mxu0 0.0
    %138 = vmatprep.subr.mxu0 0.0
    %139 = vmatpush1.msra.mxu0 0.0
    %140 = vmatprep.subr.mxu0 0.0
    %141 = vmatpush1.msra.mxu0 0.0
    %142 = vmatprep.subr.mxu0 0.0
    %143 = vmatpush1.msra.mxu0 0.0
    %144 = vmatprep.subr.mxu0 0.0
    %145 = vmatpush1.msra.mxu0 0.0
    %146 = vmatprep.subr.mxu0 0.0
    %147 = vmatpush1.msra.mxu0 0.0
    %148 = vmatprep.subr.mxu0 0.0
    %149 = vmatpush1.msra.mxu0 0.0
    %150 = vmatprep.subr.mxu0 0.0
    %151 = vmatpush1.msra.mxu0 0.0
    %152 = vmatprep.subr.mxu0 0.0
    %153 = vmatpush1.msra.mxu0 0.0
    %154 = vmatprep.subr.mxu0 0.0
    %155 = vmatpush1.msra.mxu0 0.0
    %156 = vmatprep.subr.mxu0 0.0
    %157 = vmatpush1.msra.mxu0 0.0
    %158 = vmatprep.subr.mxu0 0.0
    %159 = vmatpush1.msra.mxu0 0.0
    %160 = vmatprep.subr.mxu0 0.0
    %161 = vmatpush1.msra.mxu0 0.0
    %162 = vmatprep.mubr.f32.mxu0 0.0
    %163 = vmatmul.mubr.f32.gmra.mrb[0].mxu0 %v75
    %v164 = vpop.f32.mrb[0].mxu0
    %v165 = vadd.f32 %v71, %v164
    %v166 = vpop.f32.mrb[0].mxu0
    %167 = vmatprep.mubr.f32.mxu0 0.0
    %168 = vmatmul.mubr.f32.gmra.mrb[0].mxu0 %v78
    %v169 = vpop.f32.mrb[0].mxu0
    %v170 = vadd.f32 %v71, %v169
    %v171 = vpop.f32.mrb[0].mxu0
    %172 = vmatprep.mubr.f32.mxu0 0.0
    %173 = vmatmul.mubr.f32.gmra.mrb[0].mxu0 %v81
    %v174 = vpop.f32.mrb[0].mxu0
    %v175 = vadd.f32 %v71, %v174
    %v176 = vpop.f32.mrb[0].mxu0
    %177 = vmatprep.mubr.f32.mxu0 0.0
    %178 = vmatmul.mubr.f32.gmra.mrb[0].mxu0 %v84
    %v179 = vpop.f32.mrb[0].mxu0
    %v180 = vadd.f32 %v71, %v179
    %v181 = vpop.f32.mrb[0].mxu0
    %182 = vmatprep.mubr.f32.mxu0 0.0
    %183 = vmatmul.mubr.f32.gmra.mrb[0].mxu0 %v87
    %v184 = vpop.f32.mrb[0].mxu0
    %v185 = vadd.f32 %v71, %v184
    %v186 = vpop.f32.mrb[0].mxu0
    %187 = vmatprep.mubr.f32.mxu0 0.0
    %188 = vmatmul.mubr.f32.gmra.mrb[0].mxu0 %v90
    %v189 = vpop.f32.mrb[0].mxu0
    %v190 = vadd.f32 %v71, %v189
    %v191 = vpop.f32.mrb[0].mxu0
    %192 = vmatprep.mubr.f32.mxu0 0.0
    %193 = vmatmul.mubr.f32.gmra.mrb[0].mxu0 %v93
    %v194 = vpop.f32.mrb[0].mxu0
    %v195 = vadd.f32 %v71, %v194
    %v196 = vpop.f32.mrb[0].mxu0
    %197 = vmatprep.mubr.f32.mxu0 0.0
    %198 = vmatmul.mubr.f32.gmra.mrb[0].mxu0 %v96
    %v199 = vpop.f32.mrb[0].mxu0
    %v200 = vadd.f32 %v71, %v199
    %v201 = vpop.f32.mrb[0].mxu0
    %202 = vdwg.mxu0
    %v203 = vmax.f32 %v165, 0.0
    %v204 = vmax.f32 %v170, 0.0
    %v205 = vmax.f32 %v175, 0.0
    %v206 = vmax.f32 %v180, 0.0
    %v207 = vmax.f32 %v185, 0.0
    %v208 = vmax.f32 %v190, 0.0
    %v209 = vmax.f32 %v195, 0.0
    %v210 = vmax.f32 %v200, 0.0
    %v211 = vld [vmem:[%s1] sm:$0xff]
    %v212 = vld [vmem:[%s4] sm:$0xff]
    %v213 = vld [vmem:[%s4 + $0x8] sm:$0xff]
    %v214 = vld [vmem:[%s6] sm:$0x1]
    %v216 = vlaneseq
    %v217 = vshrl.u32 %v216, 7
    %v218 = vsub.s32 0, %v217
    %v219 = vrot.slane %v214, %v218
    %vm221 = vcmask 130048
    %v223 = vsel %vm221, %v203, 0
    %v226 = vsel %vm221, %v204, 0
    %v229 = vsel %vm221, %v205, 0
    %v232 = vsel %vm221, %v206, 0
    %v235 = vsel %vm221, %v207, 0
    %v238 = vsel %vm221, %v208, 0
    %v241 = vsel %vm221, %v209, 0
    %v244 = vsel %vm221, %v210, 0
    %246 = vmatprep.subr.mxu0 0.0
    %247 = vmatpush1.msra.mxu0 %v212
    %248 = vmatprep.subr.mxu0 0.0
    %249 = vmatpush1.msra.mxu0 %v213
    %250 = vmatprep.subr.mxu0 0.0
    %251 = vmatpush1.msra.mxu0 0.0
    %252 = vmatprep.subr.mxu0 0.0
    %253 = vmatpush1.msra.mxu0 0.0
    %254 = vmatprep.subr.mxu0 0.0
    %255 = vmatpush1.msra.mxu0 0.0
    %256 = vmatprep.subr.mxu0 0.0
    %257 = vmatpush1.msra.mxu0 0.0
    %258 = vmatprep.subr.mxu0 0.0
    %259 = vmatpush1.msra.mxu0 0.0
    %260 = vmatprep.subr.mxu0 0.0
    %261 = vmatpush1.msra.mxu0 0.0
    %262 = vmatprep.subr.mxu0 0.0
    %263 = vmatpush1.msra.mxu0 0.0
    %264 = vmatprep.subr.mxu0 0.0
    %265 = vmatpush1.msra.mxu0 0.0
    %266 = vmatprep.subr.mxu0 0.0
    %267 = vmatpush1.msra.mxu0 0.0
    %268 = vmatprep.subr.mxu0 0.0
    %269 = vmatpush1.msra.mxu0 0.0
    %270 = vmatprep.subr.mxu0 0.0
    %271 = vmatpush1.msra.mxu0 0.0
    %272 = vmatprep.subr.mxu0 0.0
    %273 = vmatpush1.msra.mxu0 0.0
    %274 = vmatprep.subr.mxu0 0.0
    %275 = vmatpush1.msra.mxu0 0.0
    %276 = vmatprep.subr.mxu0 0.0
    %277 = vmatpush1.msra.mxu0 0.0
    %278 = vmatprep.subr.mxu0 0.0
    %279 = vmatpush1.msra.mxu0 0.0
    %280 = vmatprep.subr.mxu0 0.0
    %281 = vmatpush1.msra.mxu0 0.0
    %282 = vmatprep.subr.mxu0 0.0
    %283 = vmatpush1.msra.mxu0 0.0
    %284 = vmatprep.subr.mxu0 0.0
    %285 = vmatpush1.msra.mxu0 0.0
    %286 = vmatprep.subr.mxu0 0.0
    %287 = vmatpush1.msra.mxu0 0.0
    %288 = vmatprep.subr.mxu0 0.0
    %289 = vmatpush1.msra.mxu0 0.0
    %290 = vmatprep.subr.mxu0 0.0
    %291 = vmatpush1.msra.mxu0 0.0
    %292 = vmatprep.subr.mxu0 0.0
    %293 = vmatpush1.msra.mxu0 0.0
    %294 = vmatprep.subr.mxu0 0.0
    %295 = vmatpush1.msra.mxu0 0.0
    %296 = vmatprep.subr.mxu0 0.0
    %297 = vmatpush1.msra.mxu0 0.0
    %298 = vmatprep.subr.mxu0 0.0
    %299 = vmatpush1.msra.mxu0 0.0
    %300 = vmatprep.subr.mxu0 0.0
    %301 = vmatpush1.msra.mxu0 0.0
    %302 = vmatprep.subr.mxu0 0.0
    %303 = vmatpush1.msra.mxu0 0.0
    %304 = vmatprep.subr.mxu0 0.0
    %305 = vmatpush1.msra.mxu0 0.0
    %306 = vmatprep.subr.mxu0 0.0
    %307 = vmatpush1.msra.mxu0 0.0
    %308 = vmatprep.subr.mxu0 0.0
    %309 = vmatpush1.msra.mxu0 0.0
    %310 = vmatprep.mubr.f32.mxu0 0.0
    %311 = vmatmul.mubr.f32.gmra.mrb[0].mxu0 %v223
    %v312 = vpop.f32.mrb[0].mxu0
    %v313 = vadd.f32 %v219, %v312
    %v314 = vpop.f32.mrb[0].mxu0
    %315 = vmatprep.mubr.f32.mxu0 0.0
    %316 = vmatmul.mubr.f32.gmra.mrb[0].mxu0 %v226
    %v317 = vpop.f32.mrb[0].mxu0
    %v318 = vadd.f32 %v219, %v317
    %v319 = vpop.f32.mrb[0].mxu0
    %320 = vmatprep.mubr.f32.mxu0 0.0
    %321 = vmatmul.mubr.f32.gmra.mrb[0].mxu0 %v229
    %v322 = vpop.f32.mrb[0].mxu0
    %v323 = vadd.f32 %v219, %v322
    %v324 = vpop.f32.mrb[0].mxu0
    %325 = vmatprep.mubr.f32.mxu0 0.0
    %326 = vmatmul.mubr.f32.gmra.mrb[0].mxu0 %v232
    %v327 = vpop.f32.mrb[0].mxu0
    %v328 = vadd.f32 %v219, %v327
    %v329 = vpop.f32.mrb[0].mxu0
    %330 = vmatprep.mubr.f32.mxu0 0.0
    %331 = vmatmul.mubr.f32.gmra.mrb[0].mxu0 %v235
    %v332 = vpop.f32.mrb[0].mxu0
    %v333 = vadd.f32 %v219, %v332
    %v334 = vpop.f32.mrb[0].mxu0
    %335 = vmatprep.mubr.f32.mxu0 0.0
    %336 = vmatmul.mubr.f32.gmra.mrb[0].mxu0 %v238
    %v337 = vpop.f32.mrb[0].mxu0
    %v338 = vadd.f32 %v219, %v337
    %v339 = vpop.f32.mrb[0].mxu0
    %340 = vmatprep.mubr.f32.mxu0 0.0
    %341 = vmatmul.mubr.f32.gmra.mrb[0].mxu0 %v241
    %v342 = vpop.f32.mrb[0].mxu0
    %v343 = vadd.f32 %v219, %v342
    %v344 = vpop.f32.mrb[0].mxu0
    %345 = vmatprep.mubr.f32.mxu0 0.0
    %346 = vmatmul.mubr.f32.gmra.mrb[0].mxu0 %v244
    %v347 = vpop.f32.mrb[0].mxu0
    %v348 = vadd.f32 %v219, %v347
    %v349 = vpop.f32.mrb[0].mxu0
    %350 = vdwg.mxu0
    %351 = vst [vmem:[#allocation2] sm:$0xff] %v313
    %352 = vst [vmem:[#allocation2 + $0x8] sm:$0xff] %v318
    %353 = vst [vmem:[#allocation2 + $0x10] sm:$0xff] %v323
    %354 = vst [vmem:[#allocation2 + $0x18] sm:$0xff] %v328
    %355 = vst [vmem:[#allocation2 + $0x20] sm:$0xff] %v333
    %356 = vst [vmem:[#allocation2 + $0x28] sm:$0xff] %v338
    %357 = vst [vmem:[#allocation2 + $0x30] sm:$0xff] %v343
    %358 = vst [vmem:[#allocation2 + $0x38] sm:$0xff] %v348
    %v359 = vld [vmem:[%s5] sm:$0xff]
    %v360 = vld [vmem:[%s5 + $0x8] sm:$0xff]
    %v361 = vld [vmem:[%s5 + $0x10] sm:$0xff]
    %v362 = vld [vmem:[%s5 + $0x18] sm:$0xff]
    %v363 = vld [vmem:[%s7] sm:$0x1]
    %v364 = vld [vmem:[#allocation2] sm:$0xff]
    %vm365 = vcmask 261120
    %v367 = vsel %vm365, %v211, 0
    %369 = vmatprep.subr.mxu0 0.0
    %370 = vmatpush1.msra.mxu0 %v359
    %371 = vmatprep.subr.mxu0 0.0
    %372 = vmatpush1.msra.mxu0 %v360
    %373 = vmatprep.subr.mxu0 0.0
    %374 = vmatpush1.msra.mxu0 %v361
    %375 = vmatprep.subr.mxu0 0.0
    %376 = vmatpush1.msra.mxu0 %v362
    %377 = vmatprep.subr.mxu0 0.0
    %378 = vmatpush1.msra.mxu0 0.0
    %379 = vmatprep.subr.mxu0 0.0
    %380 = vmatpush1.msra.mxu0 0.0
    %381 = vmatprep.subr.mxu0 0.0
    %382 = vmatpush1.msra.mxu0 0.0
    %383 = vmatprep.subr.mxu0 0.0
    %384 = vmatpush1.msra.mxu0 0.0
    %385 = vmatprep.subr.mxu0 0.0
    %386 = vmatpush1.msra.mxu0 0.0
    %387 = vmatprep.subr.mxu0 0.0
    %388 = vmatpush1.msra.mxu0 0.0
    %389 = vmatprep.subr.mxu0 0.0
    %390 = vmatpush1.msra.mxu0 0.0
    %391 = vmatprep.subr.mxu0 0.0
    %392 = vmatpush1.msra.mxu0 0.0
    %393 = vmatprep.subr.mxu0 0.0
    %394 = vmatpush1.msra.mxu0 0.0
    %395 = vmatprep.subr.mxu0 0.0
    %396 = vmatpush1.msra.mxu0 0.0
    %397 = vmatprep.subr.mxu0 0.0
    %398 = vmatpush1.msra.mxu0 0.0
    %399 = vmatprep.subr.mxu0 0.0
    %400 = vmatpush1.msra.mxu0 0.0
    %401 = vmatprep.subr.mxu0 0.0
    %402 = vmatpush1.msra.mxu0 0.0
    %403 = vmatprep.subr.mxu0 0.0
    %404 = vmatpush1.msra.mxu0 0.0
    %405 = vmatprep.subr.mxu0 0.0
    %406 = vmatpush1.msra.mxu0 0.0
    %407 = vmatprep.subr.mxu0 0.0
    %408 = vmatpush1.msra.mxu0 0.0
    %409 = vmatprep.subr.mxu0 0.0
    %410 = vmatpush1.msra.mxu0 0.0
    %411 = vmatprep.subr.mxu0 0.0
    %412 = vmatpush1.msra.mxu0 0.0
    %413 = vmatprep.subr.mxu0 0.0
    %414 = vmatpush1.msra.mxu0 0.0
    %415 = vmatprep.subr.mxu0 0.0
    %416 = vmatpush1.msra.mxu0 0.0
    %417 = vmatprep.subr.mxu0 0.0
    %418 = vmatpush1.msra.mxu0 0.0
    %419 = vmatprep.subr.mxu0 0.0
    %420 = vmatpush1.msra.mxu0 0.0
    %421 = vmatprep.subr.mxu0 0.0
    %422 = vmatpush1.msra.mxu0 0.0
    %423 = vmatprep.subr.mxu0 0.0
    %424 = vmatpush1.msra.mxu0 0.0
    %425 = vmatprep.subr.mxu0 0.0
    %426 = vmatpush1.msra.mxu0 0.0
    %427 = vmatprep.subr.mxu0 0.0
    %428 = vmatpush1.msra.mxu0 0.0
    %429 = vmatprep.subr.mxu0 0.0
    %430 = vmatpush1.msra.mxu0 0.0
    %431 = vmatprep.subr.mxu0 0.0
    %432 = vmatpush1.msra.mxu0 0.0
    %433 = vmatprep.mubr.f32.mxu0 0.0
    %434 = vmatmul.mubr.f32.gmra.mrb[0].mxu0 %v367
    %v435 = vpop.f32.mrb[0].mxu0
    %v436 = vadd.f32 0.0, %v435
    %v437 = vpop.f32.mrb[0].mxu0
    %438 = vdwg.mxu0
    %v439 = vadd.f32 %v364, %v436
    %v440 = vxor.u32 %v439, 2147483648
    %v441 = vmul.f32 %v440, 1.442695
    %v442 = vpow.pop %v441
    %v443 = vadd.f32 %v442, 1.0
    %v444 = vrcp.pop %v443
    %v445 = vmul.f32 1.0, %v444
    %v447 = vlaneseq
    %v448 = vshrl.u32 %v447, 7
    %v449 = vsub.s32 0, %v448
    %v450 = vrot.slane %v363, %v449
    %451 = vrot.lane.b32.xlu0 %v450, 64
    %v452 = vpop.permute.xlu0 %451
    %v454 = vadd.f32 %v436, %v452
    %456 = vrot.lane.b32.xlu0 %v454, 64
    %v457 = vpop.permute.xlu0 %456
    %v459 = vmul.f32 %v445, %v457
    %461 = vrot.lane.b32.xlu0 %v459, 64
    %v462 = vpop.permute.xlu0 %461
    %v464 = vadd.f32 %v364, %v462
    %v465 = vtanh.pop %v464
    %467 = vrot.lane.b32.xlu0 %v465, 64
    %v468 = vpop.permute.xlu0 %467
    %v470 = vsub.f32 %v211, %v468
    %472 = vrot.lane.b32.xlu0 %v470, 32
    %v473 = vpop.permute.xlu0 %472
    %v475 = vmul.f32 %v445, %v473
    %477 = vrot.lane.b32.xlu0 %v475, 32
    %v478 = vpop.permute.xlu0 %477
    %v480 = vadd.f32 %v465, %v478
    %482 = vrot.lane.b32.xlu0 %v480, 64
    %v483 = vpop.permute.xlu0 %482
    %485 = vst.msk [vmem:[#allocation3] sm:$0xff] %vm365, %v483
    %v486 = vld [vmem:[#allocation2 + $0x8] sm:$0xff]
    %v487 = vsel %vm365, %v483, 0
    %489 = vmatprep.subr.mxu0 0.0
    %490 = vmatpush1.msra.mxu0 %v359
    %491 = vmatprep.subr.mxu0 0.0
    %492 = vmatpush1.msra.mxu0 %v360
    %493 = vmatprep.subr.mxu0 0.0
    %494 = vmatpush1.msra.mxu0 %v361
    %495 = vmatprep.subr.mxu0 0.0
    %496 = vmatpush1.msra.mxu0 %v362
    %497 = vmatprep.subr.mxu0 0.0
    %498 = vmatpush1.msra.mxu0 0.0
    %499 = vmatprep.subr.mxu0 0.0
    %500 = vmatpush1.msra.mxu0 0.0
    %501 = vmatprep.subr.mxu0 0.0
    %502 = vmatpush1.msra.mxu0 0.0
    %503 = vmatprep.subr.mxu0 0.0
    %504 = vmatpush1.msra.mxu0 0.0
    %505 = vmatprep.subr.mxu0 0.0
    %506 = vmatpush1.msra.mxu0 0.0
    %507 = vmatprep.subr.mxu0 0.0
    %508 = vmatpush1.msra.mxu0 0.0
    %509 = vmatprep.subr.mxu0 0.0
    %510 = vmatpush1.msra.mxu0 0.0
    %511 = vmatprep.subr.mxu0 0.0
    %512 = vmatpush1.msra.mxu0 0.0
    %513 = vmatprep.subr.mxu0 0.0
    %514 = vmatpush1.msra.mxu0 0.0
    %515 = vmatprep.subr.mxu0 0.0
    %516 = vmatpush1.msra.mxu0 0.0
    %517 = vmatprep.subr.mxu0 0.0
    %518 = vmatpush1.msra.mxu0 0.0
    %519 = vmatprep.subr.mxu0 0.0
    %520 = vmatpush1.msra.mxu0 0.0
    %521 = vmatprep.subr.mxu0 0.0
    %522 = vmatpush1.msra.mxu0 0.0
    %523 = vmatprep.subr.mxu0 0.0
    %524 = vmatpush1.msra.mxu0 0.0
    %525 = vmatprep.subr.mxu0 0.0
    %526 = vmatpush1.msra.mxu0 0.0
    %527 = vmatprep.subr.mxu0 0.0
    %528 = vmatpush1.msra.mxu0 0.0
    %529 = vmatprep.subr.mxu0 0.0
    %530 = vmatpush1.msra.mxu0 0.0
    %531 = vmatprep.subr.mxu0 0.0
    %532 = vmatpush1.msra.mxu0 0.0
    %533 = vmatprep.subr.mxu0 0.0
    %534 = vmatpush1.msra.mxu0 0.0
    %535 = vmatprep.subr.mxu0 0.0
    %536 = vmatpush1.msra.mxu0 0.0
    %537 = vmatprep.subr.mxu0 0.0
    %538 = vmatpush1.msra.mxu0 0.0
    %539 = vmatprep.subr.mxu0 0.0
    %540 = vmatpush1.msra.mxu0 0.0
    %541 = vmatprep.subr.mxu0 0.0
    %542 = vmatpush1.msra.mxu0 0.0
    %543 = vmatprep.subr.mxu0 0.0
    %544 = vmatpush1.msra.mxu0 0.0
    %545 = vmatprep.subr.mxu0 0.0
    %546 = vmatpush1.msra.mxu0 0.0
    %547 = vmatprep.subr.mxu0 0.0
    %548 = vmatpush1.msra.mxu0 0.0
    %549 = vmatprep.subr.mxu0 0.0
    %550 = vmatpush1.msra.mxu0 0.0
    %551 = vmatprep.subr.mxu0 0.0
    %552 = vmatpush1.msra.mxu0 0.0
    %553 = vmatprep.mubr.f32.mxu0 0.0
    %554 = vmatmul.mubr.f32.gmra.mrb[0].mxu0 %v487
    %v555 = vpop.f32.mrb[0].mxu0
    %v556 = vadd.f32 0.0, %v555
    %v557 = vpop.f32.mrb[0].mxu0
    %558 = vdwg.mxu0
    %v559 = vadd.f32 %v486, %v556
    %v560 = vxor.u32 %v559, 2147483648
    %v561 = vmul.f32 %v560, 1.442695
    %v562 = vpow.pop %v561
    %v563 = vadd.f32 %v562, 1.0
    %v564 = vrcp.pop %v563
    %v565 = vmul.f32 1.0, %v564
    %v566 = vadd.f32 %v556, %v452
    %568 = vrot.lane.b32.xlu0 %v566, 64
    %v569 = vpop.permute.xlu0 %568
    %v571 = vmul.f32 %v565, %v569
    %573 = vrot.lane.b32.xlu0 %v571, 64
    %v574 = vpop.permute.xlu0 %573
    %v576 = vadd.f32 %v486, %v574
    %v577 = vtanh.pop %v576
    %v578 = vsub.f32 %v480, %v577
    %580 = vrot.lane.b32.xlu0 %v578, 96
    %v581 = vpop.permute.xlu0 %580
    %v583 = vmul.f32 %v565, %v581
    %585 = vrot.lane.b32.xlu0 %v583, 32
    %v586 = vpop.permute.xlu0 %585
    %v588 = vadd.f32 %v577, %v586
    %590 = vrot.lane.b32.xlu0 %v588, 64
    %v591 = vpop.permute.xlu0 %590
    %593 = vst.msk [vmem:[#allocation3 + $0x8] sm:$0xff] %vm365, %v591
    %v594 = vld [vmem:[#allocation2 + $0x10] sm:$0xff]
    %v595 = vsel %vm365, %v591, 0
    %597 = vmatprep.subr.mxu0 0.0
    %598 = vmatpush1.msra.mxu0 %v359
    %599 = vmatprep.subr.mxu0 0.0
    %600 = vmatpush1.msra.mxu0 %v360
    %601 = vmatprep.subr.mxu0 0.0
    %602 = vmatpush1.msra.mxu0 %v361
    %603 = vmatprep.subr.mxu0 0.0
    %604 = vmatpush1.msra.mxu0 %v362
    %605 = vmatprep.subr.mxu0 0.0
    %606 = vmatpush1.msra.mxu0 0.0
    %607 = vmatprep.subr.mxu0 0.0
    %608 = vmatpush1.msra.mxu0 0.0
    %609 = vmatprep.subr.mxu0 0.0
    %610 = vmatpush1.msra.mxu0 0.0
    %611 = vmatprep.subr.mxu0 0.0
    %612 = vmatpush1.msra.mxu0 0.0
    %613 = vmatprep.subr.mxu0 0.0
    %614 = vmatpush1.msra.mxu0 0.0
    %615 = vmatprep.subr.mxu0 0.0
    %616 = vmatpush1.msra.mxu0 0.0
    %617 = vmatprep.subr.mxu0 0.0
    %618 = vmatpush1.msra.mxu0 0.0
    %619 = vmatprep.subr.mxu0 0.0
    %620 = vmatpush1.msra.mxu0 0.0
    %621 = vmatprep.subr.mxu0 0.0
    %622 = vmatpush1.msra.mxu0 0.0
    %623 = vmatprep.subr.mxu0 0.0
    %624 = vmatpush1.msra.mxu0 0.0
    %625 = vmatprep.subr.mxu0 0.0
    %626 = vmatpush1.msra.mxu0 0.0
    %627 = vmatprep.subr.mxu0 0.0
    %628 = vmatpush1.msra.mxu0 0.0
    %629 = vmatprep.subr.mxu0 0.0
    %630 = vmatpush1.msra.mxu0 0.0
    %631 = vmatprep.subr.mxu0 0.0
    %632 = vmatpush1.msra.mxu0 0.0
    %633 = vmatprep.subr.mxu0 0.0
    %634 = vmatpush1.msra.mxu0 0.0
    %635 = vmatprep.subr.mxu0 0.0
    %636 = vmatpush1.msra.mxu0 0.0
    %637 = vmatprep.subr.mxu0 0.0
    %638 = vmatpush1.msra.mxu0 0.0
    %639 = vmatprep.subr.mxu0 0.0
    %640 = vmatpush1.msra.mxu0 0.0
    %641 = vmatprep.subr.mxu0 0.0
    %642 = vmatpush1.msra.mxu0 0.0
    %643 = vmatprep.subr.mxu0 0.0
    %644 = vmatpush1.msra.mxu0 0.0
    %645 = vmatprep.subr.mxu0 0.0
    %646 = vmatpush1.msra.mxu0 0.0
    %647 = vmatprep.subr.mxu0 0.0
    %648 = vmatpush1.msra.mxu0 0.0
    %649 = vmatprep.subr.mxu0 0.0
    %650 = vmatpush1.msra.mxu0 0.0
    %651 = vmatprep.subr.mxu0 0.0
    %652 = vmatpush1.msra.mxu0 0.0
    %653 = vmatprep.subr.mxu0 0.0
    %654 = vmatpush1.msra.mxu0 0.0
    %655 = vmatprep.subr.mxu0 0.0
    %656 = vmatpush1.msra.mxu0 0.0
    %657 = vmatprep.subr.mxu0 0.0
    %658 = vmatpush1.msra.mxu0 0.0
    %659 = vmatprep.subr.mxu0 0.0
    %660 = vmatpush1.msra.mxu0 0.0
    %661 = vmatprep.mubr.f32.mxu0 0.0
    %662 = vmatmul.mubr.f32.gmra.mrb[0].mxu0 %v595
    %v663 = vpop.f32.mrb[0].mxu0
    %v664 = vadd.f32 0.0, %v663
    %v665 = vpop.f32.mrb[0].mxu0
    %666 = vdwg.mxu0
    %v667 = vadd.f32 %v594, %v664
    %v668 = vxor.u32 %v667, 2147483648
    %v669 = vmul.f32 %v668, 1.442695
    %v670 = vpow.pop %v669
    %v671 = vadd.f32 %v670, 1.0
    %v672 = vrcp.pop %v671
    %v673 = vmul.f32 1.0, %v672
    %v674 = vadd.f32 %v664, %v452
    %676 = vrot.lane.b32.xlu0 %v674, 64
    %v677 = vpop.permute.xlu0 %676
    %v679 = vmul.f32 %v673, %v677
    %681 = vrot.lane.b32.xlu0 %v679, 64
    %v682 = vpop.permute.xlu0 %681
    %v684 = vadd.f32 %v594, %v682
    %v685 = vtanh.pop %v684
    %v686 = vsub.f32 %v588, %v685
    %688 = vrot.lane.b32.xlu0 %v686, 96
    %v689 = vpop.permute.xlu0 %688
    %v691 = vmul.f32 %v673, %v689
    %693 = vrot.lane.b32.xlu0 %v691, 32
    %v694 = vpop.permute.xlu0 %693
    %v696 = vadd.f32 %v685, %v694
    %698 = vrot.lane.b32.xlu0 %v696, 64
    %v699 = vpop.permute.xlu0 %698
    %701 = vst.msk [vmem:[#allocation3 + $0x10] sm:$0xff] %vm365, %v699
    %v702 = vld [vmem:[#allocation2 + $0x18] sm:$0xff]
    %v703 = vsel %vm365, %v699, 0
    %705 = vmatprep.subr.mxu0 0.0
    %706 = vmatpush1.msra.mxu0 %v359
    %707 = vmatprep.subr.mxu0 0.0
    %708 = vmatpush1.msra.mxu0 %v360
    %709 = vmatprep.subr.mxu0 0.0
    %710 = vmatpush1.msra.mxu0 %v361
    %711 = vmatprep.subr.mxu0 0.0
    %712 = vmatpush1.msra.mxu0 %v362
    %713 = vmatprep.subr.mxu0 0.0
    %714 = vmatpush1.msra.mxu0 0.0
    %715 = vmatprep.subr.mxu0 0.0
    %716 = vmatpush1.msra.mxu0 0.0
    %717 = vmatprep.subr.mxu0 0.0
    %718 = vmatpush1.msra.mxu0 0.0
    %719 = vmatprep.subr.mxu0 0.0
    %720 = vmatpush1.msra.mxu0 0.0
    %721 = vmatprep.subr.mxu0 0.0
    %722 = vmatpush1.msra.mxu0 0.0
    %723 = vmatprep.subr.mxu0 0.0
    %724 = vmatpush1.msra.mxu0 0.0
    %725 = vmatprep.subr.mxu0 0.0
    %726 = vmatpush1.msra.mxu0 0.0
    %727 = vmatprep.subr.mxu0 0.0
    %728 = vmatpush1.msra.mxu0 0.0
    %729 = vmatprep.subr.mxu0 0.0
    %730 = vmatpush1.msra.mxu0 0.0
    %731 = vmatprep.subr.mxu0 0.0
    %732 = vmatpush1.msra.mxu0 0.0
    %733 = vmatprep.subr.mxu0 0.0
    %734 = vmatpush1.msra.mxu0 0.0
    %735 = vmatprep.subr.mxu0 0.0
    %736 = vmatpush1.msra.mxu0 0.0
    %737 = vmatprep.subr.mxu0 0.0
    %738 = vmatpush1.msra.mxu0 0.0
    %739 = vmatprep.subr.mxu0 0.0
    %740 = vmatpush1.msra.mxu0 0.0
    %741 = vmatprep.subr.mxu0 0.0
    %742 = vmatpush1.msra.mxu0 0.0
    %743 = vmatprep.subr.mxu0 0.0
    %744 = vmatpush1.msra.mxu0 0.0
    %745 = vmatprep.subr.mxu0 0.0
    %746 = vmatpush1.msra.mxu0 0.0
    %747 = vmatprep.subr.mxu0 0.0
    %748 = vmatpush1.msra.mxu0 0.0
    %749 = vmatprep.subr.mxu0 0.0
    %750 = vmatpush1.msra.mxu0 0.0
    %751 = vmatprep.subr.mxu0 0.0
    %752 = vmatpush1.msra.mxu0 0.0
    %753 = vmatprep.subr.mxu0 0.0
    %754 = vmatpush1.msra.mxu0 0.0
    %755 = vmatprep.subr.mxu0 0.0
    %756 = vmatpush1.msra.mxu0 0.0
    %757 = vmatprep.subr.mxu0 0.0
    %758 = vmatpush1.msra.mxu0 0.0
    %759 = vmatprep.subr.mxu0 0.0
    %760 = vmatpush1.msra.mxu0 0.0
    %761 = vmatprep.subr.mxu0 0.0
    %762 = vmatpush1.msra.mxu0 0.0
    %763 = vmatprep.subr.mxu0 0.0
    %764 = vmatpush1.msra.mxu0 0.0
    %765 = vmatprep.subr.mxu0 0.0
    %766 = vmatpush1.msra.mxu0 0.0
    %767 = vmatprep.subr.mxu0 0.0
    %768 = vmatpush1.msra.mxu0 0.0
    %769 = vmatprep.mubr.f32.mxu0 0.0
    %770 = vmatmul.mubr.f32.gmra.mrb[0].mxu0 %v703
    %v771 = vpop.f32.mrb[0].mxu0
    %v772 = vadd.f32 0.0, %v771
    %v773 = vpop.f32.mrb[0].mxu0
    %774 = vdwg.mxu0
    %v775 = vadd.f32 %v702, %v772
    %v776 = vxor.u32 %v775, 2147483648
    %v777 = vmul.f32 %v776, 1.442695
    %v778 = vpow.pop %v777
    %v779 = vadd.f32 %v778, 1.0
    %v780 = vrcp.pop %v779
    %v781 = vmul.f32 1.0, %v780
    %v782 = vadd.f32 %v772, %v452
    %784 = vrot.lane.b32.xlu0 %v782, 64
    %v785 = vpop.permute.xlu0 %784
    %v787 = vmul.f32 %v781, %v785
    %789 = vrot.lane.b32.xlu0 %v787, 64
    %v790 = vpop.permute.xlu0 %789
    %v792 = vadd.f32 %v702, %v790
    %v793 = vtanh.pop %v792
    %v794 = vsub.f32 %v696, %v793
    %796 = vrot.lane.b32.xlu0 %v794, 96
    %v797 = vpop.permute.xlu0 %796
    %v799 = vmul.f32 %v781, %v797
    %801 = vrot.lane.b32.xlu0 %v799, 32
    %v802 = vpop.permute.xlu0 %801
    %v804 = vadd.f32 %v793, %v802
    %806 = vrot.lane.b32.xlu0 %v804, 64
    %v807 = vpop.permute.xlu0 %806
    %809 = vst.msk [vmem:[#allocation3 + $0x18] sm:$0xff] %vm365, %v807
    %v810 = vld [vmem:[#allocation2 + $0x20] sm:$0xff]
    %v811 = vsel %vm365, %v807, 0
    %813 = vmatprep.subr.mxu0 0.0
    %814 = vmatpush1.msra.mxu0 %v359
    %815 = vmatprep.subr.mxu0 0.0
    %816 = vmatpush1.msra.mxu0 %v360
    %817 = vmatprep.subr.mxu0 0.0
    %818 = vmatpush1.msra.mxu0 %v361
    %819 = vmatprep.subr.mxu0 0.0
    %820 = vmatpush1.msra.mxu0 %v362
    %821 = vmatprep.subr.mxu0 0.0
    %822 = vmatpush1.msra.mxu0 0.0
    %823 = vmatprep.subr.mxu0 0.0
    %824 = vmatpush1.msra.mxu0 0.0
    %825 = vmatprep.subr.mxu0 0.0
    %826 = vmatpush1.msra.mxu0 0.0
    %827 = vmatprep.subr.mxu0 0.0
    %828 = vmatpush1.msra.mxu0 0.0
    %829 = vmatprep.subr.mxu0 0.0
    %830 = vmatpush1.msra.mxu0 0.0
    %831 = vmatprep.subr.mxu0 0.0
    %832 = vmatpush1.msra.mxu0 0.0
    %833 = vmatprep.subr.mxu0 0.0
    %834 = vmatpush1.msra.mxu0 0.0
    %835 = vmatprep.subr.mxu0 0.0
    %836 = vmatpush1.msra.mxu0 0.0
    %837 = vmatprep.subr.mxu0 0.0
    %838 = vmatpush1.msra.mxu0 0.0
    %839 = vmatprep.subr.mxu0 0.0
    %840 = vmatpush1.msra.mxu0 0.0
    %841 = vmatprep.subr.mxu0 0.0
    %842 = vmatpush1.msra.mxu0 0.0
    %843 = vmatprep.subr.mxu0 0.0
    %844 = vmatpush1.msra.mxu0 0.0
    %845 = vmatprep.subr.mxu0 0.0
    %846 = vmatpush1.msra.mxu0 0.0
    %847 = vmatprep.subr.mxu0 0.0
    %848 = vmatpush1.msra.mxu0 0.0
    %849 = vmatprep.subr.mxu0 0.0
    %850 = vmatpush1.msra.mxu0 0.0
    %851 = vmatprep.subr.mxu0 0.0
    %852 = vmatpush1.msra.mxu0 0.0
    %853 = vmatprep.subr.mxu0 0.0
    %854 = vmatpush1.msra.mxu0 0.0
    %855 = vmatprep.subr.mxu0 0.0
    %856 = vmatpush1.msra.mxu0 0.0
    %857 = vmatprep.subr.mxu0 0.0
    %858 = vmatpush1.msra.mxu0 0.0
    %859 = vmatprep.subr.mxu0 0.0
    %860 = vmatpush1.msra.mxu0 0.0
    %861 = vmatprep.subr.mxu0 0.0
    %862 = vmatpush1.msra.mxu0 0.0
    %863 = vmatprep.subr.mxu0 0.0
    %864 = vmatpush1.msra.mxu0 0.0
    %865 = vmatprep.subr.mxu0 0.0
    %866 = vmatpush1.msra.mxu0 0.0
    %867 = vmatprep.subr.mxu0 0.0
    %868 = vmatpush1.msra.mxu0 0.0
    %869 = vmatprep.subr.mxu0 0.0
    %870 = vmatpush1.msra.mxu0 0.0
    %871 = vmatprep.subr.mxu0 0.0
    %872 = vmatpush1.msra.mxu0 0.0
    %873 = vmatprep.subr.mxu0 0.0
    %874 = vmatpush1.msra.mxu0 0.0
    %875 = vmatprep.subr.mxu0 0.0
    %876 = vmatpush1.msra.mxu0 0.0
    %877 = vmatprep.mubr.f32.mxu0 0.0
    %878 = vmatmul.mubr.f32.gmra.mrb[0].mxu0 %v811
    %v879 = vpop.f32.mrb[0].mxu0
    %v880 = vadd.f32 0.0, %v879
    %v881 = vpop.f32.mrb[0].mxu0
    %882 = vdwg.mxu0
    %v883 = vadd.f32 %v810, %v880
    %v884 = vxor.u32 %v883, 2147483648
    %v885 = vmul.f32 %v884, 1.442695
    %v886 = vpow.pop %v885
    %v887 = vadd.f32 %v886, 1.0
    %v888 = vrcp.pop %v887
    %v889 = vmul.f32 1.0, %v888
    %v890 = vadd.f32 %v880, %v452
    %892 = vrot.lane.b32.xlu0 %v890, 64
    %v893 = vpop.permute.xlu0 %892
    %v895 = vmul.f32 %v889, %v893
    %897 = vrot.lane.b32.xlu0 %v895, 64
    %v898 = vpop.permute.xlu0 %897
    %v900 = vadd.f32 %v810, %v898
    %v901 = vtanh.pop %v900
    %v902 = vsub.f32 %v804, %v901
    %904 = vrot.lane.b32.xlu0 %v902, 96
    %v905 = vpop.permute.xlu0 %904
    %v907 = vmul.f32 %v889, %v905
    %909 = vrot.lane.b32.xlu0 %v907, 32
    %v910 = vpop.permute.xlu0 %909
    %v912 = vadd.f32 %v901, %v910
    %914 = vrot.lane.b32.xlu0 %v912, 64
    %v915 = vpop.permute.xlu0 %914
    %917 = vst.msk [vmem:[#allocation3 + $0x20] sm:$0xff] %vm365, %v915
    %v918 = vld [vmem:[#allocation2 + $0x28] sm:$0xff]
    %v919 = vsel %vm365, %v915, 0
    %921 = vmatprep.subr.mxu0 0.0
    %922 = vmatpush1.msra.mxu0 %v359
    %923 = vmatprep.subr.mxu0 0.0
    %924 = vmatpush1.msra.mxu0 %v360
    %925 = vmatprep.subr.mxu0 0.0
    %926 = vmatpush1.msra.mxu0 %v361
    %927 = vmatprep.subr.mxu0 0.0
    %928 = vmatpush1.msra.mxu0 %v362
    %929 = vmatprep.subr.mxu0 0.0
    %930 = vmatpush1.msra.mxu0 0.0
    %931 = vmatprep.subr.mxu0 0.0
    %932 = vmatpush1.msra.mxu0 0.0
    %933 = vmatprep.subr.mxu0 0.0
    %934 = vmatpush1.msra.mxu0 0.0
    %935 = vmatprep.subr.mxu0 0.0
    %936 = vmatpush1.msra.mxu0 0.0
    %937 = vmatprep.subr.mxu0 0.0
    %938 = vmatpush1.msra.mxu0 0.0
    %939 = vmatprep.subr.mxu0 0.0
    %940 = vmatpush1.msra.mxu0 0.0
    %941 = vmatprep.subr.mxu0 0.0
    %942 = vmatpush1.msra.mxu0 0.0
    %943 = vmatprep.subr.mxu0 0.0
    %944 = vmatpush1.msra.mxu0 0.0
    %945 = vmatprep.subr.mxu0 0.0
    %946 = vmatpush1.msra.mxu0 0.0
    %947 = vmatprep.subr.mxu0 0.0
    %948 = vmatpush1.msra.mxu0 0.0
    %949 = vmatprep.subr.mxu0 0.0
    %950 = vmatpush1.msra.mxu0 0.0
    %951 = vmatprep.subr.mxu0 0.0
    %952 = vmatpush1.msra.mxu0 0.0
    %953 = vmatprep.subr.mxu0 0.0
    %954 = vmatpush1.msra.mxu0 0.0
    %955 = vmatprep.subr.mxu0 0.0
    %956 = vmatpush1.msra.mxu0 0.0
    %957 = vmatprep.subr.mxu0 0.0
    %958 = vmatpush1.msra.mxu0 0.0
    %959 = vmatprep.subr.mxu0 0.0
    %960 = vmatpush1.msra.mxu0 0.0
    %961 = vmatprep.subr.mxu0 0.0
    %962 = vmatpush1.msra.mxu0 0.0
    %963 = vmatprep.subr.mxu0 0.0
    %964 = vmatpush1.msra.mxu0 0.0
    %965 = vmatprep.subr.mxu0 0.0
    %966 = vmatpush1.msra.mxu0 0.0
    %967 = vmatprep.subr.mxu0 0.0
    %968 = vmatpush1.msra.mxu0 0.0
    %969 = vmatprep.subr.mxu0 0.0
    %970 = vmatpush1.msra.mxu0 0.0
    %971 = vmatprep.subr.mxu0 0.0
    %972 = vmatpush1.msra.mxu0 0.0
    %973 = vmatprep.subr.mxu0 0.0
    %974 = vmatpush1.msra.mxu0 0.0
    %975 = vmatprep.subr.mxu0 0.0
    %976 = vmatpush1.msra.mxu0 0.0
    %977 = vmatprep.subr.mxu0 0.0
    %978 = vmatpush1.msra.mxu0 0.0
    %979 = vmatprep.subr.mxu0 0.0
    %980 = vmatpush1.msra.mxu0 0.0
    %981 = vmatprep.subr.mxu0 0.0
    %982 = vmatpush1.msra.mxu0 0.0
    %983 = vmatprep.subr.mxu0 0.0
    %984 = vmatpush1.msra.mxu0 0.0
    %985 = vmatprep.mubr.f32.mxu0 0.0
    %986 = vmatmul.mubr.f32.gmra.mrb[0].mxu0 %v919
    %v987 = vpop.f32.mrb[0].mxu0
    %v988 = vadd.f32 0.0, %v987
    %v989 = vpop.f32.mrb[0].mxu0
    %990 = vdwg.mxu0
    %v991 = vadd.f32 %v918, %v988
    %v992 = vxor.u32 %v991, 2147483648
    %v993 = vmul.f32 %v992, 1.442695
    %v994 = vpow.pop %v993
    %v995 = vadd.f32 %v994, 1.0
    %v996 = vrcp.pop %v995
    %v997 = vmul.f32 1.0, %v996
    %v998 = vadd.f32 %v988, %v452
    %1000 = vrot.lane.b32.xlu0 %v998, 64
    %v1001 = vpop.permute.xlu0 %1000
    %v1003 = vmul.f32 %v997, %v1001
    %1005 = vrot.lane.b32.xlu0 %v1003, 64
    %v1006 = vpop.permute.xlu0 %1005
    %v1008 = vadd.f32 %v918, %v1006
    %v1009 = vtanh.pop %v1008
    %v1010 = vsub.f32 %v912, %v1009
    %1012 = vrot.lane.b32.xlu0 %v1010, 96
    %v1013 = vpop.permute.xlu0 %1012
    %v1015 = vmul.f32 %v997, %v1013
    %1017 = vrot.lane.b32.xlu0 %v1015, 32
    %v1018 = vpop.permute.xlu0 %1017
    %v1020 = vadd.f32 %v1009, %v1018
    %1022 = vrot.lane.b32.xlu0 %v1020, 64
    %v1023 = vpop.permute.xlu0 %1022
    %1025 = vst.msk [vmem:[#allocation3 + $0x28] sm:$0xff] %vm365, %v1023
    %v1026 = vld [vmem:[#allocation2 + $0x30] sm:$0xff]
    %v1027 = vsel %vm365, %v1023, 0
    %1029 = vmatprep.subr.mxu0 0.0
    %1030 = vmatpush1.msra.mxu0 %v359
    %1031 = vmatprep.subr.mxu0 0.0
    %1032 = vmatpush1.msra.mxu0 %v360
    %1033 = vmatprep.subr.mxu0 0.0
    %1034 = vmatpush1.msra.mxu0 %v361
    %1035 = vmatprep.subr.mxu0 0.0
    %1036 = vmatpush1.msra.mxu0 %v362
    %1037 = vmatprep.subr.mxu0 0.0
    %1038 = vmatpush1.msra.mxu0 0.0
    %1039 = vmatprep.subr.mxu0 0.0
    %1040 = vmatpush1.msra.mxu0 0.0
    %1041 = vmatprep.subr.mxu0 0.0
    %1042 = vmatpush1.msra.mxu0 0.0
    %1043 = vmatprep.subr.mxu0 0.0
    %1044 = vmatpush1.msra.mxu0 0.0
    %1045 = vmatprep.subr.mxu0 0.0
    %1046 = vmatpush1.msra.mxu0 0.0
    %1047 = vmatprep.subr.mxu0 0.0
    %1048 = vmatpush1.msra.mxu0 0.0
    %1049 = vmatprep.subr.mxu0 0.0
    %1050 = vmatpush1.msra.mxu0 0.0
    %1051 = vmatprep.subr.mxu0 0.0
    %1052 = vmatpush1.msra.mxu0 0.0
    %1053 = vmatprep.subr.mxu0 0.0
    %1054 = vmatpush1.msra.mxu0 0.0
    %1055 = vmatprep.subr.mxu0 0.0
    %1056 = vmatpush1.msra.mxu0 0.0
    %1057 = vmatprep.subr.mxu0 0.0
    %1058 = vmatpush1.msra.mxu0 0.0
    %1059 = vmatprep.subr.mxu0 0.0
    %1060 = vmatpush1.msra.mxu0 0.0
    %1061 = vmatprep.subr.mxu0 0.0
    %1062 = vmatpush1.msra.mxu0 0.0
    %1063 = vmatprep.subr.mxu0 0.0
    %1064 = vmatpush1.msra.mxu0 0.0
    %1065 = vmatprep.subr.mxu0 0.0
    %1066 = vmatpush1.msra.mxu0 0.0
    %1067 = vmatprep.subr.mxu0 0.0
    %1068 = vmatpush1.msra.mxu0 0.0
    %1069 = vmatprep.subr.mxu0 0.0
    %1070 = vmatpush1.msra.mxu0 0.0
    %1071 = vmatprep.subr.mxu0 0.0
    %1072 = vmatpush1.msra.mxu0 0.0
    %1073 = vmatprep.subr.mxu0 0.0
    %1074 = vmatpush1.msra.mxu0 0.0
    %1075 = vmatprep.subr.mxu0 0.0
    %1076 = vmatpush1.msra.mxu0 0.0
    %1077 = vmatprep.subr.mxu0 0.0
    %1078 = vmatpush1.msra.mxu0 0.0
    %1079 = vmatprep.subr.mxu0 0.0
    %1080 = vmatpush1.msra.mxu0 0.0
    %1081 = vmatprep.subr.mxu0 0.0
    %1082 = vmatpush1.msra.mxu0 0.0
    %1083 = vmatprep.subr.mxu0 0.0
    %1084 = vmatpush1.msra.mxu0 0.0
    %1085 = vmatprep.subr.mxu0 0.0
    %1086 = vmatpush1.msra.mxu0 0.0
    %1087 = vmatprep.subr.mxu0 0.0
    %1088 = vmatpush1.msra.mxu0 0.0
    %1089 = vmatprep.subr.mxu0 0.0
    %1090 = vmatpush1.msra.mxu0 0.0
    %1091 = vmatprep.subr.mxu0 0.0
    %1092 = vmatpush1.msra.mxu0 0.0
    %1093 = vmatprep.mubr.f32.mxu0 0.0
    %1094 = vmatmul.mubr.f32.gmra.mrb[0].mxu0 %v1027
    %v1095 = vpop.f32.mrb[0].mxu0
    %v1096 = vadd.f32 0.0, %v1095
    %v1097 = vpop.f32.mrb[0].mxu0
    %1098 = vdwg.mxu0
    %v1099 = vadd.f32 %v1026, %v1096
    %v1100 = vxor.u32 %v1099, 2147483648
    %v1101 = vmul.f32 %v1100, 1.442695
    %v1102 = vpow.pop %v1101
    %v1103 = vadd.f32 %v1102, 1.0
    %v1104 = vrcp.pop %v1103
    %v1105 = vmul.f32 1.0, %v1104
    %v1106 = vadd.f32 %v1096, %v452
    %1108 = vrot.lane.b32.xlu0 %v1106, 64
    %v1109 = vpop.permute.xlu0 %1108
    %v1111 = vmul.f32 %v1105, %v1109
    %1113 = vrot.lane.b32.xlu0 %v1111, 64
    %v1114 = vpop.permute.xlu0 %1113
    %v1116 = vadd.f32 %v1026, %v1114
    %v1117 = vtanh.pop %v1116
    %v1118 = vsub.f32 %v1020, %v1117
    %1120 = vrot.lane.b32.xlu0 %v1118, 96
    %v1121 = vpop.permute.xlu0 %1120
    %v1123 = vmul.f32 %v1105, %v1121
    %1125 = vrot.lane.b32.xlu0 %v1123, 32
    %v1126 = vpop.permute.xlu0 %1125
    %v1128 = vadd.f32 %v1117, %v1126
    %1130 = vrot.lane.b32.xlu0 %v1128, 64
    %v1131 = vpop.permute.xlu0 %1130
    %1133 = vst.msk [vmem:[#allocation3 + $0x30] sm:$0xff] %vm365, %v1131
    %v1134 = vld [vmem:[#allocation2 + $0x38] sm:$0xff]
    %v1135 = vsel %vm365, %v1131, 0
    %1137 = vmatprep.subr.mxu0 0.0
    %1138 = vmatpush1.msra.mxu0 %v359
    %1139 = vmatprep.subr.mxu0 0.0
    %1140 = vmatpush1.msra.mxu0 %v360
    %1141 = vmatprep.subr.mxu0 0.0
    %1142 = vmatpush1.msra.mxu0 %v361
    %1143 = vmatprep.subr.mxu0 0.0
    %1144 = vmatpush1.msra.mxu0 %v362
    %1145 = vmatprep.subr.mxu0 0.0
    %1146 = vmatpush1.msra.mxu0 0.0
    %1147 = vmatprep.subr.mxu0 0.0
    %1148 = vmatpush1.msra.mxu0 0.0
    %1149 = vmatprep.subr.mxu0 0.0
    %1150 = vmatpush1.msra.mxu0 0.0
    %1151 = vmatprep.subr.mxu0 0.0
    %1152 = vmatpush1.msra.mxu0 0.0
    %1153 = vmatprep.subr.mxu0 0.0
    %1154 = vmatpush1.msra.mxu0 0.0
    %1155 = vmatprep.subr.mxu0 0.0
    %1156 = vmatpush1.msra.mxu0 0.0
    %1157 = vmatprep.subr.mxu0 0.0
    %1158 = vmatpush1.msra.mxu0 0.0
    %1159 = vmatprep.subr.mxu0 0.0
    %1160 = vmatpush1.msra.mxu0 0.0
    %1161 = vmatprep.subr.mxu0 0.0
    %1162 = vmatpush1.msra.mxu0 0.0
    %1163 = vmatprep.subr.mxu0 0.0
    %1164 = vmatpush1.msra.mxu0 0.0
    %1165 = vmatprep.subr.mxu0 0.0
    %1166 = vmatpush1.msra.mxu0 0.0
    %1167 = vmatprep.subr.mxu0 0.0
    %1168 = vmatpush1.msra.mxu0 0.0
    %1169 = vmatprep.subr.mxu0 0.0
    %1170 = vmatpush1.msra.mxu0 0.0
    %1171 = vmatprep.subr.mxu0 0.0
    %1172 = vmatpush1.msra.mxu0 0.0
    %1173 = vmatprep.subr.mxu0 0.0
    %1174 = vmatpush1.msra.mxu0 0.0
    %1175 = vmatprep.subr.mxu0 0.0
    %1176 = vmatpush1.msra.mxu0 0.0
    %1177 = vmatprep.subr.mxu0 0.0
    %1178 = vmatpush1.msra.mxu0 0.0
    %1179 = vmatprep.subr.mxu0 0.0
    %1180 = vmatpush1.msra.mxu0 0.0
    %1181 = vmatprep.subr.mxu0 0.0
    %1182 = vmatpush1.msra.mxu0 0.0
    %1183 = vmatprep.subr.mxu0 0.0
    %1184 = vmatpush1.msra.mxu0 0.0
    %1185 = vmatprep.subr.mxu0 0.0
    %1186 = vmatpush1.msra.mxu0 0.0
    %1187 = vmatprep.subr.mxu0 0.0
    %1188 = vmatpush1.msra.mxu0 0.0
    %1189 = vmatprep.subr.mxu0 0.0
    %1190 = vmatpush1.msra.mxu0 0.0
    %1191 = vmatprep.subr.mxu0 0.0
    %1192 = vmatpush1.msra.mxu0 0.0
    %1193 = vmatprep.subr.mxu0 0.0
    %1194 = vmatpush1.msra.mxu0 0.0
    %1195 = vmatprep.subr.mxu0 0.0
    %1196 = vmatpush1.msra.mxu0 0.0
    %1197 = vmatprep.subr.mxu0 0.0
    %1198 = vmatpush1.msra.mxu0 0.0
    %1199 = vmatprep.subr.mxu0 0.0
    %1200 = vmatpush1.msra.mxu0 0.0
    %1201 = vmatprep.mubr.f32.mxu0 0.0
    %1202 = vmatmul.mubr.f32.gmra.mrb[0].mxu0 %v1135
    %v1203 = vpop.f32.mrb[0].mxu0
    %v1204 = vadd.f32 0.0, %v1203
    %v1205 = vpop.f32.mrb[0].mxu0
    %1206 = vdwg.mxu0
    %v1207 = vadd.f32 %v1134, %v1204
    %v1208 = vxor.u32 %v1207, 2147483648
    %v1209 = vmul.f32 %v1208, 1.442695
    %v1210 = vpow.pop %v1209
    %v1211 = vadd.f32 %v1210, 1.0
    %v1212 = vrcp.pop %v1211
    %v1213 = vmul.f32 1.0, %v1212
    %v1214 = vadd.f32 %v1204, %v452
    %1216 = vrot.lane.b32.xlu0 %v1214, 64
    %v1217 = vpop.permute.xlu0 %1216
    %v1219 = vmul.f32 %v1213, %v1217
    %1221 = vrot.lane.b32.xlu0 %v1219, 64
    %v1222 = vpop.permute.xlu0 %1221
    %v1224 = vadd.f32 %v1134, %v1222
    %v1225 = vtanh.pop %v1224
    %v1226 = vsub.f32 %v1128, %v1225
    %1228 = vrot.lane.b32.xlu0 %v1226, 96
    %v1229 = vpop.permute.xlu0 %1228
    %v1231 = vmul.f32 %v1213, %v1229
    %1233 = vrot.lane.b32.xlu0 %v1231, 32
    %v1234 = vpop.permute.xlu0 %1233
    %v1236 = vadd.f32 %v1225, %v1234
    %1238 = vrot.lane.b32.xlu0 %v1236, 64
    %v1239 = vpop.permute.xlu0 %1238
    %1241 = vst.msk [vmem:[#allocation3 + $0x38] sm:$0xff] %vm365, %v1239
    %v1242 = vld [vmem:[#allocation3] sm:$0xff]
    %v1243 = vld [vmem:[#allocation3 + $0x8] sm:$0xff]
    %v1244 = vld [vmem:[#allocation3 + $0x10] sm:$0xff]
    %v1245 = vld [vmem:[#allocation3 + $0x18] sm:$0xff]
    %v1246 = vld [vmem:[#allocation3 + $0x20] sm:$0xff]
    %v1247 = vld [vmem:[#allocation3 + $0x28] sm:$0xff]
    %v1248 = vld [vmem:[#allocation3 + $0x30] sm:$0xff]
    %v1249 = vld [vmem:[#allocation3 + $0x38] sm:$0xff]
    %s1250 = scalar_lea.vmem %s1, 8
    %v1251 = vld [vmem:[%s1250] sm:$0xff]
    %v1252 = vld [vmem:[%s8] sm:$0xff]
    %v1253 = vld [vmem:[%s8 + $0x8] sm:$0xff]
    %v1254 = vld [vmem:[%s8 + $0x10] sm:$0xff]
    %v1255 = vld [vmem:[%s8 + $0x18] sm:$0xff]
    %v1256 = vld [vmem:[%s10] sm:$0x1]
    %v1258 = vlaneseq
    %v1259 = vshrl.u32 %v1258, 7
    %v1260 = vsub.s32 0, %v1259
    %v1261 = vrot.slane %v1256, %v1260
    %v1264 = vsel %vm365, %v1242, 0
    %v1267 = vsel %vm365, %v1243, 0
    %v1270 = vsel %vm365, %v1244, 0
    %v1273 = vsel %vm365, %v1245, 0
    %v1276 = vsel %vm365, %v1246, 0
    %v1279 = vsel %vm365, %v1247, 0
    %v1282 = vsel %vm365, %v1248, 0
    %v1285 = vsel %vm365, %v1249, 0
    %1287 = vmatprep.subr.mxu0 0.0
    %1288 = vmatpush1.msra.mxu0 %v1252
    %1289 = vmatprep.subr.mxu0 0.0
    %1290 = vmatpush1.msra.mxu0 %v1253
    %1291 = vmatprep.subr.mxu0 0.0
    %1292 = vmatpush1.msra.mxu0 %v1254
    %1293 = vmatprep.subr.mxu0 0.0
    %1294 = vmatpush1.msra.mxu0 %v1255
    %1295 = vmatprep.subr.mxu0 0.0
    %1296 = vmatpush1.msra.mxu0 0.0
    %1297 = vmatprep.subr.mxu0 0.0
    %1298 = vmatpush1.msra.mxu0 0.0
    %1299 = vmatprep.subr.mxu0 0.0
    %1300 = vmatpush1.msra.mxu0 0.0
    %1301 = vmatprep.subr.mxu0 0.0
    %1302 = vmatpush1.msra.mxu0 0.0
    %1303 = vmatprep.subr.mxu0 0.0
    %1304 = vmatpush1.msra.mxu0 0.0
    %1305 = vmatprep.subr.mxu0 0.0
    %1306 = vmatpush1.msra.mxu0 0.0
    %1307 = vmatprep.subr.mxu0 0.0
    %1308 = vmatpush1.msra.mxu0 0.0
    %1309 = vmatprep.subr.mxu0 0.0
    %1310 = vmatpush1.msra.mxu0 0.0
    %1311 = vmatprep.subr.mxu0 0.0
    %1312 = vmatpush1.msra.mxu0 0.0
    %1313 = vmatprep.subr.mxu0 0.0
    %1314 = vmatpush1.msra.mxu0 0.0
    %1315 = vmatprep.subr.mxu0 0.0
    %1316 = vmatpush1.msra.mxu0 0.0
    %1317 = vmatprep.subr.mxu0 0.0
    %1318 = vmatpush1.msra.mxu0 0.0
    %1319 = vmatprep.subr.mxu0 0.0
    %1320 = vmatpush1.msra.mxu0 0.0
    %1321 = vmatprep.subr.mxu0 0.0
    %1322 = vmatpush1.msra.mxu0 0.0
    %1323 = vmatprep.subr.mxu0 0.0
    %1324 = vmatpush1.msra.mxu0 0.0
    %1325 = vmatprep.subr.mxu0 0.0
    %1326 = vmatpush1.msra.mxu0 0.0
    %1327 = vmatprep.subr.mxu0 0.0
    %1328 = vmatpush1.msra.mxu0 0.0
    %1329 = vmatprep.subr.mxu0 0.0
    %1330 = vmatpush1.msra.mxu0 0.0
    %1331 = vmatprep.subr.mxu0 0.0
    %1332 = vmatpush1.msra.mxu0 0.0
    %1333 = vmatprep.subr.mxu0 0.0
    %1334 = vmatpush1.msra.mxu0 0.0
    %1335 = vmatprep.subr.mxu0 0.0
    %1336 = vmatpush1.msra.mxu0 0.0
    %1337 = vmatprep.subr.mxu0 0.0
    %1338 = vmatpush1.msra.mxu0 0.0
    %1339 = vmatprep.subr.mxu0 0.0
    %1340 = vmatpush1.msra.mxu0 0.0
    %1341 = vmatprep.subr.mxu0 0.0
    %1342 = vmatpush1.msra.mxu0 0.0
    %1343 = vmatprep.subr.mxu0 0.0
    %1344 = vmatpush1.msra.mxu0 0.0
    %1345 = vmatprep.subr.mxu0 0.0
    %1346 = vmatpush1.msra.mxu0 0.0
    %1347 = vmatprep.subr.mxu0 0.0
    %1348 = vmatpush1.msra.mxu0 0.0
    %1349 = vmatprep.subr.mxu0 0.0
    %1350 = vmatpush1.msra.mxu0 0.0
    %1351 = vmatprep.mubr.f32.mxu0 0.0
    %1352 = vmatmul.mubr.f32.gmra.mrb[0].mxu0 %v1264
    %v1353 = vpop.f32.mrb[0].mxu0
    %v1354 = vadd.f32 %v1261, %v1353
    %v1355 = vpop.f32.mrb[0].mxu0
    %1356 = vmatprep.mubr.f32.mxu0 0.0
    %1357 = vmatmul.mubr.f32.gmra.mrb[0].mxu0 %v1267
    %v1358 = vpop.f32.mrb[0].mxu0
    %v1359 = vadd.f32 %v1261, %v1358
    %v1360 = vpop.f32.mrb[0].mxu0
    %1361 = vmatprep.mubr.f32.mxu0 0.0
    %1362 = vmatmul.mubr.f32.gmra.mrb[0].mxu0 %v1270
    %v1363 = vpop.f32.mrb[0].mxu0
    %v1364 = vadd.f32 %v1261, %v1363
    %v1365 = vpop.f32.mrb[0].mxu0
    %1366 = vmatprep.mubr.f32.mxu0 0.0
    %1367 = vmatmul.mubr.f32.gmra.mrb[0].mxu0 %v1273
    %v1368 = vpop.f32.mrb[0].mxu0
    %v1369 = vadd.f32 %v1261, %v1368
    %v1370 = vpop.f32.mrb[0].mxu0
    %1371 = vmatprep.mubr.f32.mxu0 0.0
    %1372 = vmatmul.mubr.f32.gmra.mrb[0].mxu0 %v1276
    %v1373 = vpop.f32.mrb[0].mxu0
    %v1374 = vadd.f32 %v1261, %v1373
    %v1375 = vpop.f32.mrb[0].mxu0
    %1376 = vmatprep.mubr.f32.mxu0 0.0
    %1377 = vmatmul.mubr.f32.gmra.mrb[0].mxu0 %v1279
    %v1378 = vpop.f32.mrb[0].mxu0
    %v1379 = vadd.f32 %v1261, %v1378
    %v1380 = vpop.f32.mrb[0].mxu0
    %1381 = vmatprep.mubr.f32.mxu0 0.0
    %1382 = vmatmul.mubr.f32.gmra.mrb[0].mxu0 %v1282
    %v1383 = vpop.f32.mrb[0].mxu0
    %v1384 = vadd.f32 %v1261, %v1383
    %v1385 = vpop.f32.mrb[0].mxu0
    %1386 = vmatprep.mubr.f32.mxu0 0.0
    %1387 = vmatmul.mubr.f32.gmra.mrb[0].mxu0 %v1285
    %v1388 = vpop.f32.mrb[0].mxu0
    %v1389 = vadd.f32 %v1261, %v1388
    %v1390 = vpop.f32.mrb[0].mxu0
    %1391 = vdwg.mxu0
    %1392 = vst [vmem:[#allocation2] sm:$0xff] %v1354
    %1393 = vst [vmem:[#allocation2 + $0x8] sm:$0xff] %v1359
    %1394 = vst [vmem:[#allocation2 + $0x10] sm:$0xff] %v1364
    %1395 = vst [vmem:[#allocation2 + $0x18] sm:$0xff] %v1369
    %1396 = vst [vmem:[#allocation2 + $0x20] sm:$0xff] %v1374
    %1397 = vst [vmem:[#allocation2 + $0x28] sm:$0xff] %v1379
    %1398 = vst [vmem:[#allocation2 + $0x30] sm:$0xff] %v1384
    %1399 = vst [vmem:[#allocation2 + $0x38] sm:$0xff] %v1389
    %v1400 = vld [vmem:[%s9] sm:$0xff]
    %v1401 = vld [vmem:[%s9 + $0x8] sm:$0xff]
    %v1402 = vld [vmem:[%s9 + $0x10] sm:$0xff]
    %v1403 = vld [vmem:[%s9 + $0x18] sm:$0xff]
    %v1404 = vld [vmem:[%s11] sm:$0x1]
    %v1405 = vld [vmem:[#allocation2] sm:$0xff]
    %v1407 = vsel %vm365, %v1251, 0
    %1409 = vmatprep.subr.mxu0 0.0
    %1410 = vmatpush1.msra.mxu0 %v1400
    %1411 = vmatprep.subr.mxu0 0.0
    %1412 = vmatpush1.msra.mxu0 %v1401
    %1413 = vmatprep.subr.mxu0 0.0
    %1414 = vmatpush1.msra.mxu0 %v1402
    %1415 = vmatprep.subr.mxu0 0.0
    %1416 = vmatpush1.msra.mxu0 %v1403
    %1417 = vmatprep.subr.mxu0 0.0
    %1418 = vmatpush1.msra.mxu0 0.0
    %1419 = vmatprep.subr.mxu0 0.0
    %1420 = vmatpush1.msra.mxu0 0.0
    %1421 = vmatprep.subr.mxu0 0.0
    %1422 = vmatpush1.msra.mxu0 0.0
    %1423 = vmatprep.subr.mxu0 0.0
    %1424 = vmatpush1.msra.mxu0 0.0
    %1425 = vmatprep.subr.mxu0 0.0
    %1426 = vmatpush1.msra.mxu0 0.0
    %1427 = vmatprep.subr.mxu0 0.0
    %1428 = vmatpush1.msra.mxu0 0.0
    %1429 = vmatprep.subr.mxu0 0.0
    %1430 = vmatpush1.msra.mxu0 0.0
    %1431 = vmatprep.subr.mxu0 0.0
    %1432 = vmatpush1.msra.mxu0 0.0
    %1433 = vmatprep.subr.mxu0 0.0
    %1434 = vmatpush1.msra.mxu0 0.0
    %1435 = vmatprep.subr.mxu0 0.0
    %1436 = vmatpush1.msra.mxu0 0.0
    %1437 = vmatprep.subr.mxu0 0.0
    %1438 = vmatpush1.msra.mxu0 0.0
    %1439 = vmatprep.subr.mxu0 0.0
    %1440 = vmatpush1.msra.mxu0 0.0
    %1441 = vmatprep.subr.mxu0 0.0
    %1442 = vmatpush1.msra.mxu0 0.0
    %1443 = vmatprep.subr.mxu0 0.0
    %1444 = vmatpush1.msra.mxu0 0.0
    %1445 = vmatprep.subr.mxu0 0.0
    %1446 = vmatpush1.msra.mxu0 0.0
    %1447 = vmatprep.subr.mxu0 0.0
    %1448 = vmatpush1.msra.mxu0 0.0
    %1449 = vmatprep.subr.mxu0 0.0
    %1450 = vmatpush1.msra.mxu0 0.0
    %1451 = vmatprep.subr.mxu0 0.0
    %1452 = vmatpush1.msra.mxu0 0.0
    %1453 = vmatprep.subr.mxu0 0.0
    %1454 = vmatpush1.msra.mxu0 0.0
    %1455 = vmatprep.subr.mxu0 0.0
    %1456 = vmatpush1.msra.mxu0 0.0
    %1457 = vmatprep.subr.mxu0 0.0
    %1458 = vmatpush1.msra.mxu0 0.0
    %1459 = vmatprep.subr.mxu0 0.0
    %1460 = vmatpush1.msra.mxu0 0.0
    %1461 = vmatprep.subr.mxu0 0.0
    %1462 = vmatpush1.msra.mxu0 0.0
    %1463 = vmatprep.subr.mxu0 0.0
    %1464 = vmatpush1.msra.mxu0 0.0
    %1465 = vmatprep.subr.mxu0 0.0
    %1466 = vmatpush1.msra.mxu0 0.0
    %1467 = vmatprep.subr.mxu0 0.0
    %1468 = vmatpush1.msra.mxu0 0.0
    %1469 = vmatprep.subr.mxu0 0.0
    %1470 = vmatpush1.msra.mxu0 0.0
    %1471 = vmatprep.subr.mxu0 0.0
    %1472 = vmatpush1.msra.mxu0 0.0
    %1473 = vmatprep.mubr.f32.mxu0 0.0
    %1474 = vmatmul.mubr.f32.gmra.mrb[0].mxu0 %v1407
    %v1475 = vpop.f32.mrb[0].mxu0
    %v1476 = vadd.f32 0.0, %v1475
    %v1477 = vpop.f32.mrb[0].mxu0
    %1478 = vdwg.mxu0
    %v1479 = vadd.f32 %v1405, %v1476
    %v1480 = vxor.u32 %v1479, 2147483648
    %v1481 = vmul.f32 %v1480, 1.442695
    %v1482 = vpow.pop %v1481
    %v1483 = vadd.f32 %v1482, 1.0
    %v1484 = vrcp.pop %v1483
    %v1485 = vmul.f32 1.0, %v1484
    %v1487 = vlaneseq
    %v1488 = vshrl.u32 %v1487, 7
    %v1489 = vsub.s32 0, %v1488
    %v1490 = vrot.slane %v1404, %v1489
    %1491 = vrot.lane.b32.xlu0 %v1490, 64
    %v1492 = vpop.permute.xlu0 %1491
    %v1494 = vadd.f32 %v1476, %v1492
    %1496 = vrot.lane.b32.xlu0 %v1494, 64
    %v1497 = vpop.permute.xlu0 %1496
    %v1499 = vmul.f32 %v1485, %v1497
    %1501 = vrot.lane.b32.xlu0 %v1499, 64
    %v1502 = vpop.permute.xlu0 %1501
    %v1504 = vadd.f32 %v1405, %v1502
    %v1505 = vtanh.pop %v1504
    %1507 = vrot.lane.b32.xlu0 %v1505, 64
    %v1508 = vpop.permute.xlu0 %1507
    %v1510 = vsub.f32 %v1251, %v1508
    %1512 = vrot.lane.b32.xlu0 %v1510, 32
    %v1513 = vpop.permute.xlu0 %1512
    %v1515 = vmul.f32 %v1485, %v1513
    %1517 = vrot.lane.b32.xlu0 %v1515, 32
    %v1518 = vpop.permute.xlu0 %1517
    %v1520 = vadd.f32 %v1505, %v1518
    %v1521 = vld [vmem:[#allocation2 + $0x8] sm:$0xff]
    %1523 = vrot.lane.b32.xlu0 %v1520, 64
    %v1524 = vpop.permute.xlu0 %1523
    %v1525 = vsel %vm365, %v1524, 0
    %1527 = vmatprep.subr.mxu0 0.0
    %1528 = vmatpush1.msra.mxu0 %v1400
    %1529 = vmatprep.subr.mxu0 0.0
    %1530 = vmatpush1.msra.mxu0 %v1401
    %1531 = vmatprep.subr.mxu0 0.0
    %1532 = vmatpush1.msra.mxu0 %v1402
    %1533 = vmatprep.subr.mxu0 0.0
    %1534 = vmatpush1.msra.mxu0 %v1403
    %1535 = vmatprep.subr.mxu0 0.0
    %1536 = vmatpush1.msra.mxu0 0.0
    %1537 = vmatprep.subr.mxu0 0.0
    %1538 = vmatpush1.msra.mxu0 0.0
    %1539 = vmatprep.subr.mxu0 0.0
    %1540 = vmatpush1.msra.mxu0 0.0
    %1541 = vmatprep.subr.mxu0 0.0
    %1542 = vmatpush1.msra.mxu0 0.0
    %1543 = vmatprep.subr.mxu0 0.0
    %1544 = vmatpush1.msra.mxu0 0.0
    %1545 = vmatprep.subr.mxu0 0.0
    %1546 = vmatpush1.msra.mxu0 0.0
    %1547 = vmatprep.subr.mxu0 0.0
    %1548 = vmatpush1.msra.mxu0 0.0
    %1549 = vmatprep.subr.mxu0 0.0
    %1550 = vmatpush1.msra.mxu0 0.0
    %1551 = vmatprep.subr.mxu0 0.0
    %1552 = vmatpush1.msra.mxu0 0.0
    %1553 = vmatprep.subr.mxu0 0.0
    %1554 = vmatpush1.msra.mxu0 0.0
    %1555 = vmatprep.subr.mxu0 0.0
    %1556 = vmatpush1.msra.mxu0 0.0
    %1557 = vmatprep.subr.mxu0 0.0
    %1558 = vmatpush1.msra.mxu0 0.0
    %1559 = vmatprep.subr.mxu0 0.0
    %1560 = vmatpush1.msra.mxu0 0.0
    %1561 = vmatprep.subr.mxu0 0.0
    %1562 = vmatpush1.msra.mxu0 0.0
    %1563 = vmatprep.subr.mxu0 0.0
    %1564 = vmatpush1.msra.mxu0 0.0
    %1565 = vmatprep.subr.mxu0 0.0
    %1566 = vmatpush1.msra.mxu0 0.0
    %1567 = vmatprep.subr.mxu0 0.0
    %1568 = vmatpush1.msra.mxu0 0.0
    %1569 = vmatprep.subr.mxu0 0.0
    %1570 = vmatpush1.msra.mxu0 0.0
    %1571 = vmatprep.subr.mxu0 0.0
    %1572 = vmatpush1.msra.mxu0 0.0
    %1573 = vmatprep.subr.mxu0 0.0
    %1574 = vmatpush1.msra.mxu0 0.0
    %1575 = vmatprep.subr.mxu0 0.0
    %1576 = vmatpush1.msra.mxu0 0.0
    %1577 = vmatprep.subr.mxu0 0.0
    %1578 = vmatpush1.msra.mxu0 0.0
    %1579 = vmatprep.subr.mxu0 0.0
    %1580 = vmatpush1.msra.mxu0 0.0
    %1581 = vmatprep.subr.mxu0 0.0
    %1582 = vmatpush1.msra.mxu0 0.0
    %1583 = vmatprep.subr.mxu0 0.0
    %1584 = vmatpush1.msra.mxu0 0.0
    %1585 = vmatprep.subr.mxu0 0.0
    %1586 = vmatpush1.msra.mxu0 0.0
    %1587 = vmatprep.subr.mxu0 0.0
    %1588 = vmatpush1.msra.mxu0 0.0
    %1589 = vmatprep.subr.mxu0 0.0
    %1590 = vmatpush1.msra.mxu0 0.0
    %1591 = vmatprep.mubr.f32.mxu0 0.0
    %1592 = vmatmul.mubr.f32.gmra.mrb[0].mxu0 %v1525
    %v1593 = vpop.f32.mrb[0].mxu0
    %v1594 = vadd.f32 0.0, %v1593
    %v1595 = vpop.f32.mrb[0].mxu0
    %1596 = vdwg.mxu0
    %v1597 = vadd.f32 %v1521, %v1594
    %v1598 = vxor.u32 %v1597, 2147483648
    %v1599 = vmul.f32 %v1598, 1.442695
    %v1600 = vpow.pop %v1599
    %v1601 = vadd.f32 %v1600, 1.0
    %v1602 = vrcp.pop %v1601
    %v1603 = vmul.f32 1.0, %v1602
    %v1604 = vadd.f32 %v1594, %v1492
    %1606 = vrot.lane.b32.xlu0 %v1604, 64
    %v1607 = vpop.permute.xlu0 %1606
    %v1609 = vmul.f32 %v1603, %v1607
    %1611 = vrot.lane.b32.xlu0 %v1609, 64
    %v1612 = vpop.permute.xlu0 %1611
    %v1614 = vadd.f32 %v1521, %v1612
    %v1615 = vtanh.pop %v1614
    %v1616 = vsub.f32 %v1520, %v1615
    %1618 = vrot.lane.b32.xlu0 %v1616, 96
    %v1619 = vpop.permute.xlu0 %1618
    %v1621 = vmul.f32 %v1603, %v1619
    %1623 = vrot.lane.b32.xlu0 %v1621, 32
    %v1624 = vpop.permute.xlu0 %1623
    %v1626 = vadd.f32 %v1615, %v1624
    %v1627 = vld [vmem:[#allocation2 + $0x10] sm:$0xff]
    %1629 = vrot.lane.b32.xlu0 %v1626, 64
    %v1630 = vpop.permute.xlu0 %1629
    %v1631 = vsel %vm365, %v1630, 0
    %1633 = vmatprep.subr.mxu0 0.0
    %1634 = vmatpush1.msra.mxu0 %v1400
    %1635 = vmatprep.subr.mxu0 0.0
    %1636 = vmatpush1.msra.mxu0 %v1401
    %1637 = vmatprep.subr.mxu0 0.0
    %1638 = vmatpush1.msra.mxu0 %v1402
    %1639 = vmatprep.subr.mxu0 0.0
    %1640 = vmatpush1.msra.mxu0 %v1403
    %1641 = vmatprep.subr.mxu0 0.0
    %1642 = vmatpush1.msra.mxu0 0.0
    %1643 = vmatprep.subr.mxu0 0.0
    %1644 = vmatpush1.msra.mxu0 0.0
    %1645 = vmatprep.subr.mxu0 0.0
    %1646 = vmatpush1.msra.mxu0 0.0
    %1647 = vmatprep.subr.mxu0 0.0
    %1648 = vmatpush1.msra.mxu0 0.0
    %1649 = vmatprep.subr.mxu0 0.0
    %1650 = vmatpush1.msra.mxu0 0.0
    %1651 = vmatprep.subr.mxu0 0.0
    %1652 = vmatpush1.msra.mxu0 0.0
    %1653 = vmatprep.subr.mxu0 0.0
    %1654 = vmatpush1.msra.mxu0 0.0
    %1655 = vmatprep.subr.mxu0 0.0
    %1656 = vmatpush1.msra.mxu0 0.0
    %1657 = vmatprep.subr.mxu0 0.0
    %1658 = vmatpush1.msra.mxu0 0.0
    %1659 = vmatprep.subr.mxu0 0.0
    %1660 = vmatpush1.msra.mxu0 0.0
    %1661 = vmatprep.subr.mxu0 0.0
    %1662 = vmatpush1.msra.mxu0 0.0
    %1663 = vmatprep.subr.mxu0 0.0
    %1664 = vmatpush1.msra.mxu0 0.0
    %1665 = vmatprep.subr.mxu0 0.0
    %1666 = vmatpush1.msra.mxu0 0.0
    %1667 = vmatprep.subr.mxu0 0.0
    %1668 = vmatpush1.msra.mxu0 0.0
    %1669 = vmatprep.subr.mxu0 0.0
    %1670 = vmatpush1.msra.mxu0 0.0
    %1671 = vmatprep.subr.mxu0 0.0
    %1672 = vmatpush1.msra.mxu0 0.0
    %1673 = vmatprep.subr.mxu0 0.0
    %1674 = vmatpush1.msra.mxu0 0.0
    %1675 = vmatprep.subr.mxu0 0.0
    %1676 = vmatpush1.msra.mxu0 0.0
    %1677 = vmatprep.subr.mxu0 0.0
    %1678 = vmatpush1.msra.mxu0 0.0
    %1679 = vmatprep.subr.mxu0 0.0
    %1680 = vmatpush1.msra.mxu0 0.0
    %1681 = vmatprep.subr.mxu0 0.0
    %1682 = vmatpush1.msra.mxu0 0.0
    %1683 = vmatprep.subr.mxu0 0.0
    %1684 = vmatpush1.msra.mxu0 0.0
    %1685 = vmatprep.subr.mxu0 0.0
    %1686 = vmatpush1.msra.mxu0 0.0
    %1687 = vmatprep.subr.mxu0 0.0
    %1688 = vmatpush1.msra.mxu0 0.0
    %1689 = vmatprep.subr.mxu0 0.0
    %1690 = vmatpush1.msra.mxu0 0.0
    %1691 = vmatprep.subr.mxu0 0.0
    %1692 = vmatpush1.msra.mxu0 0.0
    %1693 = vmatprep.subr.mxu0 0.0
    %1694 = vmatpush1.msra.mxu0 0.0
    %1695 = vmatprep.subr.mxu0 0.0
    %1696 = vmatpush1.msra.mxu0 0.0
    %1697 = vmatprep.mubr.f32.mxu0 0.0
    %1698 = vmatmul.mubr.f32.gmra.mrb[0].mxu0 %v1631
    %v1699 = vpop.f32.mrb[0].mxu0
    %v1700 = vadd.f32 0.0, %v1699
    %v1701 = vpop.f32.mrb[0].mxu0
    %1702 = vdwg.mxu0
    %v1703 = vadd.f32 %v1627, %v1700
    %v1704 = vxor.u32 %v1703, 2147483648
    %v1705 = vmul.f32 %v1704, 1.442695
    %v1706 = vpow.pop %v1705
    %v1707 = vadd.f32 %v1706, 1.0
    %v1708 = vrcp.pop %v1707
    %v1709 = vmul.f32 1.0, %v1708
    %v1710 = vadd.f32 %v1700, %v1492
    %1712 = vrot.lane.b32.xlu0 %v1710, 64
    %v1713 = vpop.permute.xlu0 %1712
    %v1715 = vmul.f32 %v1709, %v1713
    %1717 = vrot.lane.b32.xlu0 %v1715, 64
    %v1718 = vpop.permute.xlu0 %1717
    %v1720 = vadd.f32 %v1627, %v1718
    %v1721 = vtanh.pop %v1720
    %v1722 = vsub.f32 %v1626, %v1721
    %1724 = vrot.lane.b32.xlu0 %v1722, 96
    %v1725 = vpop.permute.xlu0 %1724
    %v1727 = vmul.f32 %v1709, %v1725
    %1729 = vrot.lane.b32.xlu0 %v1727, 32
    %v1730 = vpop.permute.xlu0 %1729
    %v1732 = vadd.f32 %v1721, %v1730
    %v1733 = vld [vmem:[#allocation2 + $0x18] sm:$0xff]
    %1735 = vrot.lane.b32.xlu0 %v1732, 64
    %v1736 = vpop.permute.xlu0 %1735
    %v1737 = vsel %vm365, %v1736, 0
    %1739 = vmatprep.subr.mxu0 0.0
    %1740 = vmatpush1.msra.mxu0 %v1400
    %1741 = vmatprep.subr.mxu0 0.0
    %1742 = vmatpush1.msra.mxu0 %v1401
    %1743 = vmatprep.subr.mxu0 0.0
    %1744 = vmatpush1.msra.mxu0 %v1402
    %1745 = vmatprep.subr.mxu0 0.0
    %1746 = vmatpush1.msra.mxu0 %v1403
    %1747 = vmatprep.subr.mxu0 0.0
    %1748 = vmatpush1.msra.mxu0 0.0
    %1749 = vmatprep.subr.mxu0 0.0
    %1750 = vmatpush1.msra.mxu0 0.0
    %1751 = vmatprep.subr.mxu0 0.0
    %1752 = vmatpush1.msra.mxu0 0.0
    %1753 = vmatprep.subr.mxu0 0.0
    %1754 = vmatpush1.msra.mxu0 0.0
    %1755 = vmatprep.subr.mxu0 0.0
    %1756 = vmatpush1.msra.mxu0 0.0
    %1757 = vmatprep.subr.mxu0 0.0
    %1758 = vmatpush1.msra.mxu0 0.0
    %1759 = vmatprep.subr.mxu0 0.0
    %1760 = vmatpush1.msra.mxu0 0.0
    %1761 = vmatprep.subr.mxu0 0.0
    %1762 = vmatpush1.msra.mxu0 0.0
    %1763 = vmatprep.subr.mxu0 0.0
    %1764 = vmatpush1.msra.mxu0 0.0
    %1765 = vmatprep.subr.mxu0 0.0
    %1766 = vmatpush1.msra.mxu0 0.0
    %1767 = vmatprep.subr.mxu0 0.0
    %1768 = vmatpush1.msra.mxu0 0.0
    %1769 = vmatprep.subr.mxu0 0.0
    %1770 = vmatpush1.msra.mxu0 0.0
    %1771 = vmatprep.subr.mxu0 0.0
    %1772 = vmatpush1.msra.mxu0 0.0
    %1773 = vmatprep.subr.mxu0 0.0
    %1774 = vmatpush1.msra.mxu0 0.0
    %1775 = vmatprep.subr.mxu0 0.0
    %1776 = vmatpush1.msra.mxu0 0.0
    %1777 = vmatprep.subr.mxu0 0.0
    %1778 = vmatpush1.msra.mxu0 0.0
    %1779 = vmatprep.subr.mxu0 0.0
    %1780 = vmatpush1.msra.mxu0 0.0
    %1781 = vmatprep.subr.mxu0 0.0
    %1782 = vmatpush1.msra.mxu0 0.0
    %1783 = vmatprep.subr.mxu0 0.0
    %1784 = vmatpush1.msra.mxu0 0.0
    %1785 = vmatprep.subr.mxu0 0.0
    %1786 = vmatpush1.msra.mxu0 0.0
    %1787 = vmatprep.subr.mxu0 0.0
    %1788 = vmatpush1.msra.mxu0 0.0
    %1789 = vmatprep.subr.mxu0 0.0
    %1790 = vmatpush1.msra.mxu0 0.0
    %1791 = vmatprep.subr.mxu0 0.0
    %1792 = vmatpush1.msra.mxu0 0.0
    %1793 = vmatprep.subr.mxu0 0.0
    %1794 = vmatpush1.msra.mxu0 0.0
    %1795 = vmatprep.subr.mxu0 0.0
    %1796 = vmatpush1.msra.mxu0 0.0
    %1797 = vmatprep.subr.mxu0 0.0
    %1798 = vmatpush1.msra.mxu0 0.0
    %1799 = vmatprep.subr.mxu0 0.0
    %1800 = vmatpush1.msra.mxu0 0.0
    %1801 = vmatprep.subr.mxu0 0.0
    %1802 = vmatpush1.msra.mxu0 0.0
    %1803 = vmatprep.mubr.f32.mxu0 0.0
    %1804 = vmatmul.mubr.f32.gmra.mrb[0].mxu0 %v1737
    %v1805 = vpop.f32.mrb[0].mxu0
    %v1806 = vadd.f32 0.0, %v1805
    %v1807 = vpop.f32.mrb[0].mxu0
    %1808 = vdwg.mxu0
    %v1809 = vadd.f32 %v1733, %v1806
    %v1810 = vxor.u32 %v1809, 2147483648
    %v1811 = vmul.f32 %v1810, 1.442695
    %v1812 = vpow.pop %v1811
    %v1813 = vadd.f32 %v1812, 1.0
    %v1814 = vrcp.pop %v1813
    %v1815 = vmul.f32 1.0, %v1814
    %v1816 = vadd.f32 %v1806, %v1492
    %1818 = vrot.lane.b32.xlu0 %v1816, 64
    %v1819 = vpop.permute.xlu0 %1818
    %v1821 = vmul.f32 %v1815, %v1819
    %1823 = vrot.lane.b32.xlu0 %v1821, 64
    %v1824 = vpop.permute.xlu0 %1823
    %v1826 = vadd.f32 %v1733, %v1824
    %v1827 = vtanh.pop %v1826
    %v1828 = vsub.f32 %v1732, %v1827
    %1830 = vrot.lane.b32.xlu0 %v1828, 96
    %v1831 = vpop.permute.xlu0 %1830
    %v1833 = vmul.f32 %v1815, %v1831
    %1835 = vrot.lane.b32.xlu0 %v1833, 32
    %v1836 = vpop.permute.xlu0 %1835
    %v1838 = vadd.f32 %v1827, %v1836
    %v1839 = vld [vmem:[#allocation2 + $0x20] sm:$0xff]
    %1841 = vrot.lane.b32.xlu0 %v1838, 64
    %v1842 = vpop.permute.xlu0 %1841
    %v1843 = vsel %vm365, %v1842, 0
    %1845 = vmatprep.subr.mxu0 0.0
    %1846 = vmatpush1.msra.mxu0 %v1400
    %1847 = vmatprep.subr.mxu0 0.0
    %1848 = vmatpush1.msra.mxu0 %v1401
    %1849 = vmatprep.subr.mxu0 0.0
    %1850 = vmatpush1.msra.mxu0 %v1402
    %1851 = vmatprep.subr.mxu0 0.0
    %1852 = vmatpush1.msra.mxu0 %v1403
    %1853 = vmatprep.subr.mxu0 0.0
    %1854 = vmatpush1.msra.mxu0 0.0
    %1855 = vmatprep.subr.mxu0 0.0
    %1856 = vmatpush1.msra.mxu0 0.0
    %1857 = vmatprep.subr.mxu0 0.0
    %1858 = vmatpush1.msra.mxu0 0.0
    %1859 = vmatprep.subr.mxu0 0.0
    %1860 = vmatpush1.msra.mxu0 0.0
    %1861 = vmatprep.subr.mxu0 0.0
    %1862 = vmatpush1.msra.mxu0 0.0
    %1863 = vmatprep.subr.mxu0 0.0
    %1864 = vmatpush1.msra.mxu0 0.0
    %1865 = vmatprep.subr.mxu0 0.0
    %1866 = vmatpush1.msra.mxu0 0.0
    %1867 = vmatprep.subr.mxu0 0.0
    %1868 = vmatpush1.msra.mxu0 0.0
    %1869 = vmatprep.subr.mxu0 0.0
    %1870 = vmatpush1.msra.mxu0 0.0
    %1871 = vmatprep.subr.mxu0 0.0
    %1872 = vmatpush1.msra.mxu0 0.0
    %1873 = vmatprep.subr.mxu0 0.0
    %1874 = vmatpush1.msra.mxu0 0.0
    %1875 = vmatprep.subr.mxu0 0.0
    %1876 = vmatpush1.msra.mxu0 0.0
    %1877 = vmatprep.subr.mxu0 0.0
    %1878 = vmatpush1.msra.mxu0 0.0
    %1879 = vmatprep.subr.mxu0 0.0
    %1880 = vmatpush1.msra.mxu0 0.0
    %1881 = vmatprep.subr.mxu0 0.0
    %1882 = vmatpush1.msra.mxu0 0.0
    %1883 = vmatprep.subr.mxu0 0.0
    %1884 = vmatpush1.msra.mxu0 0.0
    %1885 = vmatprep.subr.mxu0 0.0
    %1886 = vmatpush1.msra.mxu0 0.0
    %1887 = vmatprep.subr.mxu0 0.0
    %1888 = vmatpush1.msra.mxu0 0.0
    %1889 = vmatprep.subr.mxu0 0.0
    %1890 = vmatpush1.msra.mxu0 0.0
    %1891 = vmatprep.subr.mxu0 0.0
    %1892 = vmatpush1.msra.mxu0 0.0
    %1893 = vmatprep.subr.mxu0 0.0
    %1894 = vmatpush1.msra.mxu0 0.0
    %1895 = vmatprep.subr.mxu0 0.0
    %1896 = vmatpush1.msra.mxu0 0.0
    %1897 = vmatprep.subr.mxu0 0.0
    %1898 = vmatpush1.msra.mxu0 0.0
    %1899 = vmatprep.subr.mxu0 0.0
    %1900 = vmatpush1.msra.mxu0 0.0
    %1901 = vmatprep.subr.mxu0 0.0
    %1902 = vmatpush1.msra.mxu0 0.0
    %1903 = vmatprep.subr.mxu0 0.0
    %1904 = vmatpush1.msra.mxu0 0.0
    %1905 = vmatprep.subr.mxu0 0.0
    %1906 = vmatpush1.msra.mxu0 0.0
    %1907 = vmatprep.subr.mxu0 0.0
    %1908 = vmatpush1.msra.mxu0 0.0
    %1909 = vmatprep.mubr.f32.mxu0 0.0
    %1910 = vmatmul.mubr.f32.gmra.mrb[0].mxu0 %v1843
    %v1911 = vpop.f32.mrb[0].mxu0
    %v1912 = vadd.f32 0.0, %v1911
    %v1913 = vpop.f32.mrb[0].mxu0
    %1914 = vdwg.mxu0
    %v1915 = vadd.f32 %v1839, %v1912
    %v1916 = vxor.u32 %v1915, 2147483648
    %v1917 = vmul.f32 %v1916, 1.442695
    %v1918 = vpow.pop %v1917
    %v1919 = vadd.f32 %v1918, 1.0
    %v1920 = vrcp.pop %v1919
    %v1921 = vmul.f32 1.0, %v1920
    %v1922 = vadd.f32 %v1912, %v1492
    %1924 = vrot.lane.b32.xlu0 %v1922, 64
    %v1925 = vpop.permute.xlu0 %1924
    %v1927 = vmul.f32 %v1921, %v1925
    %1929 = vrot.lane.b32.xlu0 %v1927, 64
    %v1930 = vpop.permute.xlu0 %1929
    %v1932 = vadd.f32 %v1839, %v1930
    %v1933 = vtanh.pop %v1932
    %v1934 = vsub.f32 %v1838, %v1933
    %1936 = vrot.lane.b32.xlu0 %v1934, 96
    %v1937 = vpop.permute.xlu0 %1936
    %v1939 = vmul.f32 %v1921, %v1937
    %1941 = vrot.lane.b32.xlu0 %v1939, 32
    %v1942 = vpop.permute.xlu0 %1941
    %v1944 = vadd.f32 %v1933, %v1942
    %v1945 = vld [vmem:[#allocation2 + $0x28] sm:$0xff]
    %1947 = vrot.lane.b32.xlu0 %v1944, 64
    %v1948 = vpop.permute.xlu0 %1947
    %v1949 = vsel %vm365, %v1948, 0
    %1951 = vmatprep.subr.mxu0 0.0
    %1952 = vmatpush1.msra.mxu0 %v1400
    %1953 = vmatprep.subr.mxu0 0.0
    %1954 = vmatpush1.msra.mxu0 %v1401
    %1955 = vmatprep.subr.mxu0 0.0
    %1956 = vmatpush1.msra.mxu0 %v1402
    %1957 = vmatprep.subr.mxu0 0.0
    %1958 = vmatpush1.msra.mxu0 %v1403
    %1959 = vmatprep.subr.mxu0 0.0
    %1960 = vmatpush1.msra.mxu0 0.0
    %1961 = vmatprep.subr.mxu0 0.0
    %1962 = vmatpush1.msra.mxu0 0.0
    %1963 = vmatprep.subr.mxu0 0.0
    %1964 = vmatpush1.msra.mxu0 0.0
    %1965 = vmatprep.subr.mxu0 0.0
    %1966 = vmatpush1.msra.mxu0 0.0
    %1967 = vmatprep.subr.mxu0 0.0
    %1968 = vmatpush1.msra.mxu0 0.0
    %1969 = vmatprep.subr.mxu0 0.0
    %1970 = vmatpush1.msra.mxu0 0.0
    %1971 = vmatprep.subr.mxu0 0.0
    %1972 = vmatpush1.msra.mxu0 0.0
    %1973 = vmatprep.subr.mxu0 0.0
    %1974 = vmatpush1.msra.mxu0 0.0
    %1975 = vmatprep.subr.mxu0 0.0
    %1976 = vmatpush1.msra.mxu0 0.0
    %1977 = vmatprep.subr.mxu0 0.0
    %1978 = vmatpush1.msra.mxu0 0.0
    %1979 = vmatprep.subr.mxu0 0.0
    %1980 = vmatpush1.msra.mxu0 0.0
    %1981 = vmatprep.subr.mxu0 0.0
    %1982 = vmatpush1.msra.mxu0 0.0
    %1983 = vmatprep.subr.mxu0 0.0
    %1984 = vmatpush1.msra.mxu0 0.0
    %1985 = vmatprep.subr.mxu0 0.0
    %1986 = vmatpush1.msra.mxu0 0.0
    %1987 = vmatprep.subr.mxu0 0.0
    %1988 = vmatpush1.msra.mxu0 0.0
    %1989 = vmatprep.subr.mxu0 0.0
    %1990 = vmatpush1.msra.mxu0 0.0
    %1991 = vmatprep.subr.mxu0 0.0
    %1992 = vmatpush1.msra.mxu0 0.0
    %1993 = vmatprep.subr.mxu0 0.0
    %1994 = vmatpush1.msra.mxu0 0.0
    %1995 = vmatprep.subr.mxu0 0.0
    %1996 = vmatpush1.msra.mxu0 0.0
    %1997 = vmatprep.subr.mxu0 0.0
    %1998 = vmatpush1.msra.mxu0 0.0
    %1999 = vmatprep.subr.mxu0 0.0
    %2000 = vmatpush1.msra.mxu0 0.0
    %2001 = vmatprep.subr.mxu0 0.0
    %2002 = vmatpush1.msra.mxu0 0.0
    %2003 = vmatprep.subr.mxu0 0.0
    %2004 = vmatpush1.msra.mxu0 0.0
    %2005 = vmatprep.subr.mxu0 0.0
    %2006 = vmatpush1.msra.mxu0 0.0
    %2007 = vmatprep.subr.mxu0 0.0
    %2008 = vmatpush1.msra.mxu0 0.0
    %2009 = vmatprep.subr.mxu0 0.0
    %2010 = vmatpush1.msra.mxu0 0.0
    %2011 = vmatprep.subr.mxu0 0.0
    %2012 = vmatpush1.msra.mxu0 0.0
    %2013 = vmatprep.subr.mxu0 0.0
    %2014 = vmatpush1.msra.mxu0 0.0
    %2015 = vmatprep.mubr.f32.mxu0 0.0
    %2016 = vmatmul.mubr.f32.gmra.mrb[0].mxu0 %v1949
    %v2017 = vpop.f32.mrb[0].mxu0
    %v2018 = vadd.f32 0.0, %v2017
    %v2019 = vpop.f32.mrb[0].mxu0
    %2020 = vdwg.mxu0
    %v2021 = vadd.f32 %v1945, %v2018
    %v2022 = vxor.u32 %v2021, 2147483648
    %v2023 = vmul.f32 %v2022, 1.442695
    %v2024 = vpow.pop %v2023
    %v2025 = vadd.f32 %v2024, 1.0
    %v2026 = vrcp.pop %v2025
    %v2027 = vmul.f32 1.0, %v2026
    %v2028 = vadd.f32 %v2018, %v1492
    %2030 = vrot.lane.b32.xlu0 %v2028, 64
    %v2031 = vpop.permute.xlu0 %2030
    %v2033 = vmul.f32 %v2027, %v2031
    %2035 = vrot.lane.b32.xlu0 %v2033, 64
    %v2036 = vpop.permute.xlu0 %2035
    %v2038 = vadd.f32 %v1945, %v2036
    %v2039 = vtanh.pop %v2038
    %v2040 = vsub.f32 %v1944, %v2039
    %2042 = vrot.lane.b32.xlu0 %v2040, 96
    %v2043 = vpop.permute.xlu0 %2042
    %v2045 = vmul.f32 %v2027, %v2043
    %2047 = vrot.lane.b32.xlu0 %v2045, 32
    %v2048 = vpop.permute.xlu0 %2047
    %v2050 = vadd.f32 %v2039, %v2048
    %v2051 = vld [vmem:[#allocation2 + $0x30] sm:$0xff]
    %2053 = vrot.lane.b32.xlu0 %v2050, 64
    %v2054 = vpop.permute.xlu0 %2053
    %v2055 = vsel %vm365, %v2054, 0
    %2057 = vmatprep.subr.mxu0 0.0
    %2058 = vmatpush1.msra.mxu0 %v1400
    %2059 = vmatprep.subr.mxu0 0.0
    %2060 = vmatpush1.msra.mxu0 %v1401
    %2061 = vmatprep.subr.mxu0 0.0
    %2062 = vmatpush1.msra.mxu0 %v1402
    %2063 = vmatprep.subr.mxu0 0.0
    %2064 = vmatpush1.msra.mxu0 %v1403
    %2065 = vmatprep.subr.mxu0 0.0
    %2066 = vmatpush1.msra.mxu0 0.0
    %2067 = vmatprep.subr.mxu0 0.0
    %2068 = vmatpush1.msra.mxu0 0.0
    %2069 = vmatprep.subr.mxu0 0.0
    %2070 = vmatpush1.msra.mxu0 0.0
    %2071 = vmatprep.subr.mxu0 0.0
    %2072 = vmatpush1.msra.mxu0 0.0
    %2073 = vmatprep.subr.mxu0 0.0
    %2074 = vmatpush1.msra.mxu0 0.0
    %2075 = vmatprep.subr.mxu0 0.0
    %2076 = vmatpush1.msra.mxu0 0.0
    %2077 = vmatprep.subr.mxu0 0.0
    %2078 = vmatpush1.msra.mxu0 0.0
    %2079 = vmatprep.subr.mxu0 0.0
    %2080 = vmatpush1.msra.mxu0 0.0
    %2081 = vmatprep.subr.mxu0 0.0
    %2082 = vmatpush1.msra.mxu0 0.0
    %2083 = vmatprep.subr.mxu0 0.0
    %2084 = vmatpush1.msra.mxu0 0.0
    %2085 = vmatprep.subr.mxu0 0.0
    %2086 = vmatpush1.msra.mxu0 0.0
    %2087 = vmatprep.subr.mxu0 0.0
    %2088 = vmatpush1.msra.mxu0 0.0
    %2089 = vmatprep.subr.mxu0 0.0
    %2090 = vmatpush1.msra.mxu0 0.0
    %2091 = vmatprep.subr.mxu0 0.0
    %2092 = vmatpush1.msra.mxu0 0.0
    %2093 = vmatprep.subr.mxu0 0.0
    %2094 = vmatpush1.msra.mxu0 0.0
    %2095 = vmatprep.subr.mxu0 0.0
    %2096 = vmatpush1.msra.mxu0 0.0
    %2097 = vmatprep.subr.mxu0 0.0
    %2098 = vmatpush1.msra.mxu0 0.0
    %2099 = vmatprep.subr.mxu0 0.0
    %2100 = vmatpush1.msra.mxu0 0.0
    %2101 = vmatprep.subr.mxu0 0.0
    %2102 = vmatpush1.msra.mxu0 0.0
    %2103 = vmatprep.subr.mxu0 0.0
    %2104 = vmatpush1.msra.mxu0 0.0
    %2105 = vmatprep.subr.mxu0 0.0
    %2106 = vmatpush1.msra.mxu0 0.0
    %2107 = vmatprep.subr.mxu0 0.0
    %2108 = vmatpush1.msra.mxu0 0.0
    %2109 = vmatprep.subr.mxu0 0.0
    %2110 = vmatpush1.msra.mxu0 0.0
    %2111 = vmatprep.subr.mxu0 0.0
    %2112 = vmatpush1.msra.mxu0 0.0
    %2113 = vmatprep.subr.mxu0 0.0
    %2114 = vmatpush1.msra.mxu0 0.0
    %2115 = vmatprep.subr.mxu0 0.0
    %2116 = vmatpush1.msra.mxu0 0.0
    %2117 = vmatprep.subr.mxu0 0.0
    %2118 = vmatpush1.msra.mxu0 0.0
    %2119 = vmatprep.subr.mxu0 0.0
    %2120 = vmatpush1.msra.mxu0 0.0
    %2121 = vmatprep.mubr.f32.mxu0 0.0
    %2122 = vmatmul.mubr.f32.gmra.mrb[0].mxu0 %v2055
    %v2123 = vpop.f32.mrb[0].mxu0
    %v2124 = vadd.f32 0.0, %v2123
    %v2125 = vpop.f32.mrb[0].mxu0
    %2126 = vdwg.mxu0
    %v2127 = vadd.f32 %v2051, %v2124
    %v2128 = vxor.u32 %v2127, 2147483648
    %v2129 = vmul.f32 %v2128, 1.442695
    %v2130 = vpow.pop %v2129
    %v2131 = vadd.f32 %v2130, 1.0
    %v2132 = vrcp.pop %v2131
    %v2133 = vmul.f32 1.0, %v2132
    %v2134 = vadd.f32 %v2124, %v1492
    %2136 = vrot.lane.b32.xlu0 %v2134, 64
    %v2137 = vpop.permute.xlu0 %2136
    %v2139 = vmul.f32 %v2133, %v2137
    %2141 = vrot.lane.b32.xlu0 %v2139, 64
    %v2142 = vpop.permute.xlu0 %2141
    %v2144 = vadd.f32 %v2051, %v2142
    %v2145 = vtanh.pop %v2144
    %v2146 = vsub.f32 %v2050, %v2145
    %2148 = vrot.lane.b32.xlu0 %v2146, 96
    %v2149 = vpop.permute.xlu0 %2148
    %v2151 = vmul.f32 %v2133, %v2149
    %2153 = vrot.lane.b32.xlu0 %v2151, 32
    %v2154 = vpop.permute.xlu0 %2153
    %v2156 = vadd.f32 %v2145, %v2154
    %v2157 = vld [vmem:[#allocation2 + $0x38] sm:$0xff]
    %2159 = vrot.lane.b32.xlu0 %v2156, 64
    %v2160 = vpop.permute.xlu0 %2159
    %v2161 = vsel %vm365, %v2160, 0
    %2163 = vmatprep.subr.mxu0 0.0
    %2164 = vmatpush1.msra.mxu0 %v1400
    %2165 = vmatprep.subr.mxu0 0.0
    %2166 = vmatpush1.msra.mxu0 %v1401
    %2167 = vmatprep.subr.mxu0 0.0
    %2168 = vmatpush1.msra.mxu0 %v1402
    %2169 = vmatprep.subr.mxu0 0.0
    %2170 = vmatpush1.msra.mxu0 %v1403
    %2171 = vmatprep.subr.mxu0 0.0
    %2172 = vmatpush1.msra.mxu0 0.0
    %2173 = vmatprep.subr.mxu0 0.0
    %2174 = vmatpush1.msra.mxu0 0.0
    %2175 = vmatprep.subr.mxu0 0.0
    %2176 = vmatpush1.msra.mxu0 0.0
    %2177 = vmatprep.subr.mxu0 0.0
    %2178 = vmatpush1.msra.mxu0 0.0
    %2179 = vmatprep.subr.mxu0 0.0
    %2180 = vmatpush1.msra.mxu0 0.0
    %2181 = vmatprep.subr.mxu0 0.0
    %2182 = vmatpush1.msra.mxu0 0.0
    %2183 = vmatprep.subr.mxu0 0.0
    %2184 = vmatpush1.msra.mxu0 0.0
    %2185 = vmatprep.subr.mxu0 0.0
    %2186 = vmatpush1.msra.mxu0 0.0
    %2187 = vmatprep.subr.mxu0 0.0
    %2188 = vmatpush1.msra.mxu0 0.0
    %2189 = vmatprep.subr.mxu0 0.0
    %2190 = vmatpush1.msra.mxu0 0.0
    %2191 = vmatprep.subr.mxu0 0.0
    %2192 = vmatpush1.msra.mxu0 0.0
    %2193 = vmatprep.subr.mxu0 0.0
    %2194 = vmatpush1.msra.mxu0 0.0
    %2195 = vmatprep.subr.mxu0 0.0
    %2196 = vmatpush1.msra.mxu0 0.0
    %2197 = vmatprep.subr.mxu0 0.0
    %2198 = vmatpush1.msra.mxu0 0.0
    %2199 = vmatprep.subr.mxu0 0.0
    %2200 = vmatpush1.msra.mxu0 0.0
    %2201 = vmatprep.subr.mxu0 0.0
    %2202 = vmatpush1.msra.mxu0 0.0
    %2203 = vmatprep.subr.mxu0 0.0
    %2204 = vmatpush1.msra.mxu0 0.0
    %2205 = vmatprep.subr.mxu0 0.0
    %2206 = vmatpush1.msra.mxu0 0.0
    %2207 = vmatprep.subr.mxu0 0.0
    %2208 = vmatpush1.msra.mxu0 0.0
    %2209 = vmatprep.subr.mxu0 0.0
    %2210 = vmatpush1.msra.mxu0 0.0
    %2211 = vmatprep.subr.mxu0 0.0
    %2212 = vmatpush1.msra.mxu0 0.0
    %2213 = vmatprep.subr.mxu0 0.0
    %2214 = vmatpush1.msra.mxu0 0.0
    %2215 = vmatprep.subr.mxu0 0.0
    %2216 = vmatpush1.msra.mxu0 0.0
    %2217 = vmatprep.subr.mxu0 0.0
    %2218 = vmatpush1.msra.mxu0 0.0
    %2219 = vmatprep.subr.mxu0 0.0
    %2220 = vmatpush1.msra.mxu0 0.0
    %2221 = vmatprep.subr.mxu0 0.0
    %2222 = vmatpush1.msra.mxu0 0.0
    %2223 = vmatprep.subr.mxu0 0.0
    %2224 = vmatpush1.msra.mxu0 0.0
    %2225 = vmatprep.subr.mxu0 0.0
    %2226 = vmatpush1.msra.mxu0 0.0
    %2227 = vmatprep.mubr.f32.mxu0 0.0
    %2228 = vmatmul.mubr.f32.gmra.mrb[0].mxu0 %v2161
    %v2229 = vpop.f32.mrb[0].mxu0
    %v2230 = vadd.f32 0.0, %v2229
    %v2231 = vpop.f32.mrb[0].mxu0
    %2232 = vdwg.mxu0
    %v2233 = vadd.f32 %v2157, %v2230
    %v2234 = vxor.u32 %v2233, 2147483648
    %v2235 = vmul.f32 %v2234, 1.442695
    %v2236 = vpow.pop %v2235
    %v2237 = vadd.f32 %v2236, 1.0
    %v2238 = vrcp.pop %v2237
    %v2239 = vmul.f32 1.0, %v2238
    %v2240 = vadd.f32 %v2230, %v1492
    %2242 = vrot.lane.b32.xlu0 %v2240, 64
    %v2243 = vpop.permute.xlu0 %2242
    %v2245 = vmul.f32 %v2239, %v2243
    %2247 = vrot.lane.b32.xlu0 %v2245, 64
    %v2248 = vpop.permute.xlu0 %2247
    %v2250 = vadd.f32 %v2157, %v2248
    %v2251 = vtanh.pop %v2250
    %v2252 = vsub.f32 %v2156, %v2251
    %2254 = vrot.lane.b32.xlu0 %v2252, 96
    %v2255 = vpop.permute.xlu0 %2254
    %v2257 = vmul.f32 %v2239, %v2255
    %2259 = vrot.lane.b32.xlu0 %v2257, 32
    %v2260 = vpop.permute.xlu0 %2259
    %v2262 = vadd.f32 %v2251, %v2260
    %v2263 = vld [vmem:[%s12] sm:$0xff]
    %v2264 = vld [vmem:[%s12 + $0x8] sm:$0xff]
    %v2265 = vld [vmem:[%s12 + $0x10] sm:$0xff]
    %v2266 = vld [vmem:[%s12 + $0x18] sm:$0xff]
    %v2267 = vld [vmem:[%s13] sm:$0x1]
    %v2269 = vlaneseq
    %v2270 = vshrl.u32 %v2269, 7
    %v2271 = vsub.s32 0, %v2270
    %v2272 = vrot.slane %v2267, %v2271
    %2275 = vrot.lane.b32.xlu0 %v2262, 64
    %v2276 = vpop.permute.xlu0 %2275
    %v2277 = vsel %vm365, %v2276, 0
    %2279 = vmatprep.subr.mxu0 0.0
    %2280 = vmatpush1.msra.mxu0 %v2263
    %2281 = vmatprep.subr.mxu0 0.0
    %2282 = vmatpush1.msra.mxu0 %v2264
    %2283 = vmatprep.subr.mxu0 0.0
    %2284 = vmatpush1.msra.mxu0 %v2265
    %2285 = vmatprep.subr.mxu0 0.0
    %2286 = vmatpush1.msra.mxu0 %v2266
    %2287 = vmatprep.subr.mxu0 0.0
    %2288 = vmatpush1.msra.mxu0 0.0
    %2289 = vmatprep.subr.mxu0 0.0
    %2290 = vmatpush1.msra.mxu0 0.0
    %2291 = vmatprep.subr.mxu0 0.0
    %2292 = vmatpush1.msra.mxu0 0.0
    %2293 = vmatprep.subr.mxu0 0.0
    %2294 = vmatpush1.msra.mxu0 0.0
    %2295 = vmatprep.subr.mxu0 0.0
    %2296 = vmatpush1.msra.mxu0 0.0
    %2297 = vmatprep.subr.mxu0 0.0
    %2298 = vmatpush1.msra.mxu0 0.0
    %2299 = vmatprep.subr.mxu0 0.0
    %2300 = vmatpush1.msra.mxu0 0.0
    %2301 = vmatprep.subr.mxu0 0.0
    %2302 = vmatpush1.msra.mxu0 0.0
    %2303 = vmatprep.subr.mxu0 0.0
    %2304 = vmatpush1.msra.mxu0 0.0
    %2305 = vmatprep.subr.mxu0 0.0
    %2306 = vmatpush1.msra.mxu0 0.0
    %2307 = vmatprep.subr.mxu0 0.0
    %2308 = vmatpush1.msra.mxu0 0.0
    %2309 = vmatprep.subr.mxu0 0.0
    %2310 = vmatpush1.msra.mxu0 0.0
    %2311 = vmatprep.subr.mxu0 0.0
    %2312 = vmatpush1.msra.mxu0 0.0
    %2313 = vmatprep.subr.mxu0 0.0
    %2314 = vmatpush1.msra.mxu0 0.0
    %2315 = vmatprep.subr.mxu0 0.0
    %2316 = vmatpush1.msra.mxu0 0.0
    %2317 = vmatprep.subr.mxu0 0.0
    %2318 = vmatpush1.msra.mxu0 0.0
    %2319 = vmatprep.subr.mxu0 0.0
    %2320 = vmatpush1.msra.mxu0 0.0
    %2321 = vmatprep.subr.mxu0 0.0
    %2322 = vmatpush1.msra.mxu0 0.0
    %2323 = vmatprep.subr.mxu0 0.0
    %2324 = vmatpush1.msra.mxu0 0.0
    %2325 = vmatprep.subr.mxu0 0.0
    %2326 = vmatpush1.msra.mxu0 0.0
    %2327 = vmatprep.subr.mxu0 0.0
    %2328 = vmatpush1.msra.mxu0 0.0
    %2329 = vmatprep.subr.mxu0 0.0
    %2330 = vmatpush1.msra.mxu0 0.0
    %2331 = vmatprep.subr.mxu0 0.0
    %2332 = vmatpush1.msra.mxu0 0.0
    %2333 = vmatprep.subr.mxu0 0.0
    %2334 = vmatpush1.msra.mxu0 0.0
    %2335 = vmatprep.subr.mxu0 0.0
    %2336 = vmatpush1.msra.mxu0 0.0
    %2337 = vmatprep.subr.mxu0 0.0
    %2338 = vmatpush1.msra.mxu0 0.0
    %2339 = vmatprep.subr.mxu0 0.0
    %2340 = vmatpush1.msra.mxu0 0.0
    %2341 = vmatprep.subr.mxu0 0.0
    %2342 = vmatpush1.msra.mxu0 0.0
    %2343 = vmatprep.mubr.f32.mxu0 0.0
    %2344 = vmatmul.mubr.f32.gmra.mrb[0].mxu0 %v2277
    %v2345 = vpop.f32.mrb[0].mxu0
    %v2346 = vadd.f32 %v2272, %v2345
    %v2347 = vpop.f32.mrb[0].mxu0
    %2348 = vdwg.mxu0
    %vm2349 = vcmask 64512
    %2350 = vst.msk [vmem:[#allocation4] sm:$0xff] %vm2349, %v2346
    // Predicated region
    $region58: #{cnn_gru_net.1} parent=1 // pred_check
      _
    $region59: #{cnn_gru_net.1} parent=1 // pred_check_branch
      %2352 = sbr.rel (0) target = $region61
    $region60: #{cnn_gru_net.1} parent=1 // pred_region
      %s2354 = ssub.s32 128, 128
      %2355 = vsyncadd [#allocation5], %s2354
      %s2357 = sshll.u32 [#allocation4], 4
      %s2358 = int_to_ptr.vmem [resolvable:$true] %s2357
      %2360 = dma.vmem_to_hbm [thread:$0]  %s2358, 128, %s14, [#allocation5]
    $region61: #{cnn_gru_net.1} parent=1 // pred_fallthru
      _
    // Predicated region
    $region62: #{cnn_gru_net.1} parent=1 // pred_check
      _
    $region63: #{cnn_gru_net.1} parent=1 // pred_check_branch
      %2362 = sbr.rel (0) target = $region65
    $region64: #{cnn_gru_net.1} parent=1 // pred_region
      %2363 = dma.done [#allocation5], 128
    $region65: #{cnn_gru_net.1} parent=1 // pred_fallthru
      _
    %2364 = vsyncpa [#allocation5], 1

</llo_original>
